<compile_context>
chip_gen: v7x
topology: tpu7x:2x2x1
jax: 0.10.0
libtpu: 0.0.40
codegen_flags: <defaults>
</compile_context>

<pallas_src>
import jax
import jax.numpy as jnp
from jax import lax
from jax.experimental import pallas as pl
from jax.experimental.pallas import tpu as pltpu


def _round_up(x, m):
    return ((x + m - 1) // m) * m


def _pick_time_chunk(T, cap=32):
    """Largest chunk length <= cap that divides T (T itself if T <= cap)."""
    if T <= cap:
        return T
    for tc in range(cap, 0, -1):
        if T % tc == 0:
            return tc
    return T


def _pick_unroll(Tc, Bt, Hp):
    """Cap recurrence unroll by gate vreg pressure (64 vregs total)."""
    gate_vregs = max(1, (Bt * 4 * Hp) // (8 * 128))   # f32 vregs live per step
    if Tc <= 16 and gate_vregs <= 8:
        return True            # full unroll of the chunk
    if gate_vregs <= 24:
        return 4
    return 2


def _vmem_limit_bytes():
    """Generation-aware VMEM cap: ~1/8 headroom below physical VMEM
    (compiler scratch + double-buffered weight blocks)."""
    try:
        cap = int(pltpu.get_tpu_info().vmem_capacity_bytes)
    except Exception:
        cap = 64 * 1024 * 1024          # conservative fallback
    return (cap // 8) * 7               # 128MiB -> 112MiB, 64MiB -> 56MiB


def _make_lstm_kernel(T, Tc, Bt, Ip, Hp, num_layers, mm_dtype, unroll):
    """Grid = (batch_tiles ["parallel"], layers ["arbitrary"])."""
    G = 4 * Hp
    num_chunks = T // Tc

    def kernel(x_ref, w_ih0_ref, w_ihr_ref, w_hh_ref, b_ref,
               hlast_ref, seq_ref, gin_ref):
        l = pl.program_id(1)
        is_last = l == (num_layers - 1)

        def run_chunk(c, carry):
            h, cst = carry
            t0 = pl.multiple_of(c * Tc, Tc)

            # Hoisted input matmul for this time chunk: one (Tc*Bt, .) MXU
            # matmul instead of Tc tiny ones; bias folded in here.  Layer 0
            # reads the x block directly (no copy into the seq scratch);
            # deeper layers read the previous layer's hidden sequence.
            @pl.when(l == 0)
            def _():
                xin = x_ref[pl.ds(t0, Tc), :, :].reshape(Tc * Bt, Ip)
                g = jnp.dot(xin.astype(mm_dtype), w_ih0_ref[...],
                            preferred_element_type=jnp.float32)
                gin_ref[...] = (g + b_ref[...]).reshape(Tc, Bt, G)

            @pl.when(l != 0)
            def _():
                sin = seq_ref[pl.ds(t0, Tc), :, :].reshape(Tc * Bt, Hp)
                g = jnp.dot(sin.astype(mm_dtype), w_ihr_ref[...],
                            preferred_element_type=jnp.float32)
                gin_ref[...] = (g + b_ref[...]).reshape(Tc, Bt, G)

            def step(tt, hc):
                h_c, c_c = hc
                # Only the recurrent matmul is on the sequential critical path.
                gates = gin_ref[tt] + jnp.dot(
                    h_c.astype(mm_dtype), w_hh_ref[...],
                    preferred_element_type=jnp.float32)
                i_g = jax.nn.sigmoid(gates[:, 0 * Hp:1 * Hp])  # lane-aligned
                f_g = jax.nn.sigmoid(gates[:, 1 * Hp:2 * Hp])
                g_g = jnp.tanh(gates[:, 2 * Hp:3 * Hp])
                o_g = jax.nn.sigmoid(gates[:, 3 * Hp:4 * Hp])
                c_new = f_g * c_c + i_g * g_g
                h_new = o_g * jnp.tanh(c_new)

                # Store this layer's output for the next layer; skip on top.
                @pl.when(jnp.logical_not(is_last))
                def _():
                    seq_ref[t0 + tt, :, :] = h_new

                return (h_new, c_new)

            return lax.fori_loop(0, Tc, step, (h, cst), unroll=unroll)

        h0 = jnp.zeros((Bt, Hp), jnp.float32)
        c0 = jnp.zeros((Bt, Hp), jnp.float32)
        h_last, _ = lax.fori_loop(0, num_chunks, run_chunk, (h0, c0))

        @pl.when(is_last)
        def _():
            hlast_ref[...] = h_last

    return kernel


def _make_fc_kernel(mm_dtype):
    def fc_kernel(h_ref, w_ref, b_ref, o_ref):
        o_ref[...] = (jnp.dot(h_ref[...].astype(mm_dtype), w_ref[...],
                              preferred_element_type=jnp.float32)
                      + b_ref[...])
    return fc_kernel


def lstm_net_forward(x_btI, params, *, hidden_size, num_layers, num_classes,
                     use_bf16=False, batch_tile=None, time_chunk=32):
    """x_btI: (B, T, input_size) float32, batch_first like the PyTorch module."""
    B, T, I = x_btI.shape
    H = hidden_size
    Hp = _round_up(H, 128)               # lane-aligned hidden size (per gate)
    Ip = _round_up(I, 128)
    Bp = _round_up(B, 8)                 # sublane-aligned batch
    Cp = _round_up(num_classes, 128)     # lane-dense FC output
    G = 4 * Hp
    mm_dtype = jnp.bfloat16 if use_bf16 else jnp.float32

    # Batch tiling: 2 tiles feed v7x's two TensorCores; 1 tile otherwise.
    if batch_tile is None:
        batch_tile = Bp // 2 if (Bp >= 16 and Bp % 16 == 0) else Bp
    assert Bp % batch_tile == 0
    Bt = batch_tile
    NB = Bp // Bt

    Tc = _pick_time_chunk(T, time_chunk)
    unroll = _pick_unroll(Tc, Bt, Hp)

    # ---- pack inputs / weights (zero padding is numerically exact) ---------
    x_tbi = jnp.transpose(x_btI, (1, 0, 2)).astype(jnp.float32)   # (T, B, I)
    x_p = jnp.zeros((T, Bp, Ip), jnp.float32).at[:, :B, :I].set(x_tbi)

    Lr = max(num_layers - 1, 1)
    w_ih0 = jnp.zeros((Ip, G), jnp.float32)           # layer 0 input weights
    w_ihr = jnp.zeros((Lr, Hp, G), jnp.float32)       # layers >= 1 input weights
    w_hh_stack = jnp.zeros((num_layers, Hp, G), jnp.float32)
    b_stack = jnp.zeros((num_layers, 1, G), jnp.float32)
    for l in range(num_layers):
        w_ih, w_hh, b_ih, b_hh = params["lstm"][l]
        b = b_ih + b_hh
        for g in range(4):
            col = slice(g * Hp, g * Hp + H)
            rows = slice(g * H, (g + 1) * H)
            if l == 0:
                w_ih0 = w_ih0.at[:I, col].set(w_ih[rows, :].T)
            else:
                w_ihr = w_ihr.at[l - 1, :H, col].set(w_ih[rows, :].T)
            w_hh_stack = w_hh_stack.at[l, :H, col].set(w_hh[rows, :].T)
            b_stack = b_stack.at[l, 0, col].set(b[rows])
    w_ih0 = w_ih0.astype(mm_dtype)
    w_ihr = w_ihr.astype(mm_dtype)
    w_hh_stack = w_hh_stack.astype(mm_dtype)

    kernel = _make_lstm_kernel(T, Tc, Bt, Ip, Hp, num_layers, mm_dtype, unroll)

    h_last_p = pl.pallas_call(
        kernel,
        out_shape=jax.ShapeDtypeStruct((Bp, Hp), jnp.float32),
        grid=(NB, num_layers),
        in_specs=[
            pl.BlockSpec((T, Bt, Ip), lambda b, l: (0, b, 0)),        # x
            pl.BlockSpec((Ip, G), lambda b, l: (0, 0)),               # W_ih[0]
            pl.BlockSpec((None, Hp, G),
                         lambda b, l: (jnp.maximum(l - 1, 0), 0, 0)),  # W_ih[l>=1]
            pl.BlockSpec((None, Hp, G), lambda b, l: (l, 0, 0)),       # W_hh[l]
            pl.BlockSpec((None, 1, G), lambda b, l: (l, 0, 0)),        # bias[l]
        ],
        out_specs=pl.BlockSpec((Bt, Hp), lambda b, l: (b, 0)),
        scratch_shapes=[
            pltpu.VMEM((T, Bt, Hp), jnp.float32),    # hidden sequence (layer I/O)
            pltpu.VMEM((Tc, Bt, G), jnp.float32),    # per-chunk precomputed gates
        ],
        compiler_params=pltpu.CompilerParams(
            dimension_semantics=("parallel", "arbitrary"),
            vmem_limit_bytes=_vmem_limit_bytes(),
        ),
    )(x_p, w_ih0, w_ihr, w_hh_stack, b_stack)

    # ---- final FC as a separate tiny kernel (keeps fc_w out of the LSTM loop)
    fc_w, fc_b = params["fc"]
    fc_w_p = (jnp.zeros((Hp, Cp), jnp.float32)
              .at[:H, :num_classes].set(fc_w.T).astype(mm_dtype))
    fc_b_p = jnp.zeros((1, Cp), jnp.float32).at[0, :num_classes].set(fc_b)

    out_p = pl.pallas_call(
        _make_fc_kernel(mm_dtype),
        out_shape=jax.ShapeDtypeStruct((Bp, Cp), jnp.float32),
        grid=(1,),
        in_specs=[
            pl.BlockSpec((Bp, Hp), lambda i: (0, 0)),
            pl.BlockSpec((Hp, Cp), lambda i: (0, 0)),
            pl.BlockSpec((1, Cp), lambda i: (0, 0)),
        ],
        out_specs=pl.BlockSpec((Bp, Cp), lambda i: (0, 0)),
    )(h_last_p, fc_w_p, fc_b_p)

    return out_p[:B, :num_classes]


def init_params(key, input_size, hidden_size, num_layers, num_classes):
    """Deterministic init mimicking PyTorch's uniform(-1/sqrt(H), 1/sqrt(H))."""
    H = hidden_size
    k = 1.0 / jnp.sqrt(jnp.float32(H))
    params = {"lstm": []}
    for l in range(num_layers):
        in_dim = input_size if l == 0 else H
        key, k1, k2, k3, k4 = jax.random.split(key, 5)
        w_ih = jax.random.uniform(k1, (4 * H, in_dim), jnp.float32, -k, k)
        w_hh = jax.random.uniform(k2, (4 * H, H), jnp.float32, -k, k)
        b_ih = jax.random.uniform(k3, (4 * H,), jnp.float32, -k, k)
        b_hh = jax.random.uniform(k4, (4 * H,), jnp.float32, -k, k)
        params["lstm"].append((w_ih, w_hh, b_ih, b_hh))
    key, k1, k2 = jax.random.split(key, 3)
    kf = 1.0 / jnp.sqrt(jnp.float32(H))
    fc_w = jax.random.uniform(k1, (num_classes, H), jnp.float32, -kf, kf)
    fc_b = jax.random.uniform(k2, (num_classes,), jnp.float32, -kf, kf)
    params["fc"] = (fc_w, fc_b)
    return params


def reference_forward(x, params, *, hidden_size, num_layers, num_classes):
    """Pure-JAX reference of the PyTorch LSTMNet.forward for validation."""
    B, T, I = x.shape
    H = hidden_size
    layer_in = x
    h_last = None
    for l in range(num_layers):
        w_ih, w_hh, b_ih, b_hh = params["lstm"][l]
        h = jnp.zeros((B, H), jnp.float32)
        c = jnp.zeros((B, H), jnp.float32)
        outs = []
        for t in range(T):
            x_t = layer_in[:, t, :]
            gates = x_t @ w_ih.T + h @ w_hh.T + b_ih + b_hh
            i_g = jax.nn.sigmoid(gates[:, 0 * H:1 * H])
            f_g = jax.nn.sigmoid(gates[:, 1 * H:2 * H])
            g_g = jnp.tanh(gates[:, 2 * H:3 * H])
            o_g = jax.nn.sigmoid(gates[:, 3 * H:4 * H])
            c = f_g * c + i_g * g_g
            h = o_g * jnp.tanh(c)
            outs.append(h)
        layer_in = jnp.stack(outs, axis=1)
        h_last = h
    fc_w, fc_b = params["fc"]
    return h_last @ fc_w.T + fc_b


if __name__ == "__main__":
    # x: (batch, seq, input_size)
    batch, seq, input_size = 2, 8, 16
    hidden_size, num_layers, num_classes = 32, 2, 10

    key = jax.random.PRNGKey(0)
    key, kx = jax.random.split(key)
    x = jax.random.normal(kx, (batch, seq, input_size), jnp.float32)
    params = init_params(key, input_size, hidden_size, num_layers, num_classes)

    ref = reference_forward(x, params, hidden_size=hidden_size,
                            num_layers=num_layers, num_classes=num_classes)

    # Exact-precision path (f32 matmuls): tight check against the reference.
    out_f32 = jax.block_until_ready(
        lstm_net_forward(x, params, hidden_size=hidden_size,
                         num_layers=num_layers, num_classes=num_classes,
                         use_bf16=False))
    assert out_f32.shape == (batch, num_classes)
    assert jnp.allclose(out_f32, ref, atol=1e-3, rtol=1e-3), (
        float(jnp.max(jnp.abs(out_f32 - ref))))

    # Performance path (bf16 matmul operands, f32 accumulation/gates/state).
    out_bf16 = jax.block_until_ready(
        lstm_net_forward(x, params, hidden_size=hidden_size,
                         num_layers=num_layers, num_classes=num_classes,
                         use_bf16=True))
    assert out_bf16.shape == (batch, num_classes)
    assert jnp.allclose(out_bf16, ref, atol=3e-2, rtol=3e-2), (
        float(jnp.max(jnp.abs(out_bf16 - ref))))

    print("KERNEL_OK")
</pallas_src>

<mosaic_0001>
module attributes {stable_mosaic.version = 11 : i64} {
  func.func @kernel(%arg0: i32, %arg1: i32, %arg2: memref<8x8x128xf32, #tpu.memory_space<vmem>>, %arg3: memref<128x512xf32, #tpu.memory_space<vmem>>, %arg4: memref<1x128x512xf32, #tpu.memory_space<vmem>>, %arg5: memref<1x128x512xf32, #tpu.memory_space<vmem>>, %arg6: memref<1x1x512xf32, #tpu.memory_space<vmem>>, %arg7: memref<8x128xf32, #tpu.memory_space<vmem>>, %arg8: memref<8x8x128xf32, #tpu.memory_space<vmem>>, %arg9: memref<8x8x512xf32, #tpu.memory_space<vmem>>) attributes {dimension_semantics = [#tpu.dimension_semantics<parallel>, #tpu.dimension_semantics<arbitrary>], iteration_bounds = array<i64: 1, 2>, scalar_prefetch = 0 : i64, scratch_operands = 2 : i64, tpu.core_type = #tpu.core_type<tc>, window_params = [{transform_indices = @transform_0, window_bounds = array<i64: 8, 8, 128>}, {pipeline_mode = #tpu.pipeline_mode<synchronous>, transform_indices = @transform_1, window_bounds = array<i64: 128, 512>}, {transform_indices = @transform_2, window_bounds = array<i64: 1, 128, 512>}, {transform_indices = @transform_3, window_bounds = array<i64: 1, 128, 512>}, {transform_indices = @transform_4, window_bounds = array<i64: 1, 1, 512>}, {transform_indices = @transform_5, window_bounds = array<i64: 8, 128>}]} {
    %c1_i32 = arith.constant 1 : i32
    %0 = arith.cmpi eq, %arg1, %c1_i32 : i32
    %cst = arith.constant 0.000000e+00 : f32
    %1 = vector.broadcast %cst : f32 to vector<8x128xf32>
    %cst_0 = arith.constant 0.000000e+00 : f32
    %2 = vector.broadcast %cst_0 : f32 to vector<8x128xf32>
    %c0_i32 = arith.constant 0 : i32
    %c8_i32 = arith.constant 8 : i32
    %3 = arith.muli %c0_i32, %c8_i32 : i32
    %4 = tpu.assume_multiple %3, 8 : i32
    %c0_i32_1 = arith.constant 0 : i32
    %5 = arith.cmpi eq, %arg1, %c0_i32_1 : i32
    %6 = arith.extui %5 : i1 to i32
    %c0_i32_2 = arith.constant 0 : i32
    %7 = arith.cmpi ne, %6, %c0_i32_2 : i32
    scf.if %7 {
      %293 = arith.index_cast %4 : i32 to index
      %c0_96 = arith.constant 0 : index
      %c0_97 = arith.constant 0 : index
      %294 = vector.load %arg2[%293, %c0_96, %c0_97] : memref<8x8x128xf32, #tpu.memory_space<vmem>>, vector<8x8x128xf32>
      %295 = vector.shape_cast %294 : vector<8x8x128xf32> to vector<64x128xf32>
      %c0_98 = arith.constant 0 : index
      %c0_99 = arith.constant 0 : index
      %296 = vector.load %arg3[%c0_98, %c0_99] : memref<128x512xf32, #tpu.memory_space<vmem>>, vector<128x512xf32>
      %cst_100 = arith.constant dense<0.000000e+00> : vector<64x512xf32>
      %297 = tpu.matmul %295, %296, %cst_100 {dimension_numbers = #tpu.dot_dimension_numbers<[1], [0], [0], [1], [0, 0, 1, 1], [], []>} : vector<64x128xf32>, vector<128x512xf32>, vector<64x512xf32> -> vector<64x512xf32>
      %c0_101 = arith.constant 0 : index
      %c0_102 = arith.constant 0 : index
      %c0_103 = arith.constant 0 : index
      %298 = vector.load %arg6[%c0_101, %c0_102, %c0_103] : memref<1x1x512xf32, #tpu.memory_space<vmem>>, vector<1x1x512xf32>
      %299 = vector.shape_cast %298 : vector<1x1x512xf32> to vector<1x512xf32>
      %300 = vector.broadcast %299 : vector<1x512xf32> to vector<64x512xf32>
      %301 = arith.addf %297, %300 : vector<64x512xf32>
      %302 = vector.shape_cast %301 : vector<64x512xf32> to vector<8x8x512xf32>
      %c0_104 = arith.constant 0 : index
      %c0_105 = arith.constant 0 : index
      %c0_106 = arith.constant 0 : index
      %303 = vector.load %arg9[%c0_104, %c0_105, %c0_106] : memref<8x8x512xf32, #tpu.memory_space<vmem>>, vector<8x8x512xf32>
      tpu.vector_store %arg9[%c0_104, %c0_105, %c0_106], %302 {strides = array<i32>} : memref<8x8x512xf32, #tpu.memory_space<vmem>>, vector<8x8x512xf32>,
    } else {
    }
    %c0_i32_3 = arith.constant 0 : i32
    %8 = arith.cmpi ne, %arg1, %c0_i32_3 : i32
    %9 = arith.extui %8 : i1 to i32
    %c0_i32_4 = arith.constant 0 : i32
    %10 = arith.cmpi ne, %9, %c0_i32_4 : i32
    scf.if %10 {
      %293 = arith.index_cast %4 : i32 to index
      %c0_96 = arith.constant 0 : index
      %c0_97 = arith.constant 0 : index
      %294 = vector.load %arg8[%293, %c0_96, %c0_97] : memref<8x8x128xf32, #tpu.memory_space<vmem>>, vector<8x8x128xf32>
      %295 = vector.shape_cast %294 : vector<8x8x128xf32> to vector<64x128xf32>
      %c0_98 = arith.constant 0 : index
      %c0_99 = arith.constant 0 : index
      %c0_100 = arith.constant 0 : index
      %296 = vector.load %arg4[%c0_98, %c0_99, %c0_100] : memref<1x128x512xf32, #tpu.memory_space<vmem>>, vector<1x128x512xf32>
      %297 = vector.shape_cast %296 : vector<1x128x512xf32> to vector<128x512xf32>
      %cst_101 = arith.constant dense<0.000000e+00> : vector<64x512xf32>
      %298 = tpu.matmul %295, %297, %cst_101 {dimension_numbers = #tpu.dot_dimension_numbers<[1], [0], [0], [1], [0, 0, 1, 1], [], []>} : vector<64x128xf32>, vector<128x512xf32>, vector<64x512xf32> -> vector<64x512xf32>
      %c0_102 = arith.constant 0 : index
      %c0_103 = arith.constant 0 : index
      %c0_104 = arith.constant 0 : index
      %299 = vector.load %arg6[%c0_102, %c0_103, %c0_104] : memref<1x1x512xf32, #tpu.memory_space<vmem>>, vector<1x1x512xf32>
      %300 = vector.shape_cast %299 : vector<1x1x512xf32> to vector<1x512xf32>
      %301 = vector.broadcast %300 : vector<1x512xf32> to vector<64x512xf32>
      %302 = arith.addf %298, %301 : vector<64x512xf32>
      %303 = vector.shape_cast %302 : vector<64x512xf32> to vector<8x8x512xf32>
      %c0_105 = arith.constant 0 : index
      %c0_106 = arith.constant 0 : index
      %c0_107 = arith.constant 0 : index
      %304 = vector.load %arg9[%c0_105, %c0_106, %c0_107] : memref<8x8x512xf32, #tpu.memory_space<vmem>>, vector<8x8x512xf32>
      tpu.vector_store %arg9[%c0_105, %c0_106, %c0_107], %303 {strides = array<i32>} : memref<8x8x512xf32, #tpu.memory_space<vmem>>, vector<8x8x512xf32>,
    } else {
    }
    %c0_i32_5 = arith.constant 0 : i32
    %11 = arith.index_cast %c0_i32_5 : i32 to index
    %c0 = arith.constant 0 : index
    %c0_6 = arith.constant 0 : index
    %12 = vector.load %arg9[%11, %c0, %c0_6] : memref<8x8x512xf32, #tpu.memory_space<vmem>>, vector<1x8x512xf32>
    %13 = vector.shape_cast %12 : vector<1x8x512xf32> to vector<8x512xf32>
    %c0_7 = arith.constant 0 : index
    %c0_8 = arith.constant 0 : index
    %c0_9 = arith.constant 0 : index
    %14 = vector.load %arg5[%c0_7, %c0_8, %c0_9] : memref<1x128x512xf32, #tpu.memory_space<vmem>>, vector<1x128x512xf32>
    %15 = vector.shape_cast %14 : vector<1x128x512xf32> to vector<128x512xf32>
    %cst_10 = arith.constant dense<0.000000e+00> : vector<8x512xf32>
    %16 = tpu.matmul %1, %15, %cst_10 {dimension_numbers = #tpu.dot_dimension_numbers<[1], [0], [0], [1], [0, 0, 1, 1], [], []>} : vector<8x128xf32>, vector<128x512xf32>, vector<8x512xf32> -> vector<8x512xf32>
    %17 = arith.addf %13, %16 : vector<8x512xf32>
    %18 = vector.extract_strided_slice %17 {offsets = [0, 0], sizes = [8, 128], strides = [1, 1]} : vector<8x512xf32> to vector<8x128xf32>
    %19 = arith.negf %18 : vector<8x128xf32>
    %20 = math.exp %19 : vector<8x128xf32>
    %cst_11 = arith.constant 1.000000e+00 : f32
    %21 = vector.broadcast %cst_11 : f32 to vector<8x128xf32>
    %22 = arith.addf %21, %20 : vector<8x128xf32>
    %23 = arith.divf %21, %22 : vector<8x128xf32>
    %24 = vector.extract_strided_slice %17 {offsets = [0, 128], sizes = [8, 128], strides = [1, 1]} : vector<8x512xf32> to vector<8x128xf32>
    %25 = arith.negf %24 : vector<8x128xf32>
    %26 = math.exp %25 : vector<8x128xf32>
    %cst_12 = arith.constant 1.000000e+00 : f32
    %27 = vector.broadcast %cst_12 : f32 to vector<8x128xf32>
    %28 = arith.addf %27, %26 : vector<8x128xf32>
    %29 = arith.divf %27, %28 : vector<8x128xf32>
    %30 = vector.extract_strided_slice %17 {offsets = [0, 256], sizes = [8, 128], strides = [1, 1]} : vector<8x512xf32> to vector<8x128xf32>
    %31 = math.tanh %30 : vector<8x128xf32>
    %32 = vector.extract_strided_slice %17 {offsets = [0, 384], sizes = [8, 128], strides = [1, 1]} : vector<8x512xf32> to vector<8x128xf32>
    %33 = arith.negf %32 : vector<8x128xf32>
    %34 = math.exp %33 : vector<8x128xf32>
    %cst_13 = arith.constant 1.000000e+00 : f32
    %35 = vector.broadcast %cst_13 : f32 to vector<8x128xf32>
    %36 = arith.addf %35, %34 : vector<8x128xf32>
    %37 = arith.divf %35, %36 : vector<8x128xf32>
    %38 = arith.mulf %29, %2 : vector<8x128xf32>
    %39 = arith.mulf %23, %31 : vector<8x128xf32>
    %40 = arith.addf %38, %39 : vector<8x128xf32>
    %41 = math.tanh %40 : vector<8x128xf32>
    %42 = arith.mulf %37, %41 : vector<8x128xf32>
    %true = arith.constant true
    %43 = arith.xori %0, %true : i1
    %44 = arith.extui %43 : i1 to i32
    %c0_i32_14 = arith.constant 0 : i32
    %45 = arith.cmpi ne, %44, %c0_i32_14 : i32
    scf.if %45 {
      %293 = arith.addi %4, %c0_i32_5 : i32
      %294 = arith.index_cast %293 : i32 to index
      %c0_96 = arith.constant 0 : index
      %c0_97 = arith.constant 0 : index
      %295 = vector.load %arg8[%294, %c0_96, %c0_97] : memref<8x8x128xf32, #tpu.memory_space<vmem>>, vector<1x8x128xf32>
      %296 = vector.shape_cast %295 : vector<1x8x128xf32> to vector<8x128xf32>
      %297 = vector.shape_cast %42 : vector<8x128xf32> to vector<1x8x128xf32>
      tpu.vector_store %arg8[%294, %c0_96, %c0_97], %297 {strides = array<i32>} : memref<8x8x128xf32, #tpu.memory_space<vmem>>, vector<1x8x128xf32>,
    } else {
    }
    %c1_i32_15 = arith.constant 1 : i32
    %46 = arith.index_cast %c1_i32_15 : i32 to index
    %c0_16 = arith.constant 0 : index
    %c0_17 = arith.constant 0 : index
    %47 = vector.load %arg9[%46, %c0_16, %c0_17] : memref<8x8x512xf32, #tpu.memory_space<vmem>>, vector<1x8x512xf32>
    %48 = vector.shape_cast %47 : vector<1x8x512xf32> to vector<8x512xf32>
    %c0_18 = arith.constant 0 : index
    %c0_19 = arith.constant 0 : index
    %c0_20 = arith.constant 0 : index
    %49 = vector.load %arg5[%c0_18, %c0_19, %c0_20] : memref<1x128x512xf32, #tpu.memory_space<vmem>>, vector<1x128x512xf32>
    %50 = vector.shape_cast %49 : vector<1x128x512xf32> to vector<128x512xf32>
    %cst_21 = arith.constant dense<0.000000e+00> : vector<8x512xf32>
    %51 = tpu.matmul %42, %50, %cst_21 {dimension_numbers = #tpu.dot_dimension_numbers<[1], [0], [0], [1], [0, 0, 1, 1], [], []>} : vector<8x128xf32>, vector<128x512xf32>, vector<8x512xf32> -> vector<8x512xf32>
    %52 = arith.addf %48, %51 : vector<8x512xf32>
    %53 = vector.extract_strided_slice %52 {offsets = [0, 0], sizes = [8, 128], strides = [1, 1]} : vector<8x512xf32> to vector<8x128xf32>
    %54 = arith.negf %53 : vector<8x128xf32>
    %55 = math.exp %54 : vector<8x128xf32>
    %cst_22 = arith.constant 1.000000e+00 : f32
    %56 = vector.broadcast %cst_22 : f32 to vector<8x128xf32>
    %57 = arith.addf %56, %55 : vector<8x128xf32>
    %58 = arith.divf %56, %57 : vector<8x128xf32>
    %59 = vector.extract_strided_slice %52 {offsets = [0, 128], sizes = [8, 128], strides = [1, 1]} : vector<8x512xf32> to vector<8x128xf32>
    %60 = arith.negf %59 : vector<8x128xf32>
    %61 = math.exp %60 : vector<8x128xf32>
    %cst_23 = arith.constant 1.000000e+00 : f32
    %62 = vector.broadcast %cst_23 : f32 to vector<8x128xf32>
    %63 = arith.addf %62, %61 : vector<8x128xf32>
    %64 = arith.divf %62, %63 : vector<8x128xf32>
    %65 = vector.extract_strided_slice %52 {offsets = [0, 256], sizes = [8, 128], strides = [1, 1]} : vector<8x512xf32> to vector<8x128xf32>
    %66 = math.tanh %65 : vector<8x128xf32>
    %67 = vector.extract_strided_slice %52 {offsets = [0, 384], sizes = [8, 128], strides = [1, 1]} : vector<8x512xf32> to vector<8x128xf32>
    %68 = arith.negf %67 : vector<8x128xf32>
    %69 = math.exp %68 : vector<8x128xf32>
    %cst_24 = arith.constant 1.000000e+00 : f32
    %70 = vector.broadcast %cst_24 : f32 to vector<8x128xf32>
    %71 = arith.addf %70, %69 : vector<8x128xf32>
    %72 = arith.divf %70, %71 : vector<8x128xf32>
    %73 = arith.mulf %64, %40 : vector<8x128xf32>
    %74 = arith.mulf %58, %66 : vector<8x128xf32>
    %75 = arith.addf %73, %74 : vector<8x128xf32>
    %76 = math.tanh %75 : vector<8x128xf32>
    %77 = arith.mulf %72, %76 : vector<8x128xf32>
    %true_25 = arith.constant true
    %78 = arith.xori %0, %true_25 : i1
    %79 = arith.extui %78 : i1 to i32
    %c0_i32_26 = arith.constant 0 : i32
    %80 = arith.cmpi ne, %79, %c0_i32_26 : i32
    scf.if %80 {
      %293 = arith.addi %4, %c1_i32_15 : i32
      %294 = arith.index_cast %293 : i32 to index
      %c0_96 = arith.constant 0 : index
      %c0_97 = arith.constant 0 : index
      %295 = vector.load %arg8[%294, %c0_96, %c0_97] : memref<8x8x128xf32, #tpu.memory_space<vmem>>, vector<1x8x128xf32>
      %296 = vector.shape_cast %295 : vector<1x8x128xf32> to vector<8x128xf32>
      %297 = vector.shape_cast %77 : vector<8x128xf32> to vector<1x8x128xf32>
      tpu.vector_store %arg8[%294, %c0_96, %c0_97], %297 {strides = array<i32>} : memref<8x8x128xf32, #tpu.memory_space<vmem>>, vector<1x8x128xf32>,
    } else {
    }
    %c2_i32 = arith.constant 2 : i32
    %81 = arith.index_cast %c2_i32 : i32 to index
    %c0_27 = arith.constant 0 : index
    %c0_28 = arith.constant 0 : index
    %82 = vector.load %arg9[%81, %c0_27, %c0_28] : memref<8x8x512xf32, #tpu.memory_space<vmem>>, vector<1x8x512xf32>
    %83 = vector.shape_cast %82 : vector<1x8x512xf32> to vector<8x512xf32>
    %c0_29 = arith.constant 0 : index
    %c0_30 = arith.constant 0 : index
    %c0_31 = arith.constant 0 : index
    %84 = vector.load %arg5[%c0_29, %c0_30, %c0_31] : memref<1x128x512xf32, #tpu.memory_space<vmem>>, vector<1x128x512xf32>
    %85 = vector.shape_cast %84 : vector<1x128x512xf32> to vector<128x512xf32>
    %cst_32 = arith.constant dense<0.000000e+00> : vector<8x512xf32>
    %86 = tpu.matmul %77, %85, %cst_32 {dimension_numbers = #tpu.dot_dimension_numbers<[1], [0], [0], [1], [0, 0, 1, 1], [], []>} : vector<8x128xf32>, vector<128x512xf32>, vector<8x512xf32> -> vector<8x512xf32>
    %87 = arith.addf %83, %86 : vector<8x512xf32>
    %88 = vector.extract_strided_slice %87 {offsets = [0, 0], sizes = [8, 128], strides = [1, 1]} : vector<8x512xf32> to vector<8x128xf32>
    %89 = arith.negf %88 : vector<8x128xf32>
    %90 = math.exp %89 : vector<8x128xf32>
    %cst_33 = arith.constant 1.000000e+00 : f32
    %91 = vector.broadcast %cst_33 : f32 to vector<8x128xf32>
    %92 = arith.addf %91, %90 : vector<8x128xf32>
    %93 = arith.divf %91, %92 : vector<8x128xf32>
    %94 = vector.extract_strided_slice %87 {offsets = [0, 128], sizes = [8, 128], strides = [1, 1]} : vector<8x512xf32> to vector<8x128xf32>
    %95 = arith.negf %94 : vector<8x128xf32>
    %96 = math.exp %95 : vector<8x128xf32>
    %cst_34 = arith.constant 1.000000e+00 : f32
    %97 = vector.broadcast %cst_34 : f32 to vector<8x128xf32>
    %98 = arith.addf %97, %96 : vector<8x128xf32>
    %99 = arith.divf %97, %98 : vector<8x128xf32>
    %100 = vector.extract_strided_slice %87 {offsets = [0, 256], sizes = [8, 128], strides = [1, 1]} : vector<8x512xf32> to vector<8x128xf32>
    %101 = math.tanh %100 : vector<8x128xf32>
    %102 = vector.extract_strided_slice %87 {offsets = [0, 384], sizes = [8, 128], strides = [1, 1]} : vector<8x512xf32> to vector<8x128xf32>
    %103 = arith.negf %102 : vector<8x128xf32>
    %104 = math.exp %103 : vector<8x128xf32>
    %cst_35 = arith.constant 1.000000e+00 : f32
    %105 = vector.broadcast %cst_35 : f32 to vector<8x128xf32>
    %106 = arith.addf %105, %104 : vector<8x128xf32>
    %107 = arith.divf %105, %106 : vector<8x128xf32>
    %108 = arith.mulf %99, %75 : vector<8x128xf32>
    %109 = arith.mulf %93, %101 : vector<8x128xf32>
    %110 = arith.addf %108, %109 : vector<8x128xf32>
    %111 = math.tanh %110 : vector<8x128xf32>
    %112 = arith.mulf %107, %111 : vector<8x128xf32>
    %true_36 = arith.constant true
    %113 = arith.xori %0, %true_36 : i1
    %114 = arith.extui %113 : i1 to i32
    %c0_i32_37 = arith.constant 0 : i32
    %115 = arith.cmpi ne, %114, %c0_i32_37 : i32
    scf.if %115 {
      %293 = arith.addi %4, %c2_i32 : i32
      %294 = arith.index_cast %293 : i32 to index
      %c0_96 = arith.constant 0 : index
      %c0_97 = arith.constant 0 : index
      %295 = vector.load %arg8[%294, %c0_96, %c0_97] : memref<8x8x128xf32, #tpu.memory_space<vmem>>, vector<1x8x128xf32>
      %296 = vector.shape_cast %295 : vector<1x8x128xf32> to vector<8x128xf32>
      %297 = vector.shape_cast %112 : vector<8x128xf32> to vector<1x8x128xf32>
      tpu.vector_store %arg8[%294, %c0_96, %c0_97], %297 {strides = array<i32>} : memref<8x8x128xf32, #tpu.memory_space<vmem>>, vector<1x8x128xf32>,
    } else {
    }
    %c3_i32 = arith.constant 3 : i32
    %116 = arith.index_cast %c3_i32 : i32 to index
    %c0_38 = arith.constant 0 : index
    %c0_39 = arith.constant 0 : index
    %117 = vector.load %arg9[%116, %c0_38, %c0_39] : memref<8x8x512xf32, #tpu.memory_space<vmem>>, vector<1x8x512xf32>
    %118 = vector.shape_cast %117 : vector<1x8x512xf32> to vector<8x512xf32>
    %c0_40 = arith.constant 0 : index
    %c0_41 = arith.constant 0 : index
    %c0_42 = arith.constant 0 : index
    %119 = vector.load %arg5[%c0_40, %c0_41, %c0_42] : memref<1x128x512xf32, #tpu.memory_space<vmem>>, vector<1x128x512xf32>
    %120 = vector.shape_cast %119 : vector<1x128x512xf32> to vector<128x512xf32>
    %cst_43 = arith.constant dense<0.000000e+00> : vector<8x512xf32>
    %121 = tpu.matmul %112, %120, %cst_43 {dimension_numbers = #tpu.dot_dimension_numbers<[1], [0], [0], [1], [0, 0, 1, 1], [], []>} : vector<8x128xf32>, vector<128x512xf32>, vector<8x512xf32> -> vector<8x512xf32>
    %122 = arith.addf %118, %121 : vector<8x512xf32>
    %123 = vector.extract_strided_slice %122 {offsets = [0, 0], sizes = [8, 128], strides = [1, 1]} : vector<8x512xf32> to vector<8x128xf32>
    %124 = arith.negf %123 : vector<8x128xf32>
    %125 = math.exp %124 : vector<8x128xf32>
    %cst_44 = arith.constant 1.000000e+00 : f32
    %126 = vector.broadcast %cst_44 : f32 to vector<8x128xf32>
    %127 = arith.addf %126, %125 : vector<8x128xf32>
    %128 = arith.divf %126, %127 : vector<8x128xf32>
    %129 = vector.extract_strided_slice %122 {offsets = [0, 128], sizes = [8, 128], strides = [1, 1]} : vector<8x512xf32> to vector<8x128xf32>
    %130 = arith.negf %129 : vector<8x128xf32>
    %131 = math.exp %130 : vector<8x128xf32>
    %cst_45 = arith.constant 1.000000e+00 : f32
    %132 = vector.broadcast %cst_45 : f32 to vector<8x128xf32>
    %133 = arith.addf %132, %131 : vector<8x128xf32>
    %134 = arith.divf %132, %133 : vector<8x128xf32>
    %135 = vector.extract_strided_slice %122 {offsets = [0, 256], sizes = [8, 128], strides = [1, 1]} : vector<8x512xf32> to vector<8x128xf32>
    %136 = math.tanh %135 : vector<8x128xf32>
    %137 = vector.extract_strided_slice %122 {offsets = [0, 384], sizes = [8, 128], strides = [1, 1]} : vector<8x512xf32> to vector<8x128xf32>
    %138 = arith.negf %137 : vector<8x128xf32>
    %139 = math.exp %138 : vector<8x128xf32>
    %cst_46 = arith.constant 1.000000e+00 : f32
    %140 = vector.broadcast %cst_46 : f32 to vector<8x128xf32>
    %141 = arith.addf %140, %139 : vector<8x128xf32>
    %142 = arith.divf %140, %141 : vector<8x128xf32>
    %143 = arith.mulf %134, %110 : vector<8x128xf32>
    %144 = arith.mulf %128, %136 : vector<8x128xf32>
    %145 = arith.addf %143, %144 : vector<8x128xf32>
    %146 = math.tanh %145 : vector<8x128xf32>
    %147 = arith.mulf %142, %146 : vector<8x128xf32>
    %true_47 = arith.constant true
    %148 = arith.xori %0, %true_47 : i1
    %149 = arith.extui %148 : i1 to i32
    %c0_i32_48 = arith.constant 0 : i32
    %150 = arith.cmpi ne, %149, %c0_i32_48 : i32
    scf.if %150 {
      %293 = arith.addi %4, %c3_i32 : i32
      %294 = arith.index_cast %293 : i32 to index
      %c0_96 = arith.constant 0 : index
      %c0_97 = arith.constant 0 : index
      %295 = vector.load %arg8[%294, %c0_96, %c0_97] : memref<8x8x128xf32, #tpu.memory_space<vmem>>, vector<1x8x128xf32>
      %296 = vector.shape_cast %295 : vector<1x8x128xf32> to vector<8x128xf32>
      %297 = vector.shape_cast %147 : vector<8x128xf32> to vector<1x8x128xf32>
      tpu.vector_store %arg8[%294, %c0_96, %c0_97], %297 {strides = array<i32>} : memref<8x8x128xf32, #tpu.memory_space<vmem>>, vector<1x8x128xf32>,
    } else {
    }
    %c4_i32 = arith.constant 4 : i32
    %151 = arith.index_cast %c4_i32 : i32 to index
    %c0_49 = arith.constant 0 : index
    %c0_50 = arith.constant 0 : index
    %152 = vector.load %arg9[%151, %c0_49, %c0_50] : memref<8x8x512xf32, #tpu.memory_space<vmem>>, vector<1x8x512xf32>
    %153 = vector.shape_cast %152 : vector<1x8x512xf32> to vector<8x512xf32>
    %c0_51 = arith.constant 0 : index
    %c0_52 = arith.constant 0 : index
    %c0_53 = arith.constant 0 : index
    %154 = vector.load %arg5[%c0_51, %c0_52, %c0_53] : memref<1x128x512xf32, #tpu.memory_space<vmem>>, vector<1x128x512xf32>
    %155 = vector.shape_cast %154 : vector<1x128x512xf32> to vector<128x512xf32>
    %cst_54 = arith.constant dense<0.000000e+00> : vector<8x512xf32>
    %156 = tpu.matmul %147, %155, %cst_54 {dimension_numbers = #tpu.dot_dimension_numbers<[1], [0], [0], [1], [0, 0, 1, 1], [], []>} : vector<8x128xf32>, vector<128x512xf32>, vector<8x512xf32> -> vector<8x512xf32>
    %157 = arith.addf %153, %156 : vector<8x512xf32>
    %158 = vector.extract_strided_slice %157 {offsets = [0, 0], sizes = [8, 128], strides = [1, 1]} : vector<8x512xf32> to vector<8x128xf32>
    %159 = arith.negf %158 : vector<8x128xf32>
    %160 = math.exp %159 : vector<8x128xf32>
    %cst_55 = arith.constant 1.000000e+00 : f32
    %161 = vector.broadcast %cst_55 : f32 to vector<8x128xf32>
    %162 = arith.addf %161, %160 : vector<8x128xf32>
    %163 = arith.divf %161, %162 : vector<8x128xf32>
    %164 = vector.extract_strided_slice %157 {offsets = [0, 128], sizes = [8, 128], strides = [1, 1]} : vector<8x512xf32> to vector<8x128xf32>
    %165 = arith.negf %164 : vector<8x128xf32>
    %166 = math.exp %165 : vector<8x128xf32>
    %cst_56 = arith.constant 1.000000e+00 : f32
    %167 = vector.broadcast %cst_56 : f32 to vector<8x128xf32>
    %168 = arith.addf %167, %166 : vector<8x128xf32>
    %169 = arith.divf %167, %168 : vector<8x128xf32>
    %170 = vector.extract_strided_slice %157 {offsets = [0, 256], sizes = [8, 128], strides = [1, 1]} : vector<8x512xf32> to vector<8x128xf32>
    %171 = math.tanh %170 : vector<8x128xf32>
    %172 = vector.extract_strided_slice %157 {offsets = [0, 384], sizes = [8, 128], strides = [1, 1]} : vector<8x512xf32> to vector<8x128xf32>
    %173 = arith.negf %172 : vector<8x128xf32>
    %174 = math.exp %173 : vector<8x128xf32>
    %cst_57 = arith.constant 1.000000e+00 : f32
    %175 = vector.broadcast %cst_57 : f32 to vector<8x128xf32>
    %176 = arith.addf %175, %174 : vector<8x128xf32>
    %177 = arith.divf %175, %176 : vector<8x128xf32>
    %178 = arith.mulf %169, %145 : vector<8x128xf32>
    %179 = arith.mulf %163, %171 : vector<8x128xf32>
    %180 = arith.addf %178, %179 : vector<8x128xf32>
    %181 = math.tanh %180 : vector<8x128xf32>
    %182 = arith.mulf %177, %181 : vector<8x128xf32>
    %true_58 = arith.constant true
    %183 = arith.xori %0, %true_58 : i1
    %184 = arith.extui %183 : i1 to i32
    %c0_i32_59 = arith.constant 0 : i32
    %185 = arith.cmpi ne, %184, %c0_i32_59 : i32
    scf.if %185 {
      %293 = arith.addi %4, %c4_i32 : i32
      %294 = arith.index_cast %293 : i32 to index
      %c0_96 = arith.constant 0 : index
      %c0_97 = arith.constant 0 : index
      %295 = vector.load %arg8[%294, %c0_96, %c0_97] : memref<8x8x128xf32, #tpu.memory_space<vmem>>, vector<1x8x128xf32>
      %296 = vector.shape_cast %295 : vector<1x8x128xf32> to vector<8x128xf32>
      %297 = vector.shape_cast %182 : vector<8x128xf32> to vector<1x8x128xf32>
      tpu.vector_store %arg8[%294, %c0_96, %c0_97], %297 {strides = array<i32>} : memref<8x8x128xf32, #tpu.memory_space<vmem>>, vector<1x8x128xf32>,
    } else {
    }
    %c5_i32 = arith.constant 5 : i32
    %186 = arith.index_cast %c5_i32 : i32 to index
    %c0_60 = arith.constant 0 : index
    %c0_61 = arith.constant 0 : index
    %187 = vector.load %arg9[%186, %c0_60, %c0_61] : memref<8x8x512xf32, #tpu.memory_space<vmem>>, vector<1x8x512xf32>
    %188 = vector.shape_cast %187 : vector<1x8x512xf32> to vector<8x512xf32>
    %c0_62 = arith.constant 0 : index
    %c0_63 = arith.constant 0 : index
    %c0_64 = arith.constant 0 : index
    %189 = vector.load %arg5[%c0_62, %c0_63, %c0_64] : memref<1x128x512xf32, #tpu.memory_space<vmem>>, vector<1x128x512xf32>
    %190 = vector.shape_cast %189 : vector<1x128x512xf32> to vector<128x512xf32>
    %cst_65 = arith.constant dense<0.000000e+00> : vector<8x512xf32>
    %191 = tpu.matmul %182, %190, %cst_65 {dimension_numbers = #tpu.dot_dimension_numbers<[1], [0], [0], [1], [0, 0, 1, 1], [], []>} : vector<8x128xf32>, vector<128x512xf32>, vector<8x512xf32> -> vector<8x512xf32>
    %192 = arith.addf %188, %191 : vector<8x512xf32>
    %193 = vector.extract_strided_slice %192 {offsets = [0, 0], sizes = [8, 128], strides = [1, 1]} : vector<8x512xf32> to vector<8x128xf32>
    %194 = arith.negf %193 : vector<8x128xf32>
    %195 = math.exp %194 : vector<8x128xf32>
    %cst_66 = arith.constant 1.000000e+00 : f32
    %196 = vector.broadcast %cst_66 : f32 to vector<8x128xf32>
    %197 = arith.addf %196, %195 : vector<8x128xf32>
    %198 = arith.divf %196, %197 : vector<8x128xf32>
    %199 = vector.extract_strided_slice %192 {offsets = [0, 128], sizes = [8, 128], strides = [1, 1]} : vector<8x512xf32> to vector<8x128xf32>
    %200 = arith.negf %199 : vector<8x128xf32>
    %201 = math.exp %200 : vector<8x128xf32>
    %cst_67 = arith.constant 1.000000e+00 : f32
    %202 = vector.broadcast %cst_67 : f32 to vector<8x128xf32>
    %203 = arith.addf %202, %201 : vector<8x128xf32>
    %204 = arith.divf %202, %203 : vector<8x128xf32>
    %205 = vector.extract_strided_slice %192 {offsets = [0, 256], sizes = [8, 128], strides = [1, 1]} : vector<8x512xf32> to vector<8x128xf32>
    %206 = math.tanh %205 : vector<8x128xf32>
    %207 = vector.extract_strided_slice %192 {offsets = [0, 384], sizes = [8, 128], strides = [1, 1]} : vector<8x512xf32> to vector<8x128xf32>
    %208 = arith.negf %207 : vector<8x128xf32>
    %209 = math.exp %208 : vector<8x128xf32>
    %cst_68 = arith.constant 1.000000e+00 : f32
    %210 = vector.broadcast %cst_68 : f32 to vector<8x128xf32>
    %211 = arith.addf %210, %209 : vector<8x128xf32>
    %212 = arith.divf %210, %211 : vector<8x128xf32>
    %213 = arith.mulf %204, %180 : vector<8x128xf32>
    %214 = arith.mulf %198, %206 : vector<8x128xf32>
    %215 = arith.addf %213, %214 : vector<8x128xf32>
    %216 = math.tanh %215 : vector<8x128xf32>
    %217 = arith.mulf %212, %216 : vector<8x128xf32>
    %true_69 = arith.constant true
    %218 = arith.xori %0, %true_69 : i1
    %219 = arith.extui %218 : i1 to i32
    %c0_i32_70 = arith.constant 0 : i32
    %220 = arith.cmpi ne, %219, %c0_i32_70 : i32
    scf.if %220 {
      %293 = arith.addi %4, %c5_i32 : i32
      %294 = arith.index_cast %293 : i32 to index
      %c0_96 = arith.constant 0 : index
      %c0_97 = arith.constant 0 : index
      %295 = vector.load %arg8[%294, %c0_96, %c0_97] : memref<8x8x128xf32, #tpu.memory_space<vmem>>, vector<1x8x128xf32>
      %296 = vector.shape_cast %295 : vector<1x8x128xf32> to vector<8x128xf32>
      %297 = vector.shape_cast %217 : vector<8x128xf32> to vector<1x8x128xf32>
      tpu.vector_store %arg8[%294, %c0_96, %c0_97], %297 {strides = array<i32>} : memref<8x8x128xf32, #tpu.memory_space<vmem>>, vector<1x8x128xf32>,
    } else {
    }
    %c6_i32 = arith.constant 6 : i32
    %221 = arith.index_cast %c6_i32 : i32 to index
    %c0_71 = arith.constant 0 : index
    %c0_72 = arith.constant 0 : index
    %222 = vector.load %arg9[%221, %c0_71, %c0_72] : memref<8x8x512xf32, #tpu.memory_space<vmem>>, vector<1x8x512xf32>
    %223 = vector.shape_cast %222 : vector<1x8x512xf32> to vector<8x512xf32>
    %c0_73 = arith.constant 0 : index
    %c0_74 = arith.constant 0 : index
    %c0_75 = arith.constant 0 : index
    %224 = vector.load %arg5[%c0_73, %c0_74, %c0_75] : memref<1x128x512xf32, #tpu.memory_space<vmem>>, vector<1x128x512xf32>
    %225 = vector.shape_cast %224 : vector<1x128x512xf32> to vector<128x512xf32>
    %cst_76 = arith.constant dense<0.000000e+00> : vector<8x512xf32>
    %226 = tpu.matmul %217, %225, %cst_76 {dimension_numbers = #tpu.dot_dimension_numbers<[1], [0], [0], [1], [0, 0, 1, 1], [], []>} : vector<8x128xf32>, vector<128x512xf32>, vector<8x512xf32> -> vector<8x512xf32>
    %227 = arith.addf %223, %226 : vector<8x512xf32>
    %228 = vector.extract_strided_slice %227 {offsets = [0, 0], sizes = [8, 128], strides = [1, 1]} : vector<8x512xf32> to vector<8x128xf32>
    %229 = arith.negf %228 : vector<8x128xf32>
    %230 = math.exp %229 : vector<8x128xf32>
    %cst_77 = arith.constant 1.000000e+00 : f32
    %231 = vector.broadcast %cst_77 : f32 to vector<8x128xf32>
    %232 = arith.addf %231, %230 : vector<8x128xf32>
    %233 = arith.divf %231, %232 : vector<8x128xf32>
    %234 = vector.extract_strided_slice %227 {offsets = [0, 128], sizes = [8, 128], strides = [1, 1]} : vector<8x512xf32> to vector<8x128xf32>
    %235 = arith.negf %234 : vector<8x128xf32>
    %236 = math.exp %235 : vector<8x128xf32>
    %cst_78 = arith.constant 1.000000e+00 : f32
    %237 = vector.broadcast %cst_78 : f32 to vector<8x128xf32>
    %238 = arith.addf %237, %236 : vector<8x128xf32>
    %239 = arith.divf %237, %238 : vector<8x128xf32>
    %240 = vector.extract_strided_slice %227 {offsets = [0, 256], sizes = [8, 128], strides = [1, 1]} : vector<8x512xf32> to vector<8x128xf32>
    %241 = math.tanh %240 : vector<8x128xf32>
    %242 = vector.extract_strided_slice %227 {offsets = [0, 384], sizes = [8, 128], strides = [1, 1]} : vector<8x512xf32> to vector<8x128xf32>
    %243 = arith.negf %242 : vector<8x128xf32>
    %244 = math.exp %243 : vector<8x128xf32>
    %cst_79 = arith.constant 1.000000e+00 : f32
    %245 = vector.broadcast %cst_79 : f32 to vector<8x128xf32>
    %246 = arith.addf %245, %244 : vector<8x128xf32>
    %247 = arith.divf %245, %246 : vector<8x128xf32>
    %248 = arith.mulf %239, %215 : vector<8x128xf32>
    %249 = arith.mulf %233, %241 : vector<8x128xf32>
    %250 = arith.addf %248, %249 : vector<8x128xf32>
    %251 = math.tanh %250 : vector<8x128xf32>
    %252 = arith.mulf %247, %251 : vector<8x128xf32>
    %true_80 = arith.constant true
    %253 = arith.xori %0, %true_80 : i1
    %254 = arith.extui %253 : i1 to i32
    %c0_i32_81 = arith.constant 0 : i32
    %255 = arith.cmpi ne, %254, %c0_i32_81 : i32
    scf.if %255 {
      %293 = arith.addi %4, %c6_i32 : i32
      %294 = arith.index_cast %293 : i32 to index
      %c0_96 = arith.constant 0 : index
      %c0_97 = arith.constant 0 : index
      %295 = vector.load %arg8[%294, %c0_96, %c0_97] : memref<8x8x128xf32, #tpu.memory_space<vmem>>, vector<1x8x128xf32>
      %296 = vector.shape_cast %295 : vector<1x8x128xf32> to vector<8x128xf32>
      %297 = vector.shape_cast %252 : vector<8x128xf32> to vector<1x8x128xf32>
      tpu.vector_store %arg8[%294, %c0_96, %c0_97], %297 {strides = array<i32>} : memref<8x8x128xf32, #tpu.memory_space<vmem>>, vector<1x8x128xf32>,
    } else {
    }
    %c7_i32 = arith.constant 7 : i32
    %256 = arith.index_cast %c7_i32 : i32 to index
    %c0_82 = arith.constant 0 : index
    %c0_83 = arith.constant 0 : index
    %257 = vector.load %arg9[%256, %c0_82, %c0_83] : memref<8x8x512xf32, #tpu.memory_space<vmem>>, vector<1x8x512xf32>
    %258 = vector.shape_cast %257 : vector<1x8x512xf32> to vector<8x512xf32>
    %c0_84 = arith.constant 0 : index
    %c0_85 = arith.constant 0 : index
    %c0_86 = arith.constant 0 : index
    %259 = vector.load %arg5[%c0_84, %c0_85, %c0_86] : memref<1x128x512xf32, #tpu.memory_space<vmem>>, vector<1x128x512xf32>
    %260 = vector.shape_cast %259 : vector<1x128x512xf32> to vector<128x512xf32>
    %cst_87 = arith.constant dense<0.000000e+00> : vector<8x512xf32>
    %261 = tpu.matmul %252, %260, %cst_87 {dimension_numbers = #tpu.dot_dimension_numbers<[1], [0], [0], [1], [0, 0, 1, 1], [], []>} : vector<8x128xf32>, vector<128x512xf32>, vector<8x512xf32> -> vector<8x512xf32>
    %262 = arith.addf %258, %261 : vector<8x512xf32>
    %263 = vector.extract_strided_slice %262 {offsets = [0, 0], sizes = [8, 128], strides = [1, 1]} : vector<8x512xf32> to vector<8x128xf32>
    %264 = arith.negf %263 : vector<8x128xf32>
    %265 = math.exp %264 : vector<8x128xf32>
    %cst_88 = arith.constant 1.000000e+00 : f32
    %266 = vector.broadcast %cst_88 : f32 to vector<8x128xf32>
    %267 = arith.addf %266, %265 : vector<8x128xf32>
    %268 = arith.divf %266, %267 : vector<8x128xf32>
    %269 = vector.extract_strided_slice %262 {offsets = [0, 128], sizes = [8, 128], strides = [1, 1]} : vector<8x512xf32> to vector<8x128xf32>
    %270 = arith.negf %269 : vector<8x128xf32>
    %271 = math.exp %270 : vector<8x128xf32>
    %cst_89 = arith.constant 1.000000e+00 : f32
    %272 = vector.broadcast %cst_89 : f32 to vector<8x128xf32>
    %273 = arith.addf %272, %271 : vector<8x128xf32>
    %274 = arith.divf %272, %273 : vector<8x128xf32>
    %275 = vector.extract_strided_slice %262 {offsets = [0, 256], sizes = [8, 128], strides = [1, 1]} : vector<8x512xf32> to vector<8x128xf32>
    %276 = math.tanh %275 : vector<8x128xf32>
    %277 = vector.extract_strided_slice %262 {offsets = [0, 384], sizes = [8, 128], strides = [1, 1]} : vector<8x512xf32> to vector<8x128xf32>
    %278 = arith.negf %277 : vector<8x128xf32>
    %279 = math.exp %278 : vector<8x128xf32>
    %cst_90 = arith.constant 1.000000e+00 : f32
    %280 = vector.broadcast %cst_90 : f32 to vector<8x128xf32>
    %281 = arith.addf %280, %279 : vector<8x128xf32>
    %282 = arith.divf %280, %281 : vector<8x128xf32>
    %283 = arith.mulf %274, %250 : vector<8x128xf32>
    %284 = arith.mulf %268, %276 : vector<8x128xf32>
    %285 = arith.addf %283, %284 : vector<8x128xf32>
    %286 = math.tanh %285 : vector<8x128xf32>
    %287 = arith.mulf %282, %286 : vector<8x128xf32>
    %true_91 = arith.constant true
    %288 = arith.xori %0, %true_91 : i1
    %289 = arith.extui %288 : i1 to i32
    %c0_i32_92 = arith.constant 0 : i32
    %290 = arith.cmpi ne, %289, %c0_i32_92 : i32
    scf.if %290 {
      %293 = arith.addi %4, %c7_i32 : i32
      %294 = arith.index_cast %293 : i32 to index
      %c0_96 = arith.constant 0 : index
      %c0_97 = arith.constant 0 : index
      %295 = vector.load %arg8[%294, %c0_96, %c0_97] : memref<8x8x128xf32, #tpu.memory_space<vmem>>, vector<1x8x128xf32>
      %296 = vector.shape_cast %295 : vector<1x8x128xf32> to vector<8x128xf32>
      %297 = vector.shape_cast %287 : vector<8x128xf32> to vector<1x8x128xf32>
      tpu.vector_store %arg8[%294, %c0_96, %c0_97], %297 {strides = array<i32>} : memref<8x8x128xf32, #tpu.memory_space<vmem>>, vector<1x8x128xf32>,
    } else {
    }
    %c8_i32_93 = arith.constant 8 : i32
    %c1_i32_94 = arith.constant 1 : i32
    %291 = arith.extui %0 : i1 to i32
    %c0_i32_95 = arith.constant 0 : i32
    %292 = arith.cmpi ne, %291, %c0_i32_95 : i32
    scf.if %292 {
      %c0_96 = arith.constant 0 : index
      %c0_97 = arith.constant 0 : index
      %293 = vector.load %arg7[%c0_96, %c0_97] : memref<8x128xf32, #tpu.memory_space<vmem>>, vector<8x128xf32>
      tpu.vector_store %arg7[%c0_96, %c0_97], %287 {strides = array<i32>} : memref<8x128xf32, #tpu.memory_space<vmem>>, vector<8x128xf32>,
    } else {
    }
    return
  }
  func.func @transform_0(%arg0: i32, %arg1: i32) -> (i32, i32, i32) {
    %c0_i32 = arith.constant 0 : i32
    %c0_i32_0 = arith.constant 0 : i32
    %c0_i32_1 = arith.constant 0 : i32
    return %c0_i32, %arg0, %c0_i32_0 : i32, i32, i32
  }
  func.func @transform_1(%arg0: i32, %arg1: i32) -> (i32, i32) {
    %c0_i32 = arith.constant 0 : i32
    %c0_i32_0 = arith.constant 0 : i32
    %c0_i32_1 = arith.constant 0 : i32
    return %c0_i32, %c0_i32_0 : i32, i32
  }
  func.func @transform_2(%arg0: i32, %arg1: i32) -> (i32, i32, i32) {
    %c1_i32 = arith.constant 1 : i32
    %0 = arith.subi %arg1, %c1_i32 : i32
    %c0_i32 = arith.constant 0 : i32
    %1 = arith.maxsi %0, %c0_i32 : i32
    %c0_i32_0 = arith.constant 0 : i32
    %c0_i32_1 = arith.constant 0 : i32
    %c0_i32_2 = arith.constant 0 : i32
    return %1, %c0_i32_0, %c0_i32_1 : i32, i32, i32
  }
  func.func @transform_3(%arg0: i32, %arg1: i32) -> (i32, i32, i32) {
    %c0_i32 = arith.constant 0 : i32
    %c0_i32_0 = arith.constant 0 : i32
    %c0_i32_1 = arith.constant 0 : i32
    return %arg1, %c0_i32, %c0_i32_0 : i32, i32, i32
  }
  func.func @transform_4(%arg0: i32, %arg1: i32) -> (i32, i32, i32) {
    %c0_i32 = arith.constant 0 : i32
    %c0_i32_0 = arith.constant 0 : i32
    %c0_i32_1 = arith.constant 0 : i32
    return %arg1, %c0_i32, %c0_i32_0 : i32, i32, i32
  }
  func.func @transform_5(%arg0: i32, %arg1: i32) -> (i32, i32) {
    %c0_i32 = arith.constant 0 : i32
    %c0_i32_0 = arith.constant 0 : i32
    return %arg0, %c0_i32 : i32, i32
  }
}

</mosaic_0001>

<llo_original>
// kernel: tpu_custom_call.1
$region0: #{tpu_custom_call.1}
  #allocation0 [shape = 'u32[]', space=smem, size = 0x4, offset = 0x4, fixed_abs, tag = 'smem constant byte address 0x4 - core index']
  #allocation1 [shape = 'u32[144,128]{1,0:T(1,128)}', space=vmem, size = 0x12000, scoped, tag = 'internal scratch']
  #allocation2 [shape = 'f32[8,8,128]{2,1,0:T(8,128)}', space=vmem, size = 0x8000, scoped, tag = 'scratch operand']
  #allocation3 [shape = 'f32[8,8,512]{2,1,0:T(8,128)}', space=vmem, size = 0x20000, scoped, tag = 'scratch operand']
  %s0 = inlined_call_operand.hbm [shape: f32[8,8,128], index: 0, kind: input, shape index: {}]
  %s1 = inlined_call_operand.hbm [shape: f32[128,512], index: 1, kind: input, shape index: {}]
  %s2 = inlined_call_operand.hbm [shape: f32[1,128,512], index: 2, kind: input, shape index: {}]
  %s3 = inlined_call_operand.hbm [shape: f32[2,128,512], index: 3, kind: input, shape index: {}]
  %s4 = inlined_call_operand.vmem [shape: f32[2,1,512], index: 4, kind: input, shape index: {}]
  %s5 = inlined_call_operand.hbm [shape: f32[8,128], index: 5, kind: output, shape index: {}]
  %s6 = sld [smem:[#allocation0]]
  $region113: #{tpu_custom_call.1} parent=0
    _
  %s8 = ssub.s32 1, %s6
  %s9 = scalar_select 0, %s8, %s6
  $region1: #{tpu_custom_call.1} parent=0
    #allocation4 [shape = 'u8[32768]{0}', space=vmem, size = 0x8000, scoped, tag = 'input window, operand 0, single buffered']
    #allocation5 [shape = 's32[2]{0}', space=sflag, size = 0x8, scoped, tag = 'scoped memory for tpu_custom_call.1']
    #allocation6 [shape = 's32[2]{0}', space=sflag, size = 0x8, scoped, tag = 'scoped memory for tpu_custom_call.1']
    #allocation7 [shape = 'u8[262144]{0}', space=vmem, size = 0x40000, scoped, tag = 'input window, operand 1, single buffered']
    #allocation8 [shape = 's32[1]{0}', space=sflag, size = 0x4, scoped, tag = 'scoped memory for tpu_custom_call.1']
    #allocation9 [shape = 'u8[524288]{0}', space=vmem, size = 0x80000, scoped, tag = 'input window, operand 2']
    #allocation10 [shape = 'u8[524288]{0}', space=vmem, size = 0x80000, scoped, tag = 'input window, operand 3']
    #allocation11 [shape = 'u8[4096]{0}', space=vmem, size = 0x1000, scoped, tag = 'output window, operand 0, single buffered']
    %10 = vsyncpa [#allocation5], 0
    %11 = vsyncpa [#allocation8], 0
    %12 = vsyncpa [#allocation6], 0
    loop: start=0, step=1, limit=4
    $region2: #{tpu_custom_call.1} parent=1 // loop_pre_header
      _
    $region3: #{tpu_custom_call.1} parent=1 // loop_header
      %s14 = sphi 0, %s18
      %p15 = scmp.ge.s32.totalorder %s14, 4
      %s21 = sphi 0, %s33
      %s22 = sphi 0, %s29
      %s23 = sphi 0, %s21
      %s24 = sphi 0, %s22
      %s25 = sphi 0, %s23
      %s26 = sphi 0, %s24
      %s36 = sphi 0, %s38
      %s39 = sphi 0, %s36
      %s40 = sphi 0, %s39
      %s56 = sphi 0, %s40
      %s60 = sphi 0, %s60
      %s62 = sphi 0, %s60
      %s63 = sphi 0, %s62
      %s77 = sphi 0, %s63
      %s89 = sphi 0, %s91
      %s92 = sphi 0, %s89
      %s93 = sphi 0, %s92
      %s109 = sphi 0, %s93
      %s115 = sphi 0, %s117
      %s118 = sphi 0, %s115
      %s119 = sphi 0, %s118
      %s135 = sphi 0, %s119
      %s141 = sphi 0, %s143
      %s144 = sphi 0, %s141
      %s145 = sphi 0, %s144
      %s161 = sphi 0, %s145
      %s167 = sphi 0, %s169
      %s170 = sphi 0, %s167
      %s171 = sphi 0, %s170
      %s187 = sphi 0, %s171
    $region4: #{tpu_custom_call.1} parent=1 // loop_header_branch
      %17 = sbr.rel (%p15) target = $region8
    $region5: #{tpu_custom_call.1} parent=1 // loop_body
      %s19 = ssub.s32 %s14, 1
      %s20 = ssub.s32 %s14, 2
      %s27 = sadd.s32 1, %s22
      %p28 = scmp.ge.s32.totalorder %s27, 2
      %s29 = scalar_select %p28, 0, %s27
      %s30 = sadd.s32 1, %s21
      %s31 = scalar_select %p28, %s30, %s21
      %p32 = scmp.ge.s32.totalorder %s31, 1
      %s33 = scalar_select %p32, 0, %s31
      %s34 = ssub.s32 %s21, %s33
      %p35 = scmp.eq.s32.totalorder %s34, 0
      %s37 = sadd.s32 %s36, 1
      %s38 = scalar_select %p35, %s36, %s37
      %p41 = pneg %p35
      %p42 = scmp.eq.s32.totalorder %s14, 1
      %p43 = por %p41, %p42
      %p44 = scmp.ne.s32.totalorder %s36, %s39
      %p45 = scmp.eq.s32.totalorder %s14, 0
      %p46 = por %p44, %p45
      %p47 = scmp.ne.s32.totalorder %s36, %s39
      %p48 = scmp.eq.s32.totalorder %s19, 1
      %p49 = por %p47, %p48
      %p50 = scmp.ne.s32.totalorder %s39, %s40
      %p51 = scmp.eq.s32.totalorder %s19, 0
      %p52 = por %p50, %p51
      %p53 = scmp.ne.s32.totalorder %s39, %s40
      %p54 = scmp.eq.s32.totalorder %s20, 1
      %p55 = por %p53, %p54
      %p57 = scmp.ne.s32.totalorder %s40, %s56
      %p58 = scmp.eq.s32.totalorder %s20, 0
      %p59 = por %p57, %p58
      %s61 = sadd.s32 %s60, 1
      %p64 = scmp.eq.s32.totalorder %s14, 1
      %p65 = scmp.ne.s32.totalorder %s60, %s62
      %p66 = scmp.eq.s32.totalorder %s14, 0
      %p67 = por %p65, %p66
      %p68 = scmp.ne.s32.totalorder %s60, %s62
      %p69 = scmp.eq.s32.totalorder %s19, 1
      %p70 = por %p68, %p69
      %p71 = scmp.ne.s32.totalorder %s62, %s63
      %p72 = scmp.eq.s32.totalorder %s19, 0
      %p73 = por %p71, %p72
      %p74 = scmp.ne.s32.totalorder %s62, %s63
      %p75 = scmp.eq.s32.totalorder %s20, 1
      %p76 = por %p74, %p75
      %p78 = scmp.ne.s32.totalorder %s63, %s77
      %p79 = scmp.eq.s32.totalorder %s20, 0
      %p80 = por %p78, %p79
      %s81 = ssub.s32 %s22, 1
      %p82 = scmp.gt.s32.totalorder %s81, 0
      %s83 = scalar_select %p82, %s81, 0
      %s84 = ssub.s32 %s29, 1
      %p85 = scmp.gt.s32.totalorder %s84, 0
      %s86 = scalar_select %p85, %s84, 0
      %s87 = ssub.s32 %s83, %s86
      %p88 = scmp.eq.s32.totalorder %s87, 0
      %s90 = sadd.s32 %s89, 1
      %s91 = scalar_select %p88, %s89, %s90
      %p94 = pneg %p88
      %p95 = scmp.eq.s32.totalorder %s14, 1
      %p96 = por %p94, %p95
      %p97 = scmp.ne.s32.totalorder %s89, %s92
      %p98 = scmp.eq.s32.totalorder %s14, 0
      %p99 = por %p97, %p98
      %p100 = scmp.ne.s32.totalorder %s89, %s92
      %p101 = scmp.eq.s32.totalorder %s19, 1
      %p102 = por %p100, %p101
      %p103 = scmp.ne.s32.totalorder %s92, %s93
      %p104 = scmp.eq.s32.totalorder %s19, 0
      %p105 = por %p103, %p104
      %p106 = scmp.ne.s32.totalorder %s92, %s93
      %p107 = scmp.eq.s32.totalorder %s20, 1
      %p108 = por %p106, %p107
      %p110 = scmp.ne.s32.totalorder %s93, %s109
      %p111 = scmp.eq.s32.totalorder %s20, 0
      %p112 = por %p110, %p111
      %s113 = ssub.s32 %s22, %s29
      %p114 = scmp.eq.s32.totalorder %s113, 0
      %s116 = sadd.s32 %s115, 1
      %s117 = scalar_select %p114, %s115, %s116
      %p120 = pneg %p114
      %p121 = scmp.eq.s32.totalorder %s14, 1
      %p122 = por %p120, %p121
      %p123 = scmp.ne.s32.totalorder %s115, %s118
      %p124 = scmp.eq.s32.totalorder %s14, 0
      %p125 = por %p123, %p124
      %p126 = scmp.ne.s32.totalorder %s115, %s118
      %p127 = scmp.eq.s32.totalorder %s19, 1
      %p128 = por %p126, %p127
      %p129 = scmp.ne.s32.totalorder %s118, %s119
      %p130 = scmp.eq.s32.totalorder %s19, 0
      %p131 = por %p129, %p130
      %p132 = scmp.ne.s32.totalorder %s118, %s119
      %p133 = scmp.eq.s32.totalorder %s20, 1
      %p134 = por %p132, %p133
      %p136 = scmp.ne.s32.totalorder %s119, %s135
      %p137 = scmp.eq.s32.totalorder %s20, 0
      %p138 = por %p136, %p137
      %s139 = ssub.s32 %s22, %s29
      %p140 = scmp.eq.s32.totalorder %s139, 0
      %s142 = sadd.s32 %s141, 1
      %s143 = scalar_select %p140, %s141, %s142
      %p146 = pneg %p140
      %p147 = scmp.eq.s32.totalorder %s14, 1
      %p148 = por %p146, %p147
      %p149 = scmp.ne.s32.totalorder %s141, %s144
      %p150 = scmp.eq.s32.totalorder %s14, 0
      %p151 = por %p149, %p150
      %p152 = scmp.ne.s32.totalorder %s141, %s144
      %p153 = scmp.eq.s32.totalorder %s19, 1
      %p154 = por %p152, %p153
      %p155 = scmp.ne.s32.totalorder %s144, %s145
      %p156 = scmp.eq.s32.totalorder %s19, 0
      %p157 = por %p155, %p156
      %p158 = scmp.ne.s32.totalorder %s144, %s145
      %p159 = scmp.eq.s32.totalorder %s20, 1
      %p160 = por %p158, %p159
      %p162 = scmp.ne.s32.totalorder %s145, %s161
      %p163 = scmp.eq.s32.totalorder %s20, 0
      %p164 = por %p162, %p163
      %s165 = ssub.s32 %s21, %s33
      %p166 = scmp.eq.s32.totalorder %s165, 0
      %s168 = sadd.s32 %s167, 1
      %s169 = scalar_select %p166, %s167, %s168
      %p172 = pneg %p166
      %p173 = scmp.eq.s32.totalorder %s14, 1
      %p174 = por %p172, %p173
      %p175 = scmp.ne.s32.totalorder %s167, %s170
      %p176 = scmp.eq.s32.totalorder %s14, 0
      %p177 = por %p175, %p176
      %p178 = scmp.ne.s32.totalorder %s167, %s170
      %p179 = scmp.eq.s32.totalorder %s19, 1
      %p180 = por %p178, %p179
      %p181 = scmp.ne.s32.totalorder %s170, %s171
      %p182 = scmp.eq.s32.totalorder %s19, 0
      %p183 = por %p181, %p182
      %p184 = scmp.ne.s32.totalorder %s170, %s171
      %p185 = scmp.eq.s32.totalorder %s20, 1
      %p186 = por %p184, %p185
      %p188 = scmp.ne.s32.totalorder %s171, %s187
      %p189 = scmp.eq.s32.totalorder %s20, 0
      %p190 = por %p188, %p189
      %p191 = scmp.le.s32.totalorder 1, %s14
      %p192 = scmp.lt.s32.totalorder %s14, 3
      %p193 = pnand %p191, %p192
      %p194 = pneg %p193
      // Predicated region
      $region9: #{tpu_custom_call.1} parent=5 // pred_check
        _
      $region10: #{tpu_custom_call.1} parent=5 // pred_check_branch
        %196 = sbr.rel (%p193) target = $region12
      $region11: #{tpu_custom_call.1} parent=5 // pred_region
        %s197 = ssub.s32 %s14, 1
        // Predicated region
        $region13: #{tpu_custom_call.1} parent=11 // pred_check
          %p198 = pneg %p52
        $region14: #{tpu_custom_call.1} parent=11 // pred_check_branch
          %200 = sbr.rel (%p198) target = $region16
        $region15: #{tpu_custom_call.1} parent=11 // pred_region
          %s202 = ssub.s32 1024, 1024
          %203 = vsyncadd [#allocation5], %s202
          %s204 = smul.addr %s23, 128
          %s205 = scalar_lea.hbm %s0, %s204
          %s206 = sshll.u32 [#allocation4], 4
          %s207 = int_to_ptr.vmem [resolvable:$true] %s206
          %212 = dma.hbm_to_vmem [thread:$0]  %s205, 1024, %s207, [#allocation5], 128, 128, 8
        $region16: #{tpu_custom_call.1} parent=11 // pred_fallthru
          _
        // Predicated region
        $region17: #{tpu_custom_call.1} parent=11 // pred_check
          %p213 = pneg %p73
        $region18: #{tpu_custom_call.1} parent=11 // pred_check_branch
          %215 = sbr.rel (%p213) target = $region20
        $region19: #{tpu_custom_call.1} parent=11 // pred_region
          %s217 = ssub.s32 8192, 8192
          %218 = vsyncadd [#allocation8], %s217
          %s219 = sshll.u32 [#allocation7], 4
          %s220 = int_to_ptr.vmem [resolvable:$true] %s219
          %225 = dma.hbm_to_vmem [thread:$0]  %s1, 8192, %s220, [#allocation8], 512, 512, 32
        $region20: #{tpu_custom_call.1} parent=11 // pred_fallthru
          _
      $region12: #{tpu_custom_call.1} parent=5 // pred_fallthru
        _
      %p226 = scmp.lt.s32.totalorder %s14, 2
      // Predicated region
      $region21: #{tpu_custom_call.1} parent=5 // pred_check
        %p227 = pneg %p226
      $region22: #{tpu_custom_call.1} parent=5 // pred_check_branch
        %229 = sbr.rel (%p227) target = $region24
      $region23: #{tpu_custom_call.1} parent=5 // pred_region
        // Predicated region
        $region25: #{tpu_custom_call.1} parent=23 // pred_check
          %p230 = pneg %p99
        $region26: #{tpu_custom_call.1} parent=23 // pred_check_branch
          %232 = sbr.rel (%p230) target = $region28
        $region27: #{tpu_custom_call.1} parent=23 // pred_region
          %s233 = sand.u32 %s14, 1
          %s234 = scalar_lea.sflag [#allocation5], %s233
          %s235 = sand.u32 %s89, 1
          %s236 = smul.addr %s235, 512
          %s237 = scalar_lea.vmem [#allocation9], %s236
          %s238 = ssub.s32 %s22, 1
          %p239 = scmp.gt.s32.totalorder %s238, 0
          %s240 = scalar_select %p239, %s238, 0
          %s242 = ssub.s32 8192, 8192
          %243 = vsyncadd %s234, %s242
          %s244 = smul.addr %s240, 64
          %s245 = smul.addr %s244, 128
          %s246 = scalar_lea.hbm %s2, %s245
          %s247 = sshll.u32 %s237, 4
          %s248 = int_to_ptr.vmem [resolvable:$true] %s247
          %253 = dma.hbm_to_vmem [thread:$0]  %s246, 8192, %s248, %s234, 512, 512, 32
        $region28: #{tpu_custom_call.1} parent=23 // pred_fallthru
          _
        // Predicated region
        $region29: #{tpu_custom_call.1} parent=23 // pred_check
          %p254 = pneg %p125
        $region30: #{tpu_custom_call.1} parent=23 // pred_check_branch
          %256 = sbr.rel (%p254) target = $region32
        $region31: #{tpu_custom_call.1} parent=23 // pred_region
          %s257 = sand.u32 %s14, 1
          %s258 = scalar_lea.sflag [#allocation5], %s257
          %s259 = sand.u32 %s115, 1
          %s260 = smul.addr %s259, 512
          %s261 = scalar_lea.vmem [#allocation10], %s260
          %s263 = ssub.s32 8192, 8192
          %264 = vsyncadd %s258, %s263
          %s265 = smul.addr %s22, 64
          %s266 = smul.addr %s265, 128
          %s267 = scalar_lea.hbm %s3, %s266
          %s268 = sshll.u32 %s261, 4
          %s269 = int_to_ptr.vmem [resolvable:$true] %s268
          %274 = dma.hbm_to_vmem [thread:$0]  %s267, 8192, %s269, %s258, 512, 512, 32
        $region32: #{tpu_custom_call.1} parent=23 // pred_fallthru
          _
        // Predicated region
        $region33: #{tpu_custom_call.1} parent=23 // pred_check
          %p275 = pneg %p151
        $region34: #{tpu_custom_call.1} parent=23 // pred_check_branch
          %277 = sbr.rel (%p275) target = $region36
        $region35: #{tpu_custom_call.1} parent=23 // pred_region
          %p278 = scmp.lt.s32.totalorder %s22, 1
          %s279 = scalar_select %p278, %s22, 1
          %s280 = smul.addr %s279, 4
          %s281 = scalar_lea.vmem %s4, %s280
        $region36: #{tpu_custom_call.1} parent=23 // pred_fallthru
          _
      $region24: #{tpu_custom_call.1} parent=5 // pred_fallthru
        _
      %p282 = scmp.le.s32.totalorder 1, %s14
      %p283 = scmp.lt.s32.totalorder %s14, 3
      %p284 = pnand %p282, %p283
      %p285 = pneg %p284
      // Predicated region
      $region37: #{tpu_custom_call.1} parent=5 // pred_check
        _
      $region38: #{tpu_custom_call.1} parent=5 // pred_check_branch
        %287 = sbr.rel (%p284) target = $region40
      $region39: #{tpu_custom_call.1} parent=5 // pred_region
        %s288 = ssub.s32 %s14, 1
        // Predicated region
        $region41: #{tpu_custom_call.1} parent=39 // pred_check
          %p289 = pneg %p52
        $region42: #{tpu_custom_call.1} parent=39 // pred_check_branch
          %291 = sbr.rel (%p289) target = $region44
        $region43: #{tpu_custom_call.1} parent=39 // pred_region
          %292 = dma.done [#allocation5], 1024
        $region44: #{tpu_custom_call.1} parent=39 // pred_fallthru
          _
        // Predicated region
        $region45: #{tpu_custom_call.1} parent=39 // pred_check
          %p293 = pneg %p73
        $region46: #{tpu_custom_call.1} parent=39 // pred_check_branch
          %295 = sbr.rel (%p293) target = $region48
        $region47: #{tpu_custom_call.1} parent=39 // pred_region
          %296 = dma.done [#allocation8], 8192
        $region48: #{tpu_custom_call.1} parent=39 // pred_fallthru
          _
        %s297 = sand.u32 %s19, 1
        %s298 = scalar_lea.sflag [#allocation5], %s297
        %s299 = sand.u32 %s92, 1
        %s300 = smul.addr %s299, 512
        %s301 = scalar_lea.vmem [#allocation9], %s300
        // Predicated region
        $region49: #{tpu_custom_call.1} parent=39 // pred_check
          %p302 = pneg %p105
        $region50: #{tpu_custom_call.1} parent=39 // pred_check_branch
          %304 = sbr.rel (%p302) target = $region52
        $region51: #{tpu_custom_call.1} parent=39 // pred_region
          %305 = dma.done %s298, 8192
        $region52: #{tpu_custom_call.1} parent=39 // pred_fallthru
          _
        %s306 = sand.u32 %s19, 1
        %s307 = scalar_lea.sflag [#allocation5], %s306
        %s308 = sand.u32 %s118, 1
        %s309 = smul.addr %s308, 512
        %s310 = scalar_lea.vmem [#allocation10], %s309
        // Predicated region
        $region53: #{tpu_custom_call.1} parent=39 // pred_check
          %p311 = pneg %p131
        $region54: #{tpu_custom_call.1} parent=39 // pred_check_branch
          %313 = sbr.rel (%p311) target = $region56
        $region55: #{tpu_custom_call.1} parent=39 // pred_region
          %314 = dma.done %s307, 8192
        $region56: #{tpu_custom_call.1} parent=39 // pred_fallthru
          _
        %p315 = pneg %p52
        %p316 = pneg %p49
        %p317 = pneg %p73
        %p318 = pneg %p70
        %s319 = sand.u32 %s19, 1
        %s320 = scalar_lea.sflag [#allocation5], %s319
        %s321 = sand.u32 %s92, 1
        %s322 = smul.addr %s321, 512
        %s323 = scalar_lea.vmem [#allocation9], %s322
        %p324 = pneg %p105
        %p325 = pneg %p102
        %s326 = sand.u32 %s19, 1
        %s327 = scalar_lea.sflag [#allocation5], %s326
        %s328 = sand.u32 %s118, 1
        %s329 = smul.addr %s328, 512
        %s330 = scalar_lea.vmem [#allocation10], %s329
        %p331 = pneg %p131
        %p332 = pneg %p128
        %p333 = scmp.lt.s32.totalorder %s24, 1
        %s334 = scalar_select %p333, %s24, 1
        %s335 = smul.addr %s334, 4
        %s336 = scalar_lea.vmem %s4, %s335
        %p337 = pneg %p157
        %p338 = pneg %p154
        %p339 = pneg %p183
        %p340 = pneg %p180
        %s341 = ssub.s32 %s24, 1
        %p342 = scmp.gt.s32.totalorder %s341, 0
        %s343 = scalar_select %p342, %s341, 0
        %p344 = scmp.lt.s32.totalorder %s24, 1
        %s345 = scalar_select %p344, %s24, 1
        %s346 = smul.addr %s345, 4
        %s347 = scalar_lea.vmem %s4, %s346
        %p348 = scmp.eq.s32.totalorder %s24, 1
        %p349 = scmp.eq.s32.totalorder %s24, 0
        // Predicated region
        $region57: #{tpu_custom_call.1} parent=39 // pred_check
          %p350 = pneg %p349
        $region58: #{tpu_custom_call.1} parent=39 // pred_check_branch
          %352 = sbr.rel (%p350) target = $region60
        $region59: #{tpu_custom_call.1} parent=39 // pred_region
          %s353 = smul.u32 0, 8
          %s354 = scalar_lea.vmem [#allocation4], %s353
          %v355 = vld [vmem:[%s354] sm:$0xff]
          %v356 = vld [vmem:[%s354 + $0x8] sm:$0xff]
          %v357 = vld [vmem:[%s354 + $0x10] sm:$0xff]
          %v358 = vld [vmem:[%s354 + $0x18] sm:$0xff]
          %v359 = vld [vmem:[%s354 + $0x20] sm:$0xff]
          %v360 = vld [vmem:[%s354 + $0x28] sm:$0xff]
          %v361 = vld [vmem:[%s354 + $0x30] sm:$0xff]
          %v362 = vld [vmem:[%s354 + $0x38] sm:$0xff]
          %v363 = vld [vmem:[#allocation7] sm:$0xff]
          %v364 = vld [vmem:[#allocation7 + $0x8] sm:$0xff]
          %v365 = vld [vmem:[#allocation7 + $0x10] sm:$0xff]
          %v366 = vld [vmem:[#allocation7 + $0x18] sm:$0xff]
          %v367 = vld [vmem:[#allocation7 + $0x20] sm:$0xff]
          %v368 = vld [vmem:[#allocation7 + $0x28] sm:$0xff]
          %v369 = vld [vmem:[#allocation7 + $0x30] sm:$0xff]
          %v370 = vld [vmem:[#allocation7 + $0x38] sm:$0xff]
          %v371 = vld [vmem:[#allocation7 + $0x40] sm:$0xff]
          %v372 = vld [vmem:[#allocation7 + $0x48] sm:$0xff]
          %v373 = vld [vmem:[#allocation7 + $0x50] sm:$0xff]
          %v374 = vld [vmem:[#allocation7 + $0x58] sm:$0xff]
          %v375 = vld [vmem:[#allocation7 + $0x60] sm:$0xff]
          %v376 = vld [vmem:[#allocation7 + $0x68] sm:$0xff]
          %v377 = vld [vmem:[#allocation7 + $0x70] sm:$0xff]
          %v378 = vld [vmem:[#allocation7 + $0x78] sm:$0xff]
          %v379 = vld [vmem:[#allocation7 + $0x80] sm:$0xff]
          %v380 = vld [vmem:[#allocation7 + $0x88] sm:$0xff]
          %v381 = vld [vmem:[#allocation7 + $0x90] sm:$0xff]
          %v382 = vld [vmem:[#allocation7 + $0x98] sm:$0xff]
          %v383 = vld [vmem:[#allocation7 + $0xa0] sm:$0xff]
          %v384 = vld [vmem:[#allocation7 + $0xa8] sm:$0xff]
          %v385 = vld [vmem:[#allocation7 + $0xb0] sm:$0xff]
          %v386 = vld [vmem:[#allocation7 + $0xb8] sm:$0xff]
          %v387 = vld [vmem:[#allocation7 + $0xc0] sm:$0xff]
          %v388 = vld [vmem:[#allocation7 + $0xc8] sm:$0xff]
          %v389 = vld [vmem:[#allocation7 + $0xd0] sm:$0xff]
          %v390 = vld [vmem:[#allocation7 + $0xd8] sm:$0xff]
          %v391 = vld [vmem:[#allocation7 + $0xe0] sm:$0xff]
          %v392 = vld [vmem:[#allocation7 + $0xe8] sm:$0xff]
          %v393 = vld [vmem:[#allocation7 + $0xf0] sm:$0xff]
          %v394 = vld [vmem:[#allocation7 + $0xf8] sm:$0xff]
          %v395 = vld [vmem:[#allocation7 + $0x100] sm:$0xff]
          %v396 = vld [vmem:[#allocation7 + $0x108] sm:$0xff]
          %v397 = vld [vmem:[#allocation7 + $0x110] sm:$0xff]
          %v398 = vld [vmem:[#allocation7 + $0x118] sm:$0xff]
          %v399 = vld [vmem:[#allocation7 + $0x120] sm:$0xff]
          %v400 = vld [vmem:[#allocation7 + $0x128] sm:$0xff]
          %v401 = vld [vmem:[#allocation7 + $0x130] sm:$0xff]
          %v402 = vld [vmem:[#allocation7 + $0x138] sm:$0xff]
          %v403 = vld [vmem:[#allocation7 + $0x140] sm:$0xff]
          %v404 = vld [vmem:[#allocation7 + $0x148] sm:$0xff]
          %v405 = vld [vmem:[#allocation7 + $0x150] sm:$0xff]
          %v406 = vld [vmem:[#allocation7 + $0x158] sm:$0xff]
          %v407 = vld [vmem:[#allocation7 + $0x160] sm:$0xff]
          %v408 = vld [vmem:[#allocation7 + $0x168] sm:$0xff]
          %v409 = vld [vmem:[#allocation7 + $0x170] sm:$0xff]
          %v410 = vld [vmem:[#allocation7 + $0x178] sm:$0xff]
          %v411 = vld [vmem:[#allocation7 + $0x180] sm:$0xff]
          %v412 = vld [vmem:[#allocation7 + $0x188] sm:$0xff]
          %v413 = vld [vmem:[#allocation7 + $0x190] sm:$0xff]
          %v414 = vld [vmem:[#allocation7 + $0x198] sm:$0xff]
          %v415 = vld [vmem:[#allocation7 + $0x1a0] sm:$0xff]
          %v416 = vld [vmem:[#allocation7 + $0x1a8] sm:$0xff]
          %v417 = vld [vmem:[#allocation7 + $0x1b0] sm:$0xff]
          %v418 = vld [vmem:[#allocation7 + $0x1b8] sm:$0xff]
          %v419 = vld [vmem:[#allocation7 + $0x1c0] sm:$0xff]
          %v420 = vld [vmem:[#allocation7 + $0x1c8] sm:$0xff]
          %v421 = vld [vmem:[#allocation7 + $0x1d0] sm:$0xff]
          %v422 = vld [vmem:[#allocation7 + $0x1d8] sm:$0xff]
          %v423 = vld [vmem:[#allocation7 + $0x1e0] sm:$0xff]
          %v424 = vld [vmem:[#allocation7 + $0x1e8] sm:$0xff]
          %v425 = vld [vmem:[#allocation7 + $0x1f0] sm:$0xff]
          %v426 = vld [vmem:[#allocation7 + $0x1f8] sm:$0xff]
          %v427 = vld [vmem:[%s347] sm:$0xf]
          %v429 = vlaneseq
          %v430 = vshrl.u32 %v429, 7
          %v431 = vsub.s32 0, %v430
          %v432 = vrot.slane %v427, %v431
          %v433 = vlaneseq
          %v434 = vshrl.u32 %v433, 7
          %v435 = vsub.s32 1, %v434
          %v436 = vrot.slane %v427, %v435
          %v437 = vlaneseq
          %v438 = vshrl.u32 %v437, 7
          %v439 = vsub.s32 2, %v438
          %v440 = vrot.slane %v427, %v439
          %v441 = vlaneseq
          %v442 = vshrl.u32 %v441, 7
          %v443 = vsub.s32 3, %v442
          %v444 = vrot.slane %v427, %v443
          %449 = vmatprep.subr.mxu0 %v364
          %450 = vmatpush1.msra.mxu0 %v363
          %451 = vmatprep.subr.mxu0 %v368
          %452 = vmatpush1.msra.mxu0 %v367
          %453 = vmatprep.subr.mxu0 %v372
          %454 = vmatpush1.msra.mxu0 %v371
          %455 = vmatprep.subr.mxu0 %v376
          %456 = vmatpush1.msra.mxu0 %v375
          %457 = vmatprep.subr.mxu0 %v380
          %458 = vmatpush1.msra.mxu0 %v379
          %459 = vmatprep.subr.mxu0 %v384
          %460 = vmatpush1.msra.mxu0 %v383
          %461 = vmatprep.subr.mxu0 %v388
          %462 = vmatpush1.msra.mxu0 %v387
          %463 = vmatprep.subr.mxu0 %v392
          %464 = vmatpush1.msra.mxu0 %v391
          %465 = vmatprep.subr.mxu0 %v396
          %466 = vmatpush1.msra.mxu0 %v395
          %467 = vmatprep.subr.mxu0 %v400
          %468 = vmatpush1.msra.mxu0 %v399
          %469 = vmatprep.subr.mxu0 %v404
          %470 = vmatpush1.msra.mxu0 %v403
          %471 = vmatprep.subr.mxu0 %v408
          %472 = vmatpush1.msra.mxu0 %v407
          %473 = vmatprep.subr.mxu0 %v412
          %474 = vmatpush1.msra.mxu0 %v411
          %475 = vmatprep.subr.mxu0 %v416
          %476 = vmatpush1.msra.mxu0 %v415
          %477 = vmatprep.subr.mxu0 %v420
          %478 = vmatpush1.msra.mxu0 %v419
          %479 = vmatprep.subr.mxu0 %v424
          %480 = vmatpush1.msra.mxu0 %v423
          %481 = vmatprep.subr.mxu0 0.0
          %482 = vmatpush1.msra.mxu0 0.0
          %483 = vmatprep.subr.mxu0 0.0
          %484 = vmatpush1.msra.mxu0 0.0
          %485 = vmatprep.subr.mxu0 0.0
          %486 = vmatpush1.msra.mxu0 0.0
          %487 = vmatprep.subr.mxu0 0.0
          %488 = vmatpush1.msra.mxu0 0.0
          %489 = vmatprep.subr.mxu0 0.0
          %490 = vmatpush1.msra.mxu0 0.0
          %491 = vmatprep.subr.mxu0 0.0
          %492 = vmatpush1.msra.mxu0 0.0
          %493 = vmatprep.subr.mxu0 0.0
          %494 = vmatpush1.msra.mxu0 0.0
          %495 = vmatprep.subr.mxu0 0.0
          %496 = vmatpush1.msra.mxu0 0.0
          %497 = vmatprep.subr.mxu0 0.0
          %498 = vmatpush1.msra.mxu0 0.0
          %499 = vmatprep.subr.mxu0 0.0
          %500 = vmatpush1.msra.mxu0 0.0
          %501 = vmatprep.subr.mxu0 0.0
          %502 = vmatpush1.msra.mxu0 0.0
          %503 = vmatprep.subr.mxu0 0.0
          %504 = vmatpush1.msra.mxu0 0.0
          %505 = vmatprep.subr.mxu0 0.0
          %506 = vmatpush1.msra.mxu0 0.0
          %507 = vmatprep.subr.mxu0 0.0
          %508 = vmatpush1.msra.mxu0 0.0
          %509 = vmatprep.subr.mxu0 0.0
          %510 = vmatpush1.msra.mxu0 0.0
          %511 = vmatprep.subr.mxu0 0.0
          %512 = vmatpush1.msra.mxu0 0.0
          %513 = vmatprep.mubr.f32.mxu0 0.0
          %514 = vmatmul.mubr.f32.gmra.mrb[0].mxu0 %v355
          %v515 = vpop.f32.mrb[0].mxu0
          %v516 = vadd.f32 %v432, %v515
          %v517 = vpop.f32.mrb[0].mxu0
          %v518 = vadd.f32 %v436, %v517
          %519 = vmatprep.mubr.f32.mxu0 0.0
          %520 = vmatmul.mubr.f32.gmra.mrb[0].mxu0 %v356
          %v521 = vpop.f32.mrb[0].mxu0
          %v522 = vadd.f32 %v432, %v521
          %v523 = vpop.f32.mrb[0].mxu0
          %v524 = vadd.f32 %v436, %v523
          %525 = vmatprep.mubr.f32.mxu0 0.0
          %526 = vmatmul.mubr.f32.gmra.mrb[0].mxu0 %v357
          %v527 = vpop.f32.mrb[0].mxu0
          %v528 = vadd.f32 %v432, %v527
          %v529 = vpop.f32.mrb[0].mxu0
          %v530 = vadd.f32 %v436, %v529
          %531 = vmatprep.mubr.f32.mxu0 0.0
          %532 = vmatmul.mubr.f32.gmra.mrb[0].mxu0 %v358
          %v533 = vpop.f32.mrb[0].mxu0
          %v534 = vadd.f32 %v432, %v533
          %v535 = vpop.f32.mrb[0].mxu0
          %v536 = vadd.f32 %v436, %v535
          %537 = vmatprep.mubr.f32.mxu0 0.0
          %538 = vmatmul.mubr.f32.gmra.mrb[0].mxu0 %v359
          %v539 = vpop.f32.mrb[0].mxu0
          %v540 = vadd.f32 %v432, %v539
          %v541 = vpop.f32.mrb[0].mxu0
          %v542 = vadd.f32 %v436, %v541
          %543 = vmatprep.mubr.f32.mxu0 0.0
          %544 = vmatmul.mubr.f32.gmra.mrb[0].mxu0 %v360
          %v545 = vpop.f32.mrb[0].mxu0
          %v546 = vadd.f32 %v432, %v545
          %v547 = vpop.f32.mrb[0].mxu0
          %v548 = vadd.f32 %v436, %v547
          %549 = vmatprep.mubr.f32.mxu0 0.0
          %550 = vmatmul.mubr.f32.gmra.mrb[0].mxu0 %v361
          %v551 = vpop.f32.mrb[0].mxu0
          %v552 = vadd.f32 %v432, %v551
          %v553 = vpop.f32.mrb[0].mxu0
          %v554 = vadd.f32 %v436, %v553
          %555 = vmatprep.mubr.f32.mxu0 0.0
          %556 = vmatmul.mubr.f32.gmra.mrb[0].mxu0 %v362
          %v557 = vpop.f32.mrb[0].mxu0
          %v558 = vadd.f32 %v432, %v557
          %v559 = vpop.f32.mrb[0].mxu0
          %v560 = vadd.f32 %v436, %v559
          %561 = vdwg.mxu0
          %562 = vmatprep.subr.mxu0 %v366
          %563 = vmatpush1.msra.mxu0 %v365
          %564 = vmatprep.subr.mxu0 %v370
          %565 = vmatpush1.msra.mxu0 %v369
          %566 = vmatprep.subr.mxu0 %v374
          %567 = vmatpush1.msra.mxu0 %v373
          %568 = vmatprep.subr.mxu0 %v378
          %569 = vmatpush1.msra.mxu0 %v377
          %570 = vmatprep.subr.mxu0 %v382
          %571 = vmatpush1.msra.mxu0 %v381
          %572 = vmatprep.subr.mxu0 %v386
          %573 = vmatpush1.msra.mxu0 %v385
          %574 = vmatprep.subr.mxu0 %v390
          %575 = vmatpush1.msra.mxu0 %v389
          %576 = vmatprep.subr.mxu0 %v394
          %577 = vmatpush1.msra.mxu0 %v393
          %578 = vmatprep.subr.mxu0 %v398
          %579 = vmatpush1.msra.mxu0 %v397
          %580 = vmatprep.subr.mxu0 %v402
          %581 = vmatpush1.msra.mxu0 %v401
          %582 = vmatprep.subr.mxu0 %v406
          %583 = vmatpush1.msra.mxu0 %v405
          %584 = vmatprep.subr.mxu0 %v410
          %585 = vmatpush1.msra.mxu0 %v409
          %586 = vmatprep.subr.mxu0 %v414
          %587 = vmatpush1.msra.mxu0 %v413
          %588 = vmatprep.subr.mxu0 %v418
          %589 = vmatpush1.msra.mxu0 %v417
          %590 = vmatprep.subr.mxu0 %v422
          %591 = vmatpush1.msra.mxu0 %v421
          %592 = vmatprep.subr.mxu0 %v426
          %593 = vmatpush1.msra.mxu0 %v425
          %594 = vmatprep.subr.mxu0 0.0
          %595 = vmatpush1.msra.mxu0 0.0
          %596 = vmatprep.subr.mxu0 0.0
          %597 = vmatpush1.msra.mxu0 0.0
          %598 = vmatprep.subr.mxu0 0.0
          %599 = vmatpush1.msra.mxu0 0.0
          %600 = vmatprep.subr.mxu0 0.0
          %601 = vmatpush1.msra.mxu0 0.0
          %602 = vmatprep.subr.mxu0 0.0
          %603 = vmatpush1.msra.mxu0 0.0
          %604 = vmatprep.subr.mxu0 0.0
          %605 = vmatpush1.msra.mxu0 0.0
          %606 = vmatprep.subr.mxu0 0.0
          %607 = vmatpush1.msra.mxu0 0.0
          %608 = vmatprep.subr.mxu0 0.0
          %609 = vmatpush1.msra.mxu0 0.0
          %610 = vmatprep.subr.mxu0 0.0
          %611 = vmatpush1.msra.mxu0 0.0
          %612 = vmatprep.subr.mxu0 0.0
          %613 = vmatpush1.msra.mxu0 0.0
          %614 = vmatprep.subr.mxu0 0.0
          %615 = vmatpush1.msra.mxu0 0.0
          %616 = vmatprep.subr.mxu0 0.0
          %617 = vmatpush1.msra.mxu0 0.0
          %618 = vmatprep.subr.mxu0 0.0
          %619 = vmatpush1.msra.mxu0 0.0
          %620 = vmatprep.subr.mxu0 0.0
          %621 = vmatpush1.msra.mxu0 0.0
          %622 = vmatprep.subr.mxu0 0.0
          %623 = vmatpush1.msra.mxu0 0.0
          %624 = vmatprep.subr.mxu0 0.0
          %625 = vmatpush1.msra.mxu0 0.0
          %626 = vmatprep.mubr.f32.mxu0 0.0
          %627 = vmatmul.mubr.f32.gmra.mrb[0].mxu0 %v355
          %v628 = vpop.f32.mrb[0].mxu0
          %v629 = vadd.f32 %v440, %v628
          %v630 = vpop.f32.mrb[0].mxu0
          %v631 = vadd.f32 %v444, %v630
          %632 = vmatprep.mubr.f32.mxu0 0.0
          %633 = vmatmul.mubr.f32.gmra.mrb[0].mxu0 %v356
          %v634 = vpop.f32.mrb[0].mxu0
          %v635 = vadd.f32 %v440, %v634
          %v636 = vpop.f32.mrb[0].mxu0
          %v637 = vadd.f32 %v444, %v636
          %638 = vmatprep.mubr.f32.mxu0 0.0
          %639 = vmatmul.mubr.f32.gmra.mrb[0].mxu0 %v357
          %v640 = vpop.f32.mrb[0].mxu0
          %v641 = vadd.f32 %v440, %v640
          %v642 = vpop.f32.mrb[0].mxu0
          %v643 = vadd.f32 %v444, %v642
          %644 = vmatprep.mubr.f32.mxu0 0.0
          %645 = vmatmul.mubr.f32.gmra.mrb[0].mxu0 %v358
          %v646 = vpop.f32.mrb[0].mxu0
          %v647 = vadd.f32 %v440, %v646
          %v648 = vpop.f32.mrb[0].mxu0
          %v649 = vadd.f32 %v444, %v648
          %650 = vmatprep.mubr.f32.mxu0 0.0
          %651 = vmatmul.mubr.f32.gmra.mrb[0].mxu0 %v359
          %v652 = vpop.f32.mrb[0].mxu0
          %v653 = vadd.f32 %v440, %v652
          %v654 = vpop.f32.mrb[0].mxu0
          %v655 = vadd.f32 %v444, %v654
          %656 = vmatprep.mubr.f32.mxu0 0.0
          %657 = vmatmul.mubr.f32.gmra.mrb[0].mxu0 %v360
          %v658 = vpop.f32.mrb[0].mxu0
          %v659 = vadd.f32 %v440, %v658
          %v660 = vpop.f32.mrb[0].mxu0
          %v661 = vadd.f32 %v444, %v660
          %662 = vmatprep.mubr.f32.mxu0 0.0
          %663 = vmatmul.mubr.f32.gmra.mrb[0].mxu0 %v361
          %v664 = vpop.f32.mrb[0].mxu0
          %v665 = vadd.f32 %v440, %v664
          %v666 = vpop.f32.mrb[0].mxu0
          %v667 = vadd.f32 %v444, %v666
          %668 = vmatprep.mubr.f32.mxu0 0.0
          %669 = vmatmul.mubr.f32.gmra.mrb[0].mxu0 %v362
          %v670 = vpop.f32.mrb[0].mxu0
          %v671 = vadd.f32 %v440, %v670
          %v672 = vpop.f32.mrb[0].mxu0
          %v673 = vadd.f32 %v444, %v672
          %674 = vdwg.mxu0
          %675 = vst [vmem:[#allocation3] sm:$0xff] %v516
          %676 = vst [vmem:[#allocation3 + $0x8] sm:$0xff] %v518
          %677 = vst [vmem:[#allocation3 + $0x10] sm:$0xff] %v629
          %678 = vst [vmem:[#allocation3 + $0x18] sm:$0xff] %v631
          %679 = vst [vmem:[#allocation3 + $0x20] sm:$0xff] %v522
          %680 = vst [vmem:[#allocation3 + $0x28] sm:$0xff] %v524
          %681 = vst [vmem:[#allocation3 + $0x30] sm:$0xff] %v635
          %682 = vst [vmem:[#allocation3 + $0x38] sm:$0xff] %v637
          %683 = vst [vmem:[#allocation3 + $0x40] sm:$0xff] %v528
          %684 = vst [vmem:[#allocation3 + $0x48] sm:$0xff] %v530
          %685 = vst [vmem:[#allocation3 + $0x50] sm:$0xff] %v641
          %686 = vst [vmem:[#allocation3 + $0x58] sm:$0xff] %v643
          %687 = vst [vmem:[#allocation3 + $0x60] sm:$0xff] %v534
          %688 = vst [vmem:[#allocation3 + $0x68] sm:$0xff] %v536
          %689 = vst [vmem:[#allocation3 + $0x70] sm:$0xff] %v647
          %690 = vst [vmem:[#allocation3 + $0x78] sm:$0xff] %v649
          %691 = vst [vmem:[#allocation3 + $0x80] sm:$0xff] %v540
          %692 = vst [vmem:[#allocation3 + $0x88] sm:$0xff] %v542
          %693 = vst [vmem:[#allocation3 + $0x90] sm:$0xff] %v653
          %694 = vst [vmem:[#allocation3 + $0x98] sm:$0xff] %v655
          %695 = vst [vmem:[#allocation3 + $0xa0] sm:$0xff] %v546
          %696 = vst [vmem:[#allocation3 + $0xa8] sm:$0xff] %v548
          %697 = vst [vmem:[#allocation3 + $0xb0] sm:$0xff] %v659
          %698 = vst [vmem:[#allocation3 + $0xb8] sm:$0xff] %v661
          %699 = vst [vmem:[#allocation3 + $0xc0] sm:$0xff] %v552
          %700 = vst [vmem:[#allocation3 + $0xc8] sm:$0xff] %v554
          %701 = vst [vmem:[#allocation3 + $0xd0] sm:$0xff] %v665
          %702 = vst [vmem:[#allocation3 + $0xd8] sm:$0xff] %v667
          %703 = vst [vmem:[#allocation3 + $0xe0] sm:$0xff] %v558
          %704 = vst [vmem:[#allocation3 + $0xe8] sm:$0xff] %v560
          %705 = vst [vmem:[#allocation3 + $0xf0] sm:$0xff] %v671
          %706 = vst [vmem:[#allocation3 + $0xf8] sm:$0xff] %v673
        $region60: #{tpu_custom_call.1} parent=39 // pred_fallthru
          _
        %p707 = scmp.ne.s32.totalorder %s24, 0
        // Predicated region
        $region61: #{tpu_custom_call.1} parent=39 // pred_check
          %p708 = pneg %p707
        $region62: #{tpu_custom_call.1} parent=39 // pred_check_branch
          %710 = sbr.rel (%p708) target = $region64
        $region63: #{tpu_custom_call.1} parent=39 // pred_region
          %s711 = smul.u32 0, 8
          %s712 = scalar_lea.vmem [#allocation2], %s711
          %v713 = vld [vmem:[%s712] sm:$0xff]
          %v714 = vld [vmem:[%s712 + $0x8] sm:$0xff]
          %v715 = vld [vmem:[%s712 + $0x10] sm:$0xff]
          %v716 = vld [vmem:[%s712 + $0x18] sm:$0xff]
          %v717 = vld [vmem:[%s712 + $0x20] sm:$0xff]
          %v718 = vld [vmem:[%s712 + $0x28] sm:$0xff]
          %v719 = vld [vmem:[%s712 + $0x30] sm:$0xff]
          %v720 = vld [vmem:[%s712 + $0x38] sm:$0xff]
          %v721 = vld [vmem:[%s301] sm:$0xff]
          %v722 = vld [vmem:[%s301 + $0x8] sm:$0xff]
          %v723 = vld [vmem:[%s301 + $0x10] sm:$0xff]
          %v724 = vld [vmem:[%s301 + $0x18] sm:$0xff]
          %v725 = vld [vmem:[%s301 + $0x20] sm:$0xff]
          %v726 = vld [vmem:[%s301 + $0x28] sm:$0xff]
          %v727 = vld [vmem:[%s301 + $0x30] sm:$0xff]
          %v728 = vld [vmem:[%s301 + $0x38] sm:$0xff]
          %v729 = vld [vmem:[%s301 + $0x40] sm:$0xff]
          %v730 = vld [vmem:[%s301 + $0x48] sm:$0xff]
          %v731 = vld [vmem:[%s301 + $0x50] sm:$0xff]
          %v732 = vld [vmem:[%s301 + $0x58] sm:$0xff]
          %v733 = vld [vmem:[%s301 + $0x60] sm:$0xff]
          %v734 = vld [vmem:[%s301 + $0x68] sm:$0xff]
          %v735 = vld [vmem:[%s301 + $0x70] sm:$0xff]
          %v736 = vld [vmem:[%s301 + $0x78] sm:$0xff]
          %v737 = vld [vmem:[%s301 + $0x80] sm:$0xff]
          %v738 = vld [vmem:[%s301 + $0x88] sm:$0xff]
          %v739 = vld [vmem:[%s301 + $0x90] sm:$0xff]
          %v740 = vld [vmem:[%s301 + $0x98] sm:$0xff]
          %v741 = vld [vmem:[%s301 + $0xa0] sm:$0xff]
          %v742 = vld [vmem:[%s301 + $0xa8] sm:$0xff]
          %v743 = vld [vmem:[%s301 + $0xb0] sm:$0xff]
          %v744 = vld [vmem:[%s301 + $0xb8] sm:$0xff]
          %v745 = vld [vmem:[%s301 + $0xc0] sm:$0xff]
          %v746 = vld [vmem:[%s301 + $0xc8] sm:$0xff]
          %v747 = vld [vmem:[%s301 + $0xd0] sm:$0xff]
          %v748 = vld [vmem:[%s301 + $0xd8] sm:$0xff]
          %v749 = vld [vmem:[%s301 + $0xe0] sm:$0xff]
          %v750 = vld [vmem:[%s301 + $0xe8] sm:$0xff]
          %v751 = vld [vmem:[%s301 + $0xf0] sm:$0xff]
          %v752 = vld [vmem:[%s301 + $0xf8] sm:$0xff]
          %v753 = vld [vmem:[%s301 + $0x100] sm:$0xff]
          %v754 = vld [vmem:[%s301 + $0x108] sm:$0xff]
          %v755 = vld [vmem:[%s301 + $0x110] sm:$0xff]
          %v756 = vld [vmem:[%s301 + $0x118] sm:$0xff]
          %v757 = vld [vmem:[%s301 + $0x120] sm:$0xff]
          %v758 = vld [vmem:[%s301 + $0x128] sm:$0xff]
          %v759 = vld [vmem:[%s301 + $0x130] sm:$0xff]
          %v760 = vld [vmem:[%s301 + $0x138] sm:$0xff]
          %v761 = vld [vmem:[%s301 + $0x140] sm:$0xff]
          %v762 = vld [vmem:[%s301 + $0x148] sm:$0xff]
          %v763 = vld [vmem:[%s301 + $0x150] sm:$0xff]
          %v764 = vld [vmem:[%s301 + $0x158] sm:$0xff]
          %v765 = vld [vmem:[%s301 + $0x160] sm:$0xff]
          %v766 = vld [vmem:[%s301 + $0x168] sm:$0xff]
          %v767 = vld [vmem:[%s301 + $0x170] sm:$0xff]
          %v768 = vld [vmem:[%s301 + $0x178] sm:$0xff]
          %v769 = vld [vmem:[%s301 + $0x180] sm:$0xff]
          %v770 = vld [vmem:[%s301 + $0x188] sm:$0xff]
          %v771 = vld [vmem:[%s301 + $0x190] sm:$0xff]
          %v772 = vld [vmem:[%s301 + $0x198] sm:$0xff]
          %v773 = vld [vmem:[%s301 + $0x1a0] sm:$0xff]
          %v774 = vld [vmem:[%s301 + $0x1a8] sm:$0xff]
          %v775 = vld [vmem:[%s301 + $0x1b0] sm:$0xff]
          %v776 = vld [vmem:[%s301 + $0x1b8] sm:$0xff]
          %v777 = vld [vmem:[%s301 + $0x1c0] sm:$0xff]
          %v778 = vld [vmem:[%s301 + $0x1c8] sm:$0xff]
          %v779 = vld [vmem:[%s301 + $0x1d0] sm:$0xff]
          %v780 = vld [vmem:[%s301 + $0x1d8] sm:$0xff]
          %v781 = vld [vmem:[%s301 + $0x1e0] sm:$0xff]
          %v782 = vld [vmem:[%s301 + $0x1e8] sm:$0xff]
          %v783 = vld [vmem:[%s301 + $0x1f0] sm:$0xff]
          %v784 = vld [vmem:[%s301 + $0x1f8] sm:$0xff]
          %v785 = vld [vmem:[%s347] sm:$0xf]
          %v787 = vlaneseq
          %v788 = vshrl.u32 %v787, 7
          %v789 = vsub.s32 0, %v788
          %v790 = vrot.slane %v785, %v789
          %v791 = vlaneseq
          %v792 = vshrl.u32 %v791, 7
          %v793 = vsub.s32 1, %v792
          %v794 = vrot.slane %v785, %v793
          %v795 = vlaneseq
          %v796 = vshrl.u32 %v795, 7
          %v797 = vsub.s32 2, %v796
          %v798 = vrot.slane %v785, %v797
          %v799 = vlaneseq
          %v800 = vshrl.u32 %v799, 7
          %v801 = vsub.s32 3, %v800
          %v802 = vrot.slane %v785, %v801
          %807 = vmatprep.subr.mxu0 %v722
          %808 = vmatpush1.msra.mxu0 %v721
          %809 = vmatprep.subr.mxu0 %v726
          %810 = vmatpush1.msra.mxu0 %v725
          %811 = vmatprep.subr.mxu0 %v730
          %812 = vmatpush1.msra.mxu0 %v729
          %813 = vmatprep.subr.mxu0 %v734
          %814 = vmatpush1.msra.mxu0 %v733
          %815 = vmatprep.subr.mxu0 %v738
          %816 = vmatpush1.msra.mxu0 %v737
          %817 = vmatprep.subr.mxu0 %v742
          %818 = vmatpush1.msra.mxu0 %v741
          %819 = vmatprep.subr.mxu0 %v746
          %820 = vmatpush1.msra.mxu0 %v745
          %821 = vmatprep.subr.mxu0 %v750
          %822 = vmatpush1.msra.mxu0 %v749
          %823 = vmatprep.subr.mxu0 %v754
          %824 = vmatpush1.msra.mxu0 %v753
          %825 = vmatprep.subr.mxu0 %v758
          %826 = vmatpush1.msra.mxu0 %v757
          %827 = vmatprep.subr.mxu0 %v762
          %828 = vmatpush1.msra.mxu0 %v761
          %829 = vmatprep.subr.mxu0 %v766
          %830 = vmatpush1.msra.mxu0 %v765
          %831 = vmatprep.subr.mxu0 %v770
          %832 = vmatpush1.msra.mxu0 %v769
          %833 = vmatprep.subr.mxu0 %v774
          %834 = vmatpush1.msra.mxu0 %v773
          %835 = vmatprep.subr.mxu0 %v778
          %836 = vmatpush1.msra.mxu0 %v777
          %837 = vmatprep.subr.mxu0 %v782
          %838 = vmatpush1.msra.mxu0 %v781
          %839 = vmatprep.subr.mxu0 0.0
          %840 = vmatpush1.msra.mxu0 0.0
          %841 = vmatprep.subr.mxu0 0.0
          %842 = vmatpush1.msra.mxu0 0.0
          %843 = vmatprep.subr.mxu0 0.0
          %844 = vmatpush1.msra.mxu0 0.0
          %845 = vmatprep.subr.mxu0 0.0
          %846 = vmatpush1.msra.mxu0 0.0
          %847 = vmatprep.subr.mxu0 0.0
          %848 = vmatpush1.msra.mxu0 0.0
          %849 = vmatprep.subr.mxu0 0.0
          %850 = vmatpush1.msra.mxu0 0.0
          %851 = vmatprep.subr.mxu0 0.0
          %852 = vmatpush1.msra.mxu0 0.0
          %853 = vmatprep.subr.mxu0 0.0
          %854 = vmatpush1.msra.mxu0 0.0
          %855 = vmatprep.subr.mxu0 0.0
          %856 = vmatpush1.msra.mxu0 0.0
          %857 = vmatprep.subr.mxu0 0.0
          %858 = vmatpush1.msra.mxu0 0.0
          %859 = vmatprep.subr.mxu0 0.0
          %860 = vmatpush1.msra.mxu0 0.0
          %861 = vmatprep.subr.mxu0 0.0
          %862 = vmatpush1.msra.mxu0 0.0
          %863 = vmatprep.subr.mxu0 0.0
          %864 = vmatpush1.msra.mxu0 0.0
          %865 = vmatprep.subr.mxu0 0.0
          %866 = vmatpush1.msra.mxu0 0.0
          %867 = vmatprep.subr.mxu0 0.0
          %868 = vmatpush1.msra.mxu0 0.0
          %869 = vmatprep.subr.mxu0 0.0
          %870 = vmatpush1.msra.mxu0 0.0
          %871 = vmatprep.mubr.f32.mxu0 0.0
          %872 = vmatmul.mubr.f32.gmra.mrb[0].mxu0 %v713
          %v873 = vpop.f32.mrb[0].mxu0
          %v874 = vadd.f32 %v790, %v873
          %v875 = vpop.f32.mrb[0].mxu0
          %v876 = vadd.f32 %v794, %v875
          %877 = vmatprep.mubr.f32.mxu0 0.0
          %878 = vmatmul.mubr.f32.gmra.mrb[0].mxu0 %v714
          %v879 = vpop.f32.mrb[0].mxu0
          %v880 = vadd.f32 %v790, %v879
          %v881 = vpop.f32.mrb[0].mxu0
          %v882 = vadd.f32 %v794, %v881
          %883 = vmatprep.mubr.f32.mxu0 0.0
          %884 = vmatmul.mubr.f32.gmra.mrb[0].mxu0 %v715
          %v885 = vpop.f32.mrb[0].mxu0
          %v886 = vadd.f32 %v790, %v885
          %v887 = vpop.f32.mrb[0].mxu0
          %v888 = vadd.f32 %v794, %v887
          %889 = vmatprep.mubr.f32.mxu0 0.0
          %890 = vmatmul.mubr.f32.gmra.mrb[0].mxu0 %v716
          %v891 = vpop.f32.mrb[0].mxu0
          %v892 = vadd.f32 %v790, %v891
          %v893 = vpop.f32.mrb[0].mxu0
          %v894 = vadd.f32 %v794, %v893
          %895 = vmatprep.mubr.f32.mxu0 0.0
          %896 = vmatmul.mubr.f32.gmra.mrb[0].mxu0 %v717
          %v897 = vpop.f32.mrb[0].mxu0
          %v898 = vadd.f32 %v790, %v897
          %v899 = vpop.f32.mrb[0].mxu0
          %v900 = vadd.f32 %v794, %v899
          %901 = vmatprep.mubr.f32.mxu0 0.0
          %902 = vmatmul.mubr.f32.gmra.mrb[0].mxu0 %v718
          %v903 = vpop.f32.mrb[0].mxu0
          %v904 = vadd.f32 %v790, %v903
          %v905 = vpop.f32.mrb[0].mxu0
          %v906 = vadd.f32 %v794, %v905
          %907 = vmatprep.mubr.f32.mxu0 0.0
          %908 = vmatmul.mubr.f32.gmra.mrb[0].mxu0 %v719
          %v909 = vpop.f32.mrb[0].mxu0
          %v910 = vadd.f32 %v790, %v909
          %v911 = vpop.f32.mrb[0].mxu0
          %v912 = vadd.f32 %v794, %v911
          %913 = vmatprep.mubr.f32.mxu0 0.0
          %914 = vmatmul.mubr.f32.gmra.mrb[0].mxu0 %v720
          %v915 = vpop.f32.mrb[0].mxu0
          %v916 = vadd.f32 %v790, %v915
          %v917 = vpop.f32.mrb[0].mxu0
          %v918 = vadd.f32 %v794, %v917
          %919 = vdwg.mxu0
          %920 = vmatprep.subr.mxu0 %v724
          %921 = vmatpush1.msra.mxu0 %v723
          %922 = vmatprep.subr.mxu0 %v728
          %923 = vmatpush1.msra.mxu0 %v727
          %924 = vmatprep.subr.mxu0 %v732
          %925 = vmatpush1.msra.mxu0 %v731
          %926 = vmatprep.subr.mxu0 %v736
          %927 = vmatpush1.msra.mxu0 %v735
          %928 = vmatprep.subr.mxu0 %v740
          %929 = vmatpush1.msra.mxu0 %v739
          %930 = vmatprep.subr.mxu0 %v744
          %931 = vmatpush1.msra.mxu0 %v743
          %932 = vmatprep.subr.mxu0 %v748
          %933 = vmatpush1.msra.mxu0 %v747
          %934 = vmatprep.subr.mxu0 %v752
          %935 = vmatpush1.msra.mxu0 %v751
          %936 = vmatprep.subr.mxu0 %v756
          %937 = vmatpush1.msra.mxu0 %v755
          %938 = vmatprep.subr.mxu0 %v760
          %939 = vmatpush1.msra.mxu0 %v759
          %940 = vmatprep.subr.mxu0 %v764
          %941 = vmatpush1.msra.mxu0 %v763
          %942 = vmatprep.subr.mxu0 %v768
          %943 = vmatpush1.msra.mxu0 %v767
          %944 = vmatprep.subr.mxu0 %v772
          %945 = vmatpush1.msra.mxu0 %v771
          %946 = vmatprep.subr.mxu0 %v776
          %947 = vmatpush1.msra.mxu0 %v775
          %948 = vmatprep.subr.mxu0 %v780
          %949 = vmatpush1.msra.mxu0 %v779
          %950 = vmatprep.subr.mxu0 %v784
          %951 = vmatpush1.msra.mxu0 %v783
          %952 = vmatprep.subr.mxu0 0.0
          %953 = vmatpush1.msra.mxu0 0.0
          %954 = vmatprep.subr.mxu0 0.0
          %955 = vmatpush1.msra.mxu0 0.0
          %956 = vmatprep.subr.mxu0 0.0
          %957 = vmatpush1.msra.mxu0 0.0
          %958 = vmatprep.subr.mxu0 0.0
          %959 = vmatpush1.msra.mxu0 0.0
          %960 = vmatprep.subr.mxu0 0.0
          %961 = vmatpush1.msra.mxu0 0.0
          %962 = vmatprep.subr.mxu0 0.0
          %963 = vmatpush1.msra.mxu0 0.0
          %964 = vmatprep.subr.mxu0 0.0
          %965 = vmatpush1.msra.mxu0 0.0
          %966 = vmatprep.subr.mxu0 0.0
          %967 = vmatpush1.msra.mxu0 0.0
          %968 = vmatprep.subr.mxu0 0.0
          %969 = vmatpush1.msra.mxu0 0.0
          %970 = vmatprep.subr.mxu0 0.0
          %971 = vmatpush1.msra.mxu0 0.0
          %972 = vmatprep.subr.mxu0 0.0
          %973 = vmatpush1.msra.mxu0 0.0
          %974 = vmatprep.subr.mxu0 0.0
          %975 = vmatpush1.msra.mxu0 0.0
          %976 = vmatprep.subr.mxu0 0.0
          %977 = vmatpush1.msra.mxu0 0.0
          %978 = vmatprep.subr.mxu0 0.0
          %979 = vmatpush1.msra.mxu0 0.0
          %980 = vmatprep.subr.mxu0 0.0
          %981 = vmatpush1.msra.mxu0 0.0
          %982 = vmatprep.subr.mxu0 0.0
          %983 = vmatpush1.msra.mxu0 0.0
          %984 = vmatprep.mubr.f32.mxu0 0.0
          %985 = vmatmul.mubr.f32.gmra.mrb[0].mxu0 %v713
          %v986 = vpop.f32.mrb[0].mxu0
          %v987 = vadd.f32 %v798, %v986
          %v988 = vpop.f32.mrb[0].mxu0
          %v989 = vadd.f32 %v802, %v988
          %990 = vmatprep.mubr.f32.mxu0 0.0
          %991 = vmatmul.mubr.f32.gmra.mrb[0].mxu0 %v714
          %v992 = vpop.f32.mrb[0].mxu0
          %v993 = vadd.f32 %v798, %v992
          %v994 = vpop.f32.mrb[0].mxu0
          %v995 = vadd.f32 %v802, %v994
          %996 = vmatprep.mubr.f32.mxu0 0.0
          %997 = vmatmul.mubr.f32.gmra.mrb[0].mxu0 %v715
          %v998 = vpop.f32.mrb[0].mxu0
          %v999 = vadd.f32 %v798, %v998
          %v1000 = vpop.f32.mrb[0].mxu0
          %v1001 = vadd.f32 %v802, %v1000
          %1002 = vmatprep.mubr.f32.mxu0 0.0
          %1003 = vmatmul.mubr.f32.gmra.mrb[0].mxu0 %v716
          %v1004 = vpop.f32.mrb[0].mxu0
          %v1005 = vadd.f32 %v798, %v1004
          %v1006 = vpop.f32.mrb[0].mxu0
          %v1007 = vadd.f32 %v802, %v1006
          %1008 = vmatprep.mubr.f32.mxu0 0.0
          %1009 = vmatmul.mubr.f32.gmra.mrb[0].mxu0 %v717
          %v1010 = vpop.f32.mrb[0].mxu0
          %v1011 = vadd.f32 %v798, %v1010
          %v1012 = vpop.f32.mrb[0].mxu0
          %v1013 = vadd.f32 %v802, %v1012
          %1014 = vmatprep.mubr.f32.mxu0 0.0
          %1015 = vmatmul.mubr.f32.gmra.mrb[0].mxu0 %v718
          %v1016 = vpop.f32.mrb[0].mxu0
          %v1017 = vadd.f32 %v798, %v1016
          %v1018 = vpop.f32.mrb[0].mxu0
          %v1019 = vadd.f32 %v802, %v1018
          %1020 = vmatprep.mubr.f32.mxu0 0.0
          %1021 = vmatmul.mubr.f32.gmra.mrb[0].mxu0 %v719
          %v1022 = vpop.f32.mrb[0].mxu0
          %v1023 = vadd.f32 %v798, %v1022
          %v1024 = vpop.f32.mrb[0].mxu0
          %v1025 = vadd.f32 %v802, %v1024
          %1026 = vmatprep.mubr.f32.mxu0 0.0
          %1027 = vmatmul.mubr.f32.gmra.mrb[0].mxu0 %v720
          %v1028 = vpop.f32.mrb[0].mxu0
          %v1029 = vadd.f32 %v798, %v1028
          %v1030 = vpop.f32.mrb[0].mxu0
          %v1031 = vadd.f32 %v802, %v1030
          %1032 = vdwg.mxu0
          %1033 = vst [vmem:[#allocation3] sm:$0xff] %v874
          %1034 = vst [vmem:[#allocation3 + $0x8] sm:$0xff] %v876
          %1035 = vst [vmem:[#allocation3 + $0x10] sm:$0xff] %v987
          %1036 = vst [vmem:[#allocation3 + $0x18] sm:$0xff] %v989
          %1037 = vst [vmem:[#allocation3 + $0x20] sm:$0xff] %v880
          %1038 = vst [vmem:[#allocation3 + $0x28] sm:$0xff] %v882
          %1039 = vst [vmem:[#allocation3 + $0x30] sm:$0xff] %v993
          %1040 = vst [vmem:[#allocation3 + $0x38] sm:$0xff] %v995
          %1041 = vst [vmem:[#allocation3 + $0x40] sm:$0xff] %v886
          %1042 = vst [vmem:[#allocation3 + $0x48] sm:$0xff] %v888
          %1043 = vst [vmem:[#allocation3 + $0x50] sm:$0xff] %v999
          %1044 = vst [vmem:[#allocation3 + $0x58] sm:$0xff] %v1001
          %1045 = vst [vmem:[#allocation3 + $0x60] sm:$0xff] %v892
          %1046 = vst [vmem:[#allocation3 + $0x68] sm:$0xff] %v894
          %1047 = vst [vmem:[#allocation3 + $0x70] sm:$0xff] %v1005
          %1048 = vst [vmem:[#allocation3 + $0x78] sm:$0xff] %v1007
          %1049 = vst [vmem:[#allocation3 + $0x80] sm:$0xff] %v898
          %1050 = vst [vmem:[#allocation3 + $0x88] sm:$0xff] %v900
          %1051 = vst [vmem:[#allocation3 + $0x90] sm:$0xff] %v1011
          %1052 = vst [vmem:[#allocation3 + $0x98] sm:$0xff] %v1013
          %1053 = vst [vmem:[#allocation3 + $0xa0] sm:$0xff] %v904
          %1054 = vst [vmem:[#allocation3 + $0xa8] sm:$0xff] %v906
          %1055 = vst [vmem:[#allocation3 + $0xb0] sm:$0xff] %v1017
          %1056 = vst [vmem:[#allocation3 + $0xb8] sm:$0xff] %v1019
          %1057 = vst [vmem:[#allocation3 + $0xc0] sm:$0xff] %v910
          %1058 = vst [vmem:[#allocation3 + $0xc8] sm:$0xff] %v912
          %1059 = vst [vmem:[#allocation3 + $0xd0] sm:$0xff] %v1023
          %1060 = vst [vmem:[#allocation3 + $0xd8] sm:$0xff] %v1025
          %1061 = vst [vmem:[#allocation3 + $0xe0] sm:$0xff] %v916
          %1062 = vst [vmem:[#allocation3 + $0xe8] sm:$0xff] %v918
          %1063 = vst [vmem:[#allocation3 + $0xf0] sm:$0xff] %v1029
          %1064 = vst [vmem:[#allocation3 + $0xf8] sm:$0xff] %v1031
        $region64: #{tpu_custom_call.1} parent=39 // pred_fallthru
          _
        %v1065 = vld [vmem:[#allocation3] sm:$0xff]
        %v1066 = vld [vmem:[#allocation3 + $0x8] sm:$0xff]
        %v1067 = vld [vmem:[#allocation3 + $0x10] sm:$0xff]
        %v1068 = vld [vmem:[#allocation3 + $0x18] sm:$0xff]
        %v1069 = vld [vmem:[%s310] sm:$0xff]
        %v1070 = vld [vmem:[%s310 + $0x8] sm:$0xff]
        %v1071 = vld [vmem:[%s310 + $0x10] sm:$0xff]
        %v1072 = vld [vmem:[%s310 + $0x18] sm:$0xff]
        %v1073 = vld [vmem:[%s310 + $0x20] sm:$0xff]
        %v1074 = vld [vmem:[%s310 + $0x28] sm:$0xff]
        %v1075 = vld [vmem:[%s310 + $0x30] sm:$0xff]
        %v1076 = vld [vmem:[%s310 + $0x38] sm:$0xff]
        %v1077 = vld [vmem:[%s310 + $0x40] sm:$0xff]
        %v1078 = vld [vmem:[%s310 + $0x48] sm:$0xff]
        %v1079 = vld [vmem:[%s310 + $0x50] sm:$0xff]
        %v1080 = vld [vmem:[%s310 + $0x58] sm:$0xff]
        %v1081 = vld [vmem:[%s310 + $0x60] sm:$0xff]
        %v1082 = vld [vmem:[%s310 + $0x68] sm:$0xff]
        %v1083 = vld [vmem:[%s310 + $0x70] sm:$0xff]
        %v1084 = vld [vmem:[%s310 + $0x78] sm:$0xff]
        %v1085 = vld [vmem:[%s310 + $0x80] sm:$0xff]
        %v1086 = vld [vmem:[%s310 + $0x88] sm:$0xff]
        %v1087 = vld [vmem:[%s310 + $0x90] sm:$0xff]
        %v1088 = vld [vmem:[%s310 + $0x98] sm:$0xff]
        %v1089 = vld [vmem:[%s310 + $0xa0] sm:$0xff]
        %v1090 = vld [vmem:[%s310 + $0xa8] sm:$0xff]
        %v1091 = vld [vmem:[%s310 + $0xb0] sm:$0xff]
        %v1092 = vld [vmem:[%s310 + $0xb8] sm:$0xff]
        %v1093 = vld [vmem:[%s310 + $0xc0] sm:$0xff]
        %v1094 = vld [vmem:[%s310 + $0xc8] sm:$0xff]
        %v1095 = vld [vmem:[%s310 + $0xd0] sm:$0xff]
        %v1096 = vld [vmem:[%s310 + $0xd8] sm:$0xff]
        %v1097 = vld [vmem:[%s310 + $0xe0] sm:$0xff]
        %v1098 = vld [vmem:[%s310 + $0xe8] sm:$0xff]
        %v1099 = vld [vmem:[%s310 + $0xf0] sm:$0xff]
        %v1100 = vld [vmem:[%s310 + $0xf8] sm:$0xff]
        %v1101 = vld [vmem:[%s310 + $0x100] sm:$0xff]
        %v1102 = vld [vmem:[%s310 + $0x108] sm:$0xff]
        %v1103 = vld [vmem:[%s310 + $0x110] sm:$0xff]
        %v1104 = vld [vmem:[%s310 + $0x118] sm:$0xff]
        %v1105 = vld [vmem:[%s310 + $0x120] sm:$0xff]
        %v1106 = vld [vmem:[%s310 + $0x128] sm:$0xff]
        %v1107 = vld [vmem:[%s310 + $0x130] sm:$0xff]
        %v1108 = vld [vmem:[%s310 + $0x138] sm:$0xff]
        %v1109 = vld [vmem:[%s310 + $0x140] sm:$0xff]
        %v1110 = vld [vmem:[%s310 + $0x148] sm:$0xff]
        %v1111 = vld [vmem:[%s310 + $0x150] sm:$0xff]
        %v1112 = vld [vmem:[%s310 + $0x158] sm:$0xff]
        %v1113 = vld [vmem:[%s310 + $0x160] sm:$0xff]
        %v1114 = vld [vmem:[%s310 + $0x168] sm:$0xff]
        %v1115 = vld [vmem:[%s310 + $0x170] sm:$0xff]
        %v1116 = vld [vmem:[%s310 + $0x178] sm:$0xff]
        %v1117 = vld [vmem:[%s310 + $0x180] sm:$0xff]
        %v1118 = vld [vmem:[%s310 + $0x188] sm:$0xff]
        %v1119 = vld [vmem:[%s310 + $0x190] sm:$0xff]
        %v1120 = vld [vmem:[%s310 + $0x198] sm:$0xff]
        %v1121 = vld [vmem:[%s310 + $0x1a0] sm:$0xff]
        %v1122 = vld [vmem:[%s310 + $0x1a8] sm:$0xff]
        %v1123 = vld [vmem:[%s310 + $0x1b0] sm:$0xff]
        %v1124 = vld [vmem:[%s310 + $0x1b8] sm:$0xff]
        %v1125 = vld [vmem:[%s310 + $0x1c0] sm:$0xff]
        %v1126 = vld [vmem:[%s310 + $0x1c8] sm:$0xff]
        %v1127 = vld [vmem:[%s310 + $0x1d0] sm:$0xff]
        %v1128 = vld [vmem:[%s310 + $0x1d8] sm:$0xff]
        %v1129 = vld [vmem:[%s310 + $0x1e0] sm:$0xff]
        %v1130 = vld [vmem:[%s310 + $0x1e8] sm:$0xff]
        %v1131 = vld [vmem:[%s310 + $0x1f0] sm:$0xff]
        %v1132 = vld [vmem:[%s310 + $0x1f8] sm:$0xff]
        %1133 = vmatprep.subr.mxu0 %v1070
        %1134 = vmatpush1.msra.mxu0 %v1069
        %1135 = vmatprep.subr.mxu0 %v1074
        %1136 = vmatpush1.msra.mxu0 %v1073
        %1137 = vmatprep.subr.mxu0 %v1078
        %1138 = vmatpush1.msra.mxu0 %v1077
        %1139 = vmatprep.subr.mxu0 %v1082
        %1140 = vmatpush1.msra.mxu0 %v1081
        %1141 = vmatprep.subr.mxu0 %v1086
        %1142 = vmatpush1.msra.mxu0 %v1085
        %1143 = vmatprep.subr.mxu0 %v1090
        %1144 = vmatpush1.msra.mxu0 %v1089
        %1145 = vmatprep.subr.mxu0 %v1094
        %1146 = vmatpush1.msra.mxu0 %v1093
        %1147 = vmatprep.subr.mxu0 %v1098
        %1148 = vmatpush1.msra.mxu0 %v1097
        %1149 = vmatprep.subr.mxu0 %v1102
        %1150 = vmatpush1.msra.mxu0 %v1101
        %1151 = vmatprep.subr.mxu0 %v1106
        %1152 = vmatpush1.msra.mxu0 %v1105
        %1153 = vmatprep.subr.mxu0 %v1110
        %1154 = vmatpush1.msra.mxu0 %v1109
        %1155 = vmatprep.subr.mxu0 %v1114
        %1156 = vmatpush1.msra.mxu0 %v1113
        %1157 = vmatprep.subr.mxu0 %v1118
        %1158 = vmatpush1.msra.mxu0 %v1117
        %1159 = vmatprep.subr.mxu0 %v1122
        %1160 = vmatpush1.msra.mxu0 %v1121
        %1161 = vmatprep.subr.mxu0 %v1126
        %1162 = vmatpush1.msra.mxu0 %v1125
        %1163 = vmatprep.subr.mxu0 %v1130
        %1164 = vmatpush1.msra.mxu0 %v1129
        %1165 = vmatprep.subr.mxu0 0.0
        %1166 = vmatpush1.msra.mxu0 0.0
        %1167 = vmatprep.subr.mxu0 0.0
        %1168 = vmatpush1.msra.mxu0 0.0
        %1169 = vmatprep.subr.mxu0 0.0
        %1170 = vmatpush1.msra.mxu0 0.0
        %1171 = vmatprep.subr.mxu0 0.0
        %1172 = vmatpush1.msra.mxu0 0.0
        %1173 = vmatprep.subr.mxu0 0.0
        %1174 = vmatpush1.msra.mxu0 0.0
        %1175 = vmatprep.subr.mxu0 0.0
        %1176 = vmatpush1.msra.mxu0 0.0
        %1177 = vmatprep.subr.mxu0 0.0
        %1178 = vmatpush1.msra.mxu0 0.0
        %1179 = vmatprep.subr.mxu0 0.0
        %1180 = vmatpush1.msra.mxu0 0.0
        %1181 = vmatprep.subr.mxu0 0.0
        %1182 = vmatpush1.msra.mxu0 0.0
        %1183 = vmatprep.subr.mxu0 0.0
        %1184 = vmatpush1.msra.mxu0 0.0
        %1185 = vmatprep.subr.mxu0 0.0
        %1186 = vmatpush1.msra.mxu0 0.0
        %1187 = vmatprep.subr.mxu0 0.0
        %1188 = vmatpush1.msra.mxu0 0.0
        %1189 = vmatprep.subr.mxu0 0.0
        %1190 = vmatpush1.msra.mxu0 0.0
        %1191 = vmatprep.subr.mxu0 0.0
        %1192 = vmatpush1.msra.mxu0 0.0
        %1193 = vmatprep.subr.mxu0 0.0
        %1194 = vmatpush1.msra.mxu0 0.0
        %1195 = vmatprep.subr.mxu0 0.0
        %1196 = vmatpush1.msra.mxu0 0.0
        %1197 = vmatprep.mubr.f32.mxu0 0.0
        %1198 = vmatmul.mubr.f32.gmra.mrb[0].mxu0 0.0
        %v1199 = vpop.f32.mrb[0].mxu0
        %v1200 = vadd.f32 0.0, %v1199
        %v1201 = vpop.f32.mrb[0].mxu0
        %v1202 = vadd.f32 0.0, %v1201
        %1203 = vdwg.mxu0
        %1204 = vmatprep.subr.mxu0 %v1072
        %1205 = vmatpush1.msra.mxu0 %v1071
        %1206 = vmatprep.subr.mxu0 %v1076
        %1207 = vmatpush1.msra.mxu0 %v1075
        %1208 = vmatprep.subr.mxu0 %v1080
        %1209 = vmatpush1.msra.mxu0 %v1079
        %1210 = vmatprep.subr.mxu0 %v1084
        %1211 = vmatpush1.msra.mxu0 %v1083
        %1212 = vmatprep.subr.mxu0 %v1088
        %1213 = vmatpush1.msra.mxu0 %v1087
        %1214 = vmatprep.subr.mxu0 %v1092
        %1215 = vmatpush1.msra.mxu0 %v1091
        %1216 = vmatprep.subr.mxu0 %v1096
        %1217 = vmatpush1.msra.mxu0 %v1095
        %1218 = vmatprep.subr.mxu0 %v1100
        %1219 = vmatpush1.msra.mxu0 %v1099
        %1220 = vmatprep.subr.mxu0 %v1104
        %1221 = vmatpush1.msra.mxu0 %v1103
        %1222 = vmatprep.subr.mxu0 %v1108
        %1223 = vmatpush1.msra.mxu0 %v1107
        %1224 = vmatprep.subr.mxu0 %v1112
        %1225 = vmatpush1.msra.mxu0 %v1111
        %1226 = vmatprep.subr.mxu0 %v1116
        %1227 = vmatpush1.msra.mxu0 %v1115
        %1228 = vmatprep.subr.mxu0 %v1120
        %1229 = vmatpush1.msra.mxu0 %v1119
        %1230 = vmatprep.subr.mxu0 %v1124
        %1231 = vmatpush1.msra.mxu0 %v1123
        %1232 = vmatprep.subr.mxu0 %v1128
        %1233 = vmatpush1.msra.mxu0 %v1127
        %1234 = vmatprep.subr.mxu0 %v1132
        %1235 = vmatpush1.msra.mxu0 %v1131
        %1236 = vmatprep.subr.mxu0 0.0
        %1237 = vmatpush1.msra.mxu0 0.0
        %1238 = vmatprep.subr.mxu0 0.0
        %1239 = vmatpush1.msra.mxu0 0.0
        %1240 = vmatprep.subr.mxu0 0.0
        %1241 = vmatpush1.msra.mxu0 0.0
        %1242 = vmatprep.subr.mxu0 0.0
        %1243 = vmatpush1.msra.mxu0 0.0
        %1244 = vmatprep.subr.mxu0 0.0
        %1245 = vmatpush1.msra.mxu0 0.0
        %1246 = vmatprep.subr.mxu0 0.0
        %1247 = vmatpush1.msra.mxu0 0.0
        %1248 = vmatprep.subr.mxu0 0.0
        %1249 = vmatpush1.msra.mxu0 0.0
        %1250 = vmatprep.subr.mxu0 0.0
        %1251 = vmatpush1.msra.mxu0 0.0
        %1252 = vmatprep.subr.mxu0 0.0
        %1253 = vmatpush1.msra.mxu0 0.0
        %1254 = vmatprep.subr.mxu0 0.0
        %1255 = vmatpush1.msra.mxu0 0.0
        %1256 = vmatprep.subr.mxu0 0.0
        %1257 = vmatpush1.msra.mxu0 0.0
        %1258 = vmatprep.subr.mxu0 0.0
        %1259 = vmatpush1.msra.mxu0 0.0
        %1260 = vmatprep.subr.mxu0 0.0
        %1261 = vmatpush1.msra.mxu0 0.0
        %1262 = vmatprep.subr.mxu0 0.0
        %1263 = vmatpush1.msra.mxu0 0.0
        %1264 = vmatprep.subr.mxu0 0.0
        %1265 = vmatpush1.msra.mxu0 0.0
        %1266 = vmatprep.subr.mxu0 0.0
        %1267 = vmatpush1.msra.mxu0 0.0
        %1268 = vmatprep.mubr.f32.mxu0 0.0
        %1269 = vmatmul.mubr.f32.gmra.mrb[0].mxu0 0.0
        %v1270 = vpop.f32.mrb[0].mxu0
        %v1271 = vadd.f32 0.0, %v1270
        %v1272 = vpop.f32.mrb[0].mxu0
        %v1273 = vadd.f32 0.0, %v1272
        %1274 = vdwg.mxu0
        %v1275 = vadd.f32 %v1065, %v1200
        %v1276 = vadd.f32 %v1066, %v1202
        %v1277 = vadd.f32 %v1067, %v1271
        %v1278 = vadd.f32 %v1068, %v1273
        %v1279 = vxor.u32 %v1275, 2147483648
        %v1280 = vmul.f32 %v1279, 1.442695
        %v1281 = vpow.pop %v1280
        %v1282 = vadd.f32 %v1281, 1.0
        %v1283 = vrcp.pop %v1282
        %v1284 = vmul.f32 1.0, %v1283
        %v1285 = vxor.u32 %v1276, 2147483648
        %v1286 = vmul.f32 %v1285, 1.442695
        %v1287 = vpow.pop %v1286
        %v1288 = vadd.f32 %v1287, 1.0
        %v1289 = vrcp.pop %v1288
        %v1290 = vmul.f32 1.0, %v1289
        %v1291 = vtanh.pop %v1277
        %v1292 = vxor.u32 %v1278, 2147483648
        %v1293 = vmul.f32 %v1292, 1.442695
        %v1294 = vpow.pop %v1293
        %v1295 = vadd.f32 %v1294, 1.0
        %v1296 = vrcp.pop %v1295
        %v1297 = vmul.f32 1.0, %v1296
        %v1298 = vmul.f32 %v1290, 0.0
        %v1299 = vmul.f32 %v1284, %v1291
        %v1300 = vadd.f32 %v1298, %v1299
        %v1301 = vtanh.pop %v1300
        %v1302 = vmul.f32 %v1297, %v1301
        %p1303 = scmp.ne.s32.totalorder %s24, 1
        // Predicated region
        $region65: #{tpu_custom_call.1} parent=39 // pred_check
          %p1304 = pneg %p1303
        $region66: #{tpu_custom_call.1} parent=39 // pred_check_branch
          %1306 = sbr.rel (%p1304) target = $region68
        $region67: #{tpu_custom_call.1} parent=39 // pred_region
          %s1307 = smul.u32 0, 8
          %s1308 = scalar_lea.vmem [#allocation2], %s1307
          %1309 = vst [vmem:[%s1308] sm:$0xff] %v1302
        $region68: #{tpu_custom_call.1} parent=39 // pred_fallthru
          _
        %s1310 = scalar_lea.vmem [#allocation3], 32
        %v1311 = vld [vmem:[%s1310] sm:$0xff]
        %v1312 = vld [vmem:[%s1310 + $0x8] sm:$0xff]
        %v1313 = vld [vmem:[%s1310 + $0x10] sm:$0xff]
        %v1314 = vld [vmem:[%s1310 + $0x18] sm:$0xff]
        %v1315 = vld [vmem:[%s310] sm:$0xff]
        %v1316 = vld [vmem:[%s310 + $0x8] sm:$0xff]
        %v1317 = vld [vmem:[%s310 + $0x10] sm:$0xff]
        %v1318 = vld [vmem:[%s310 + $0x18] sm:$0xff]
        %v1319 = vld [vmem:[%s310 + $0x20] sm:$0xff]
        %v1320 = vld [vmem:[%s310 + $0x28] sm:$0xff]
        %v1321 = vld [vmem:[%s310 + $0x30] sm:$0xff]
        %v1322 = vld [vmem:[%s310 + $0x38] sm:$0xff]
        %v1323 = vld [vmem:[%s310 + $0x40] sm:$0xff]
        %v1324 = vld [vmem:[%s310 + $0x48] sm:$0xff]
        %v1325 = vld [vmem:[%s310 + $0x50] sm:$0xff]
        %v1326 = vld [vmem:[%s310 + $0x58] sm:$0xff]
        %v1327 = vld [vmem:[%s310 + $0x60] sm:$0xff]
        %v1328 = vld [vmem:[%s310 + $0x68] sm:$0xff]
        %v1329 = vld [vmem:[%s310 + $0x70] sm:$0xff]
        %v1330 = vld [vmem:[%s310 + $0x78] sm:$0xff]
        %v1331 = vld [vmem:[%s310 + $0x80] sm:$0xff]
        %v1332 = vld [vmem:[%s310 + $0x88] sm:$0xff]
        %v1333 = vld [vmem:[%s310 + $0x90] sm:$0xff]
        %v1334 = vld [vmem:[%s310 + $0x98] sm:$0xff]
        %v1335 = vld [vmem:[%s310 + $0xa0] sm:$0xff]
        %v1336 = vld [vmem:[%s310 + $0xa8] sm:$0xff]
        %v1337 = vld [vmem:[%s310 + $0xb0] sm:$0xff]
        %v1338 = vld [vmem:[%s310 + $0xb8] sm:$0xff]
        %v1339 = vld [vmem:[%s310 + $0xc0] sm:$0xff]
        %v1340 = vld [vmem:[%s310 + $0xc8] sm:$0xff]
        %v1341 = vld [vmem:[%s310 + $0xd0] sm:$0xff]
        %v1342 = vld [vmem:[%s310 + $0xd8] sm:$0xff]
        %v1343 = vld [vmem:[%s310 + $0xe0] sm:$0xff]
        %v1344 = vld [vmem:[%s310 + $0xe8] sm:$0xff]
        %v1345 = vld [vmem:[%s310 + $0xf0] sm:$0xff]
        %v1346 = vld [vmem:[%s310 + $0xf8] sm:$0xff]
        %v1347 = vld [vmem:[%s310 + $0x100] sm:$0xff]
        %v1348 = vld [vmem:[%s310 + $0x108] sm:$0xff]
        %v1349 = vld [vmem:[%s310 + $0x110] sm:$0xff]
        %v1350 = vld [vmem:[%s310 + $0x118] sm:$0xff]
        %v1351 = vld [vmem:[%s310 + $0x120] sm:$0xff]
        %v1352 = vld [vmem:[%s310 + $0x128] sm:$0xff]
        %v1353 = vld [vmem:[%s310 + $0x130] sm:$0xff]
        %v1354 = vld [vmem:[%s310 + $0x138] sm:$0xff]
        %v1355 = vld [vmem:[%s310 + $0x140] sm:$0xff]
        %v1356 = vld [vmem:[%s310 + $0x148] sm:$0xff]
        %v1357 = vld [vmem:[%s310 + $0x150] sm:$0xff]
        %v1358 = vld [vmem:[%s310 + $0x158] sm:$0xff]
        %v1359 = vld [vmem:[%s310 + $0x160] sm:$0xff]
        %v1360 = vld [vmem:[%s310 + $0x168] sm:$0xff]
        %v1361 = vld [vmem:[%s310 + $0x170] sm:$0xff]
        %v1362 = vld [vmem:[%s310 + $0x178] sm:$0xff]
        %v1363 = vld [vmem:[%s310 + $0x180] sm:$0xff]
        %v1364 = vld [vmem:[%s310 + $0x188] sm:$0xff]
        %v1365 = vld [vmem:[%s310 + $0x190] sm:$0xff]
        %v1366 = vld [vmem:[%s310 + $0x198] sm:$0xff]
        %v1367 = vld [vmem:[%s310 + $0x1a0] sm:$0xff]
        %v1368 = vld [vmem:[%s310 + $0x1a8] sm:$0xff]
        %v1369 = vld [vmem:[%s310 + $0x1b0] sm:$0xff]
        %v1370 = vld [vmem:[%s310 + $0x1b8] sm:$0xff]
        %v1371 = vld [vmem:[%s310 + $0x1c0] sm:$0xff]
        %v1372 = vld [vmem:[%s310 + $0x1c8] sm:$0xff]
        %v1373 = vld [vmem:[%s310 + $0x1d0] sm:$0xff]
        %v1374 = vld [vmem:[%s310 + $0x1d8] sm:$0xff]
        %v1375 = vld [vmem:[%s310 + $0x1e0] sm:$0xff]
        %v1376 = vld [vmem:[%s310 + $0x1e8] sm:$0xff]
        %v1377 = vld [vmem:[%s310 + $0x1f0] sm:$0xff]
        %v1378 = vld [vmem:[%s310 + $0x1f8] sm:$0xff]
        %1379 = vmatprep.subr.mxu0 %v1316
        %1380 = vmatpush1.msra.mxu0 %v1315
        %1381 = vmatprep.subr.mxu0 %v1320
        %1382 = vmatpush1.msra.mxu0 %v1319
        %1383 = vmatprep.subr.mxu0 %v1324
        %1384 = vmatpush1.msra.mxu0 %v1323
        %1385 = vmatprep.subr.mxu0 %v1328
        %1386 = vmatpush1.msra.mxu0 %v1327
        %1387 = vmatprep.subr.mxu0 %v1332
        %1388 = vmatpush1.msra.mxu0 %v1331
        %1389 = vmatprep.subr.mxu0 %v1336
        %1390 = vmatpush1.msra.mxu0 %v1335
        %1391 = vmatprep.subr.mxu0 %v1340
        %1392 = vmatpush1.msra.mxu0 %v1339
        %1393 = vmatprep.subr.mxu0 %v1344
        %1394 = vmatpush1.msra.mxu0 %v1343
        %1395 = vmatprep.subr.mxu0 %v1348
        %1396 = vmatpush1.msra.mxu0 %v1347
        %1397 = vmatprep.subr.mxu0 %v1352
        %1398 = vmatpush1.msra.mxu0 %v1351
        %1399 = vmatprep.subr.mxu0 %v1356
        %1400 = vmatpush1.msra.mxu0 %v1355
        %1401 = vmatprep.subr.mxu0 %v1360
        %1402 = vmatpush1.msra.mxu0 %v1359
        %1403 = vmatprep.subr.mxu0 %v1364
        %1404 = vmatpush1.msra.mxu0 %v1363
        %1405 = vmatprep.subr.mxu0 %v1368
        %1406 = vmatpush1.msra.mxu0 %v1367
        %1407 = vmatprep.subr.mxu0 %v1372
        %1408 = vmatpush1.msra.mxu0 %v1371
        %1409 = vmatprep.subr.mxu0 %v1376
        %1410 = vmatpush1.msra.mxu0 %v1375
        %1411 = vmatprep.subr.mxu0 0.0
        %1412 = vmatpush1.msra.mxu0 0.0
        %1413 = vmatprep.subr.mxu0 0.0
        %1414 = vmatpush1.msra.mxu0 0.0
        %1415 = vmatprep.subr.mxu0 0.0
        %1416 = vmatpush1.msra.mxu0 0.0
        %1417 = vmatprep.subr.mxu0 0.0
        %1418 = vmatpush1.msra.mxu0 0.0
        %1419 = vmatprep.subr.mxu0 0.0
        %1420 = vmatpush1.msra.mxu0 0.0
        %1421 = vmatprep.subr.mxu0 0.0
        %1422 = vmatpush1.msra.mxu0 0.0
        %1423 = vmatprep.subr.mxu0 0.0
        %1424 = vmatpush1.msra.mxu0 0.0
        %1425 = vmatprep.subr.mxu0 0.0
        %1426 = vmatpush1.msra.mxu0 0.0
        %1427 = vmatprep.subr.mxu0 0.0
        %1428 = vmatpush1.msra.mxu0 0.0
        %1429 = vmatprep.subr.mxu0 0.0
        %1430 = vmatpush1.msra.mxu0 0.0
        %1431 = vmatprep.subr.mxu0 0.0
        %1432 = vmatpush1.msra.mxu0 0.0
        %1433 = vmatprep.subr.mxu0 0.0
        %1434 = vmatpush1.msra.mxu0 0.0
        %1435 = vmatprep.subr.mxu0 0.0
        %1436 = vmatpush1.msra.mxu0 0.0
        %1437 = vmatprep.subr.mxu0 0.0
        %1438 = vmatpush1.msra.mxu0 0.0
        %1439 = vmatprep.subr.mxu0 0.0
        %1440 = vmatpush1.msra.mxu0 0.0
        %1441 = vmatprep.subr.mxu0 0.0
        %1442 = vmatpush1.msra.mxu0 0.0
        %1443 = vmatprep.mubr.f32.mxu0 0.0
        %1444 = vmatmul.mubr.f32.gmra.mrb[0].mxu0 %v1302
        %v1445 = vpop.f32.mrb[0].mxu0
        %v1446 = vadd.f32 0.0, %v1445
        %v1447 = vpop.f32.mrb[0].mxu0
        %v1448 = vadd.f32 0.0, %v1447
        %1449 = vdwg.mxu0
        %1450 = vmatprep.subr.mxu0 %v1318
        %1451 = vmatpush1.msra.mxu0 %v1317
        %1452 = vmatprep.subr.mxu0 %v1322
        %1453 = vmatpush1.msra.mxu0 %v1321
        %1454 = vmatprep.subr.mxu0 %v1326
        %1455 = vmatpush1.msra.mxu0 %v1325
        %1456 = vmatprep.subr.mxu0 %v1330
        %1457 = vmatpush1.msra.mxu0 %v1329
        %1458 = vmatprep.subr.mxu0 %v1334
        %1459 = vmatpush1.msra.mxu0 %v1333
        %1460 = vmatprep.subr.mxu0 %v1338
        %1461 = vmatpush1.msra.mxu0 %v1337
        %1462 = vmatprep.subr.mxu0 %v1342
        %1463 = vmatpush1.msra.mxu0 %v1341
        %1464 = vmatprep.subr.mxu0 %v1346
        %1465 = vmatpush1.msra.mxu0 %v1345
        %1466 = vmatprep.subr.mxu0 %v1350
        %1467 = vmatpush1.msra.mxu0 %v1349
        %1468 = vmatprep.subr.mxu0 %v1354
        %1469 = vmatpush1.msra.mxu0 %v1353
        %1470 = vmatprep.subr.mxu0 %v1358
        %1471 = vmatpush1.msra.mxu0 %v1357
        %1472 = vmatprep.subr.mxu0 %v1362
        %1473 = vmatpush1.msra.mxu0 %v1361
        %1474 = vmatprep.subr.mxu0 %v1366
        %1475 = vmatpush1.msra.mxu0 %v1365
        %1476 = vmatprep.subr.mxu0 %v1370
        %1477 = vmatpush1.msra.mxu0 %v1369
        %1478 = vmatprep.subr.mxu0 %v1374
        %1479 = vmatpush1.msra.mxu0 %v1373
        %1480 = vmatprep.subr.mxu0 %v1378
        %1481 = vmatpush1.msra.mxu0 %v1377
        %1482 = vmatprep.subr.mxu0 0.0
        %1483 = vmatpush1.msra.mxu0 0.0
        %1484 = vmatprep.subr.mxu0 0.0
        %1485 = vmatpush1.msra.mxu0 0.0
        %1486 = vmatprep.subr.mxu0 0.0
        %1487 = vmatpush1.msra.mxu0 0.0
        %1488 = vmatprep.subr.mxu0 0.0
        %1489 = vmatpush1.msra.mxu0 0.0
        %1490 = vmatprep.subr.mxu0 0.0
        %1491 = vmatpush1.msra.mxu0 0.0
        %1492 = vmatprep.subr.mxu0 0.0
        %1493 = vmatpush1.msra.mxu0 0.0
        %1494 = vmatprep.subr.mxu0 0.0
        %1495 = vmatpush1.msra.mxu0 0.0
        %1496 = vmatprep.subr.mxu0 0.0
        %1497 = vmatpush1.msra.mxu0 0.0
        %1498 = vmatprep.subr.mxu0 0.0
        %1499 = vmatpush1.msra.mxu0 0.0
        %1500 = vmatprep.subr.mxu0 0.0
        %1501 = vmatpush1.msra.mxu0 0.0
        %1502 = vmatprep.subr.mxu0 0.0
        %1503 = vmatpush1.msra.mxu0 0.0
        %1504 = vmatprep.subr.mxu0 0.0
        %1505 = vmatpush1.msra.mxu0 0.0
        %1506 = vmatprep.subr.mxu0 0.0
        %1507 = vmatpush1.msra.mxu0 0.0
        %1508 = vmatprep.subr.mxu0 0.0
        %1509 = vmatpush1.msra.mxu0 0.0
        %1510 = vmatprep.subr.mxu0 0.0
        %1511 = vmatpush1.msra.mxu0 0.0
        %1512 = vmatprep.subr.mxu0 0.0
        %1513 = vmatpush1.msra.mxu0 0.0
        %1514 = vmatprep.mubr.f32.mxu0 0.0
        %1515 = vmatmul.mubr.f32.gmra.mrb[0].mxu0 %v1302
        %v1516 = vpop.f32.mrb[0].mxu0
        %v1517 = vadd.f32 0.0, %v1516
        %v1518 = vpop.f32.mrb[0].mxu0
        %v1519 = vadd.f32 0.0, %v1518
        %1520 = vdwg.mxu0
        %v1521 = vadd.f32 %v1311, %v1446
        %v1522 = vadd.f32 %v1312, %v1448
        %v1523 = vadd.f32 %v1313, %v1517
        %v1524 = vadd.f32 %v1314, %v1519
        %v1525 = vxor.u32 %v1521, 2147483648
        %v1526 = vmul.f32 %v1525, 1.442695
        %v1527 = vpow.pop %v1526
        %v1528 = vadd.f32 %v1527, 1.0
        %v1529 = vrcp.pop %v1528
        %v1530 = vmul.f32 1.0, %v1529
        %v1531 = vxor.u32 %v1522, 2147483648
        %v1532 = vmul.f32 %v1531, 1.442695
        %v1533 = vpow.pop %v1532
        %v1534 = vadd.f32 %v1533, 1.0
        %v1535 = vrcp.pop %v1534
        %v1536 = vmul.f32 1.0, %v1535
        %v1537 = vtanh.pop %v1523
        %v1538 = vxor.u32 %v1524, 2147483648
        %v1539 = vmul.f32 %v1538, 1.442695
        %v1540 = vpow.pop %v1539
        %v1541 = vadd.f32 %v1540, 1.0
        %v1542 = vrcp.pop %v1541
        %v1543 = vmul.f32 1.0, %v1542
        %v1544 = vmul.f32 %v1536, %v1300
        %v1545 = vmul.f32 %v1530, %v1537
        %v1546 = vadd.f32 %v1544, %v1545
        %v1547 = vtanh.pop %v1546
        %v1548 = vmul.f32 %v1543, %v1547
        // Predicated region
        $region69: #{tpu_custom_call.1} parent=39 // pred_check
          %p1549 = pneg %p1303
        $region70: #{tpu_custom_call.1} parent=39 // pred_check_branch
          %1551 = sbr.rel (%p1549) target = $region72
        $region71: #{tpu_custom_call.1} parent=39 // pred_region
          %s1552 = sadd.s32 0, 1
          %s1553 = smul.u32 %s1552, 8
          %s1554 = scalar_lea.vmem [#allocation2], %s1553
          %1555 = vst [vmem:[%s1554] sm:$0xff] %v1548
        $region72: #{tpu_custom_call.1} parent=39 // pred_fallthru
          _
        %s1556 = scalar_lea.vmem [#allocation3], 64
        %v1557 = vld [vmem:[%s1556] sm:$0xff]
        %v1558 = vld [vmem:[%s1556 + $0x8] sm:$0xff]
        %v1559 = vld [vmem:[%s1556 + $0x10] sm:$0xff]
        %v1560 = vld [vmem:[%s1556 + $0x18] sm:$0xff]
        %v1561 = vld [vmem:[%s310] sm:$0xff]
        %v1562 = vld [vmem:[%s310 + $0x8] sm:$0xff]
        %v1563 = vld [vmem:[%s310 + $0x10] sm:$0xff]
        %v1564 = vld [vmem:[%s310 + $0x18] sm:$0xff]
        %v1565 = vld [vmem:[%s310 + $0x20] sm:$0xff]
        %v1566 = vld [vmem:[%s310 + $0x28] sm:$0xff]
        %v1567 = vld [vmem:[%s310 + $0x30] sm:$0xff]
        %v1568 = vld [vmem:[%s310 + $0x38] sm:$0xff]
        %v1569 = vld [vmem:[%s310 + $0x40] sm:$0xff]
        %v1570 = vld [vmem:[%s310 + $0x48] sm:$0xff]
        %v1571 = vld [vmem:[%s310 + $0x50] sm:$0xff]
        %v1572 = vld [vmem:[%s310 + $0x58] sm:$0xff]
        %v1573 = vld [vmem:[%s310 + $0x60] sm:$0xff]
        %v1574 = vld [vmem:[%s310 + $0x68] sm:$0xff]
        %v1575 = vld [vmem:[%s310 + $0x70] sm:$0xff]
        %v1576 = vld [vmem:[%s310 + $0x78] sm:$0xff]
        %v1577 = vld [vmem:[%s310 + $0x80] sm:$0xff]
        %v1578 = vld [vmem:[%s310 + $0x88] sm:$0xff]
        %v1579 = vld [vmem:[%s310 + $0x90] sm:$0xff]
        %v1580 = vld [vmem:[%s310 + $0x98] sm:$0xff]
        %v1581 = vld [vmem:[%s310 + $0xa0] sm:$0xff]
        %v1582 = vld [vmem:[%s310 + $0xa8] sm:$0xff]
        %v1583 = vld [vmem:[%s310 + $0xb0] sm:$0xff]
        %v1584 = vld [vmem:[%s310 + $0xb8] sm:$0xff]
        %v1585 = vld [vmem:[%s310 + $0xc0] sm:$0xff]
        %v1586 = vld [vmem:[%s310 + $0xc8] sm:$0xff]
        %v1587 = vld [vmem:[%s310 + $0xd0] sm:$0xff]
        %v1588 = vld [vmem:[%s310 + $0xd8] sm:$0xff]
        %v1589 = vld [vmem:[%s310 + $0xe0] sm:$0xff]
        %v1590 = vld [vmem:[%s310 + $0xe8] sm:$0xff]
        %v1591 = vld [vmem:[%s310 + $0xf0] sm:$0xff]
        %v1592 = vld [vmem:[%s310 + $0xf8] sm:$0xff]
        %v1593 = vld [vmem:[%s310 + $0x100] sm:$0xff]
        %v1594 = vld [vmem:[%s310 + $0x108] sm:$0xff]
        %v1595 = vld [vmem:[%s310 + $0x110] sm:$0xff]
        %v1596 = vld [vmem:[%s310 + $0x118] sm:$0xff]
        %v1597 = vld [vmem:[%s310 + $0x120] sm:$0xff]
        %v1598 = vld [vmem:[%s310 + $0x128] sm:$0xff]
        %v1599 = vld [vmem:[%s310 + $0x130] sm:$0xff]
        %v1600 = vld [vmem:[%s310 + $0x138] sm:$0xff]
        %v1601 = vld [vmem:[%s310 + $0x140] sm:$0xff]
        %v1602 = vld [vmem:[%s310 + $0x148] sm:$0xff]
        %v1603 = vld [vmem:[%s310 + $0x150] sm:$0xff]
        %v1604 = vld [vmem:[%s310 + $0x158] sm:$0xff]
        %v1605 = vld [vmem:[%s310 + $0x160] sm:$0xff]
        %v1606 = vld [vmem:[%s310 + $0x168] sm:$0xff]
        %v1607 = vld [vmem:[%s310 + $0x170] sm:$0xff]
        %v1608 = vld [vmem:[%s310 + $0x178] sm:$0xff]
        %v1609 = vld [vmem:[%s310 + $0x180] sm:$0xff]
        %v1610 = vld [vmem:[%s310 + $0x188] sm:$0xff]
        %v1611 = vld [vmem:[%s310 + $0x190] sm:$0xff]
        %v1612 = vld [vmem:[%s310 + $0x198] sm:$0xff]
        %v1613 = vld [vmem:[%s310 + $0x1a0] sm:$0xff]
        %v1614 = vld [vmem:[%s310 + $0x1a8] sm:$0xff]
        %v1615 = vld [vmem:[%s310 + $0x1b0] sm:$0xff]
        %v1616 = vld [vmem:[%s310 + $0x1b8] sm:$0xff]
        %v1617 = vld [vmem:[%s310 + $0x1c0] sm:$0xff]
        %v1618 = vld [vmem:[%s310 + $0x1c8] sm:$0xff]
        %v1619 = vld [vmem:[%s310 + $0x1d0] sm:$0xff]
        %v1620 = vld [vmem:[%s310 + $0x1d8] sm:$0xff]
        %v1621 = vld [vmem:[%s310 + $0x1e0] sm:$0xff]
        %v1622 = vld [vmem:[%s310 + $0x1e8] sm:$0xff]
        %v1623 = vld [vmem:[%s310 + $0x1f0] sm:$0xff]
        %v1624 = vld [vmem:[%s310 + $0x1f8] sm:$0xff]
        %1625 = vmatprep.subr.mxu0 %v1562
        %1626 = vmatpush1.msra.mxu0 %v1561
        %1627 = vmatprep.subr.mxu0 %v1566
        %1628 = vmatpush1.msra.mxu0 %v1565
        %1629 = vmatprep.subr.mxu0 %v1570
        %1630 = vmatpush1.msra.mxu0 %v1569
        %1631 = vmatprep.subr.mxu0 %v1574
        %1632 = vmatpush1.msra.mxu0 %v1573
        %1633 = vmatprep.subr.mxu0 %v1578
        %1634 = vmatpush1.msra.mxu0 %v1577
        %1635 = vmatprep.subr.mxu0 %v1582
        %1636 = vmatpush1.msra.mxu0 %v1581
        %1637 = vmatprep.subr.mxu0 %v1586
        %1638 = vmatpush1.msra.mxu0 %v1585
        %1639 = vmatprep.subr.mxu0 %v1590
        %1640 = vmatpush1.msra.mxu0 %v1589
        %1641 = vmatprep.subr.mxu0 %v1594
        %1642 = vmatpush1.msra.mxu0 %v1593
        %1643 = vmatprep.subr.mxu0 %v1598
        %1644 = vmatpush1.msra.mxu0 %v1597
        %1645 = vmatprep.subr.mxu0 %v1602
        %1646 = vmatpush1.msra.mxu0 %v1601
        %1647 = vmatprep.subr.mxu0 %v1606
        %1648 = vmatpush1.msra.mxu0 %v1605
        %1649 = vmatprep.subr.mxu0 %v1610
        %1650 = vmatpush1.msra.mxu0 %v1609
        %1651 = vmatprep.subr.mxu0 %v1614
        %1652 = vmatpush1.msra.mxu0 %v1613
        %1653 = vmatprep.subr.mxu0 %v1618
        %1654 = vmatpush1.msra.mxu0 %v1617
        %1655 = vmatprep.subr.mxu0 %v1622
        %1656 = vmatpush1.msra.mxu0 %v1621
        %1657 = vmatprep.subr.mxu0 0.0
        %1658 = vmatpush1.msra.mxu0 0.0
        %1659 = vmatprep.subr.mxu0 0.0
        %1660 = vmatpush1.msra.mxu0 0.0
        %1661 = vmatprep.subr.mxu0 0.0
        %1662 = vmatpush1.msra.mxu0 0.0
        %1663 = vmatprep.subr.mxu0 0.0
        %1664 = vmatpush1.msra.mxu0 0.0
        %1665 = vmatprep.subr.mxu0 0.0
        %1666 = vmatpush1.msra.mxu0 0.0
        %1667 = vmatprep.subr.mxu0 0.0
        %1668 = vmatpush1.msra.mxu0 0.0
        %1669 = vmatprep.subr.mxu0 0.0
        %1670 = vmatpush1.msra.mxu0 0.0
        %1671 = vmatprep.subr.mxu0 0.0
        %1672 = vmatpush1.msra.mxu0 0.0
        %1673 = vmatprep.subr.mxu0 0.0
        %1674 = vmatpush1.msra.mxu0 0.0
        %1675 = vmatprep.subr.mxu0 0.0
        %1676 = vmatpush1.msra.mxu0 0.0
        %1677 = vmatprep.subr.mxu0 0.0
        %1678 = vmatpush1.msra.mxu0 0.0
        %1679 = vmatprep.subr.mxu0 0.0
        %1680 = vmatpush1.msra.mxu0 0.0
        %1681 = vmatprep.subr.mxu0 0.0
        %1682 = vmatpush1.msra.mxu0 0.0
        %1683 = vmatprep.subr.mxu0 0.0
        %1684 = vmatpush1.msra.mxu0 0.0
        %1685 = vmatprep.subr.mxu0 0.0
        %1686 = vmatpush1.msra.mxu0 0.0
        %1687 = vmatprep.subr.mxu0 0.0
        %1688 = vmatpush1.msra.mxu0 0.0
        %1689 = vmatprep.mubr.f32.mxu0 0.0
        %1690 = vmatmul.mubr.f32.gmra.mrb[0].mxu0 %v1548
        %v1691 = vpop.f32.mrb[0].mxu0
        %v1692 = vadd.f32 0.0, %v1691
        %v1693 = vpop.f32.mrb[0].mxu0
        %v1694 = vadd.f32 0.0, %v1693
        %1695 = vdwg.mxu0
        %1696 = vmatprep.subr.mxu0 %v1564
        %1697 = vmatpush1.msra.mxu0 %v1563
        %1698 = vmatprep.subr.mxu0 %v1568
        %1699 = vmatpush1.msra.mxu0 %v1567
        %1700 = vmatprep.subr.mxu0 %v1572
        %1701 = vmatpush1.msra.mxu0 %v1571
        %1702 = vmatprep.subr.mxu0 %v1576
        %1703 = vmatpush1.msra.mxu0 %v1575
        %1704 = vmatprep.subr.mxu0 %v1580
        %1705 = vmatpush1.msra.mxu0 %v1579
        %1706 = vmatprep.subr.mxu0 %v1584
        %1707 = vmatpush1.msra.mxu0 %v1583
        %1708 = vmatprep.subr.mxu0 %v1588
        %1709 = vmatpush1.msra.mxu0 %v1587
        %1710 = vmatprep.subr.mxu0 %v1592
        %1711 = vmatpush1.msra.mxu0 %v1591
        %1712 = vmatprep.subr.mxu0 %v1596
        %1713 = vmatpush1.msra.mxu0 %v1595
        %1714 = vmatprep.subr.mxu0 %v1600
        %1715 = vmatpush1.msra.mxu0 %v1599
        %1716 = vmatprep.subr.mxu0 %v1604
        %1717 = vmatpush1.msra.mxu0 %v1603
        %1718 = vmatprep.subr.mxu0 %v1608
        %1719 = vmatpush1.msra.mxu0 %v1607
        %1720 = vmatprep.subr.mxu0 %v1612
        %1721 = vmatpush1.msra.mxu0 %v1611
        %1722 = vmatprep.subr.mxu0 %v1616
        %1723 = vmatpush1.msra.mxu0 %v1615
        %1724 = vmatprep.subr.mxu0 %v1620
        %1725 = vmatpush1.msra.mxu0 %v1619
        %1726 = vmatprep.subr.mxu0 %v1624
        %1727 = vmatpush1.msra.mxu0 %v1623
        %1728 = vmatprep.subr.mxu0 0.0
        %1729 = vmatpush1.msra.mxu0 0.0
        %1730 = vmatprep.subr.mxu0 0.0
        %1731 = vmatpush1.msra.mxu0 0.0
        %1732 = vmatprep.subr.mxu0 0.0
        %1733 = vmatpush1.msra.mxu0 0.0
        %1734 = vmatprep.subr.mxu0 0.0
        %1735 = vmatpush1.msra.mxu0 0.0
        %1736 = vmatprep.subr.mxu0 0.0
        %1737 = vmatpush1.msra.mxu0 0.0
        %1738 = vmatprep.subr.mxu0 0.0
        %1739 = vmatpush1.msra.mxu0 0.0
        %1740 = vmatprep.subr.mxu0 0.0
        %1741 = vmatpush1.msra.mxu0 0.0
        %1742 = vmatprep.subr.mxu0 0.0
        %1743 = vmatpush1.msra.mxu0 0.0
        %1744 = vmatprep.subr.mxu0 0.0
        %1745 = vmatpush1.msra.mxu0 0.0
        %1746 = vmatprep.subr.mxu0 0.0
        %1747 = vmatpush1.msra.mxu0 0.0
        %1748 = vmatprep.subr.mxu0 0.0
        %1749 = vmatpush1.msra.mxu0 0.0
        %1750 = vmatprep.subr.mxu0 0.0
        %1751 = vmatpush1.msra.mxu0 0.0
        %1752 = vmatprep.subr.mxu0 0.0
        %1753 = vmatpush1.msra.mxu0 0.0
        %1754 = vmatprep.subr.mxu0 0.0
        %1755 = vmatpush1.msra.mxu0 0.0
        %1756 = vmatprep.subr.mxu0 0.0
        %1757 = vmatpush1.msra.mxu0 0.0
        %1758 = vmatprep.subr.mxu0 0.0
        %1759 = vmatpush1.msra.mxu0 0.0
        %1760 = vmatprep.mubr.f32.mxu0 0.0
        %1761 = vmatmul.mubr.f32.gmra.mrb[0].mxu0 %v1548
        %v1762 = vpop.f32.mrb[0].mxu0
        %v1763 = vadd.f32 0.0, %v1762
        %v1764 = vpop.f32.mrb[0].mxu0
        %v1765 = vadd.f32 0.0, %v1764
        %1766 = vdwg.mxu0
        %v1767 = vadd.f32 %v1557, %v1692
        %v1768 = vadd.f32 %v1558, %v1694
        %v1769 = vadd.f32 %v1559, %v1763
        %v1770 = vadd.f32 %v1560, %v1765
        %v1771 = vxor.u32 %v1767, 2147483648
        %v1772 = vmul.f32 %v1771, 1.442695
        %v1773 = vpow.pop %v1772
        %v1774 = vadd.f32 %v1773, 1.0
        %v1775 = vrcp.pop %v1774
        %v1776 = vmul.f32 1.0, %v1775
        %v1777 = vxor.u32 %v1768, 2147483648
        %v1778 = vmul.f32 %v1777, 1.442695
        %v1779 = vpow.pop %v1778
        %v1780 = vadd.f32 %v1779, 1.0
        %v1781 = vrcp.pop %v1780
        %v1782 = vmul.f32 1.0, %v1781
        %v1783 = vtanh.pop %v1769
        %v1784 = vxor.u32 %v1770, 2147483648
        %v1785 = vmul.f32 %v1784, 1.442695
        %v1786 = vpow.pop %v1785
        %v1787 = vadd.f32 %v1786, 1.0
        %v1788 = vrcp.pop %v1787
        %v1789 = vmul.f32 1.0, %v1788
        %v1790 = vmul.f32 %v1782, %v1546
        %v1791 = vmul.f32 %v1776, %v1783
        %v1792 = vadd.f32 %v1790, %v1791
        %v1793 = vtanh.pop %v1792
        %v1794 = vmul.f32 %v1789, %v1793
        // Predicated region
        $region73: #{tpu_custom_call.1} parent=39 // pred_check
          %p1795 = pneg %p1303
        $region74: #{tpu_custom_call.1} parent=39 // pred_check_branch
          %1797 = sbr.rel (%p1795) target = $region76
        $region75: #{tpu_custom_call.1} parent=39 // pred_region
          %s1798 = sadd.s32 0, 2
          %s1799 = smul.u32 %s1798, 8
          %s1800 = scalar_lea.vmem [#allocation2], %s1799
          %1801 = vst [vmem:[%s1800] sm:$0xff] %v1794
        $region76: #{tpu_custom_call.1} parent=39 // pred_fallthru
          _
        %s1802 = scalar_lea.vmem [#allocation3], 96
        %v1803 = vld [vmem:[%s1802] sm:$0xff]
        %v1804 = vld [vmem:[%s1802 + $0x8] sm:$0xff]
        %v1805 = vld [vmem:[%s1802 + $0x10] sm:$0xff]
        %v1806 = vld [vmem:[%s1802 + $0x18] sm:$0xff]
        %v1807 = vld [vmem:[%s310] sm:$0xff]
        %v1808 = vld [vmem:[%s310 + $0x8] sm:$0xff]
        %v1809 = vld [vmem:[%s310 + $0x10] sm:$0xff]
        %v1810 = vld [vmem:[%s310 + $0x18] sm:$0xff]
        %v1811 = vld [vmem:[%s310 + $0x20] sm:$0xff]
        %v1812 = vld [vmem:[%s310 + $0x28] sm:$0xff]
        %v1813 = vld [vmem:[%s310 + $0x30] sm:$0xff]
        %v1814 = vld [vmem:[%s310 + $0x38] sm:$0xff]
        %v1815 = vld [vmem:[%s310 + $0x40] sm:$0xff]
        %v1816 = vld [vmem:[%s310 + $0x48] sm:$0xff]
        %v1817 = vld [vmem:[%s310 + $0x50] sm:$0xff]
        %v1818 = vld [vmem:[%s310 + $0x58] sm:$0xff]
        %v1819 = vld [vmem:[%s310 + $0x60] sm:$0xff]
        %v1820 = vld [vmem:[%s310 + $0x68] sm:$0xff]
        %v1821 = vld [vmem:[%s310 + $0x70] sm:$0xff]
        %v1822 = vld [vmem:[%s310 + $0x78] sm:$0xff]
        %v1823 = vld [vmem:[%s310 + $0x80] sm:$0xff]
        %v1824 = vld [vmem:[%s310 + $0x88] sm:$0xff]
        %v1825 = vld [vmem:[%s310 + $0x90] sm:$0xff]
        %v1826 = vld [vmem:[%s310 + $0x98] sm:$0xff]
        %v1827 = vld [vmem:[%s310 + $0xa0] sm:$0xff]
        %v1828 = vld [vmem:[%s310 + $0xa8] sm:$0xff]
        %v1829 = vld [vmem:[%s310 + $0xb0] sm:$0xff]
        %v1830 = vld [vmem:[%s310 + $0xb8] sm:$0xff]
        %v1831 = vld [vmem:[%s310 + $0xc0] sm:$0xff]
        %v1832 = vld [vmem:[%s310 + $0xc8] sm:$0xff]
        %v1833 = vld [vmem:[%s310 + $0xd0] sm:$0xff]
        %v1834 = vld [vmem:[%s310 + $0xd8] sm:$0xff]
        %v1835 = vld [vmem:[%s310 + $0xe0] sm:$0xff]
        %v1836 = vld [vmem:[%s310 + $0xe8] sm:$0xff]
        %v1837 = vld [vmem:[%s310 + $0xf0] sm:$0xff]
        %v1838 = vld [vmem:[%s310 + $0xf8] sm:$0xff]
        %v1839 = vld [vmem:[%s310 + $0x100] sm:$0xff]
        %v1840 = vld [vmem:[%s310 + $0x108] sm:$0xff]
        %v1841 = vld [vmem:[%s310 + $0x110] sm:$0xff]
        %v1842 = vld [vmem:[%s310 + $0x118] sm:$0xff]
        %v1843 = vld [vmem:[%s310 + $0x120] sm:$0xff]
        %v1844 = vld [vmem:[%s310 + $0x128] sm:$0xff]
        %v1845 = vld [vmem:[%s310 + $0x130] sm:$0xff]
        %v1846 = vld [vmem:[%s310 + $0x138] sm:$0xff]
        %v1847 = vld [vmem:[%s310 + $0x140] sm:$0xff]
        %v1848 = vld [vmem:[%s310 + $0x148] sm:$0xff]
        %v1849 = vld [vmem:[%s310 + $0x150] sm:$0xff]
        %v1850 = vld [vmem:[%s310 + $0x158] sm:$0xff]
        %v1851 = vld [vmem:[%s310 + $0x160] sm:$0xff]
        %v1852 = vld [vmem:[%s310 + $0x168] sm:$0xff]
        %v1853 = vld [vmem:[%s310 + $0x170] sm:$0xff]
        %v1854 = vld [vmem:[%s310 + $0x178] sm:$0xff]
        %v1855 = vld [vmem:[%s310 + $0x180] sm:$0xff]
        %v1856 = vld [vmem:[%s310 + $0x188] sm:$0xff]
        %v1857 = vld [vmem:[%s310 + $0x190] sm:$0xff]
        %v1858 = vld [vmem:[%s310 + $0x198] sm:$0xff]
        %v1859 = vld [vmem:[%s310 + $0x1a0] sm:$0xff]
        %v1860 = vld [vmem:[%s310 + $0x1a8] sm:$0xff]
        %v1861 = vld [vmem:[%s310 + $0x1b0] sm:$0xff]
        %v1862 = vld [vmem:[%s310 + $0x1b8] sm:$0xff]
        %v1863 = vld [vmem:[%s310 + $0x1c0] sm:$0xff]
        %v1864 = vld [vmem:[%s310 + $0x1c8] sm:$0xff]
        %v1865 = vld [vmem:[%s310 + $0x1d0] sm:$0xff]
        %v1866 = vld [vmem:[%s310 + $0x1d8] sm:$0xff]
        %v1867 = vld [vmem:[%s310 + $0x1e0] sm:$0xff]
        %v1868 = vld [vmem:[%s310 + $0x1e8] sm:$0xff]
        %v1869 = vld [vmem:[%s310 + $0x1f0] sm:$0xff]
        %v1870 = vld [vmem:[%s310 + $0x1f8] sm:$0xff]
        %1871 = vmatprep.subr.mxu0 %v1808
        %1872 = vmatpush1.msra.mxu0 %v1807
        %1873 = vmatprep.subr.mxu0 %v1812
        %1874 = vmatpush1.msra.mxu0 %v1811
        %1875 = vmatprep.subr.mxu0 %v1816
        %1876 = vmatpush1.msra.mxu0 %v1815
        %1877 = vmatprep.subr.mxu0 %v1820
        %1878 = vmatpush1.msra.mxu0 %v1819
        %1879 = vmatprep.subr.mxu0 %v1824
        %1880 = vmatpush1.msra.mxu0 %v1823
        %1881 = vmatprep.subr.mxu0 %v1828
        %1882 = vmatpush1.msra.mxu0 %v1827
        %1883 = vmatprep.subr.mxu0 %v1832
        %1884 = vmatpush1.msra.mxu0 %v1831
        %1885 = vmatprep.subr.mxu0 %v1836
        %1886 = vmatpush1.msra.mxu0 %v1835
        %1887 = vmatprep.subr.mxu0 %v1840
        %1888 = vmatpush1.msra.mxu0 %v1839
        %1889 = vmatprep.subr.mxu0 %v1844
        %1890 = vmatpush1.msra.mxu0 %v1843
        %1891 = vmatprep.subr.mxu0 %v1848
        %1892 = vmatpush1.msra.mxu0 %v1847
        %1893 = vmatprep.subr.mxu0 %v1852
        %1894 = vmatpush1.msra.mxu0 %v1851
        %1895 = vmatprep.subr.mxu0 %v1856
        %1896 = vmatpush1.msra.mxu0 %v1855
        %1897 = vmatprep.subr.mxu0 %v1860
        %1898 = vmatpush1.msra.mxu0 %v1859
        %1899 = vmatprep.subr.mxu0 %v1864
        %1900 = vmatpush1.msra.mxu0 %v1863
        %1901 = vmatprep.subr.mxu0 %v1868
        %1902 = vmatpush1.msra.mxu0 %v1867
        %1903 = vmatprep.subr.mxu0 0.0
        %1904 = vmatpush1.msra.mxu0 0.0
        %1905 = vmatprep.subr.mxu0 0.0
        %1906 = vmatpush1.msra.mxu0 0.0
        %1907 = vmatprep.subr.mxu0 0.0
        %1908 = vmatpush1.msra.mxu0 0.0
        %1909 = vmatprep.subr.mxu0 0.0
        %1910 = vmatpush1.msra.mxu0 0.0
        %1911 = vmatprep.subr.mxu0 0.0
        %1912 = vmatpush1.msra.mxu0 0.0
        %1913 = vmatprep.subr.mxu0 0.0
        %1914 = vmatpush1.msra.mxu0 0.0
        %1915 = vmatprep.subr.mxu0 0.0
        %1916 = vmatpush1.msra.mxu0 0.0
        %1917 = vmatprep.subr.mxu0 0.0
        %1918 = vmatpush1.msra.mxu0 0.0
        %1919 = vmatprep.subr.mxu0 0.0
        %1920 = vmatpush1.msra.mxu0 0.0
        %1921 = vmatprep.subr.mxu0 0.0
        %1922 = vmatpush1.msra.mxu0 0.0
        %1923 = vmatprep.subr.mxu0 0.0
        %1924 = vmatpush1.msra.mxu0 0.0
        %1925 = vmatprep.subr.mxu0 0.0
        %1926 = vmatpush1.msra.mxu0 0.0
        %1927 = vmatprep.subr.mxu0 0.0
        %1928 = vmatpush1.msra.mxu0 0.0
        %1929 = vmatprep.subr.mxu0 0.0
        %1930 = vmatpush1.msra.mxu0 0.0
        %1931 = vmatprep.subr.mxu0 0.0
        %1932 = vmatpush1.msra.mxu0 0.0
        %1933 = vmatprep.subr.mxu0 0.0
        %1934 = vmatpush1.msra.mxu0 0.0
        %1935 = vmatprep.mubr.f32.mxu0 0.0
        %1936 = vmatmul.mubr.f32.gmra.mrb[0].mxu0 %v1794
        %v1937 = vpop.f32.mrb[0].mxu0
        %v1938 = vadd.f32 0.0, %v1937
        %v1939 = vpop.f32.mrb[0].mxu0
        %v1940 = vadd.f32 0.0, %v1939
        %1941 = vdwg.mxu0
        %1942 = vmatprep.subr.mxu0 %v1810
        %1943 = vmatpush1.msra.mxu0 %v1809
        %1944 = vmatprep.subr.mxu0 %v1814
        %1945 = vmatpush1.msra.mxu0 %v1813
        %1946 = vmatprep.subr.mxu0 %v1818
        %1947 = vmatpush1.msra.mxu0 %v1817
        %1948 = vmatprep.subr.mxu0 %v1822
        %1949 = vmatpush1.msra.mxu0 %v1821
        %1950 = vmatprep.subr.mxu0 %v1826
        %1951 = vmatpush1.msra.mxu0 %v1825
        %1952 = vmatprep.subr.mxu0 %v1830
        %1953 = vmatpush1.msra.mxu0 %v1829
        %1954 = vmatprep.subr.mxu0 %v1834
        %1955 = vmatpush1.msra.mxu0 %v1833
        %1956 = vmatprep.subr.mxu0 %v1838
        %1957 = vmatpush1.msra.mxu0 %v1837
        %1958 = vmatprep.subr.mxu0 %v1842
        %1959 = vmatpush1.msra.mxu0 %v1841
        %1960 = vmatprep.subr.mxu0 %v1846
        %1961 = vmatpush1.msra.mxu0 %v1845
        %1962 = vmatprep.subr.mxu0 %v1850
        %1963 = vmatpush1.msra.mxu0 %v1849
        %1964 = vmatprep.subr.mxu0 %v1854
        %1965 = vmatpush1.msra.mxu0 %v1853
        %1966 = vmatprep.subr.mxu0 %v1858
        %1967 = vmatpush1.msra.mxu0 %v1857
        %1968 = vmatprep.subr.mxu0 %v1862
        %1969 = vmatpush1.msra.mxu0 %v1861
        %1970 = vmatprep.subr.mxu0 %v1866
        %1971 = vmatpush1.msra.mxu0 %v1865
        %1972 = vmatprep.subr.mxu0 %v1870
        %1973 = vmatpush1.msra.mxu0 %v1869
        %1974 = vmatprep.subr.mxu0 0.0
        %1975 = vmatpush1.msra.mxu0 0.0
        %1976 = vmatprep.subr.mxu0 0.0
        %1977 = vmatpush1.msra.mxu0 0.0
        %1978 = vmatprep.subr.mxu0 0.0
        %1979 = vmatpush1.msra.mxu0 0.0
        %1980 = vmatprep.subr.mxu0 0.0
        %1981 = vmatpush1.msra.mxu0 0.0
        %1982 = vmatprep.subr.mxu0 0.0
        %1983 = vmatpush1.msra.mxu0 0.0
        %1984 = vmatprep.subr.mxu0 0.0
        %1985 = vmatpush1.msra.mxu0 0.0
        %1986 = vmatprep.subr.mxu0 0.0
        %1987 = vmatpush1.msra.mxu0 0.0
        %1988 = vmatprep.subr.mxu0 0.0
        %1989 = vmatpush1.msra.mxu0 0.0
        %1990 = vmatprep.subr.mxu0 0.0
        %1991 = vmatpush1.msra.mxu0 0.0
        %1992 = vmatprep.subr.mxu0 0.0
        %1993 = vmatpush1.msra.mxu0 0.0
        %1994 = vmatprep.subr.mxu0 0.0
        %1995 = vmatpush1.msra.mxu0 0.0
        %1996 = vmatprep.subr.mxu0 0.0
        %1997 = vmatpush1.msra.mxu0 0.0
        %1998 = vmatprep.subr.mxu0 0.0
        %1999 = vmatpush1.msra.mxu0 0.0
        %2000 = vmatprep.subr.mxu0 0.0
        %2001 = vmatpush1.msra.mxu0 0.0
        %2002 = vmatprep.subr.mxu0 0.0
        %2003 = vmatpush1.msra.mxu0 0.0
        %2004 = vmatprep.subr.mxu0 0.0
        %2005 = vmatpush1.msra.mxu0 0.0
        %2006 = vmatprep.mubr.f32.mxu0 0.0
        %2007 = vmatmul.mubr.f32.gmra.mrb[0].mxu0 %v1794
        %v2008 = vpop.f32.mrb[0].mxu0
        %v2009 = vadd.f32 0.0, %v2008
        %v2010 = vpop.f32.mrb[0].mxu0
        %v2011 = vadd.f32 0.0, %v2010
        %2012 = vdwg.mxu0
        %v2013 = vadd.f32 %v1803, %v1938
        %v2014 = vadd.f32 %v1804, %v1940
        %v2015 = vadd.f32 %v1805, %v2009
        %v2016 = vadd.f32 %v1806, %v2011
        %v2017 = vxor.u32 %v2013, 2147483648
        %v2018 = vmul.f32 %v2017, 1.442695
        %v2019 = vpow.pop %v2018
        %v2020 = vadd.f32 %v2019, 1.0
        %v2021 = vrcp.pop %v2020
        %v2022 = vmul.f32 1.0, %v2021
        %v2023 = vxor.u32 %v2014, 2147483648
        %v2024 = vmul.f32 %v2023, 1.442695
        %v2025 = vpow.pop %v2024
        %v2026 = vadd.f32 %v2025, 1.0
        %v2027 = vrcp.pop %v2026
        %v2028 = vmul.f32 1.0, %v2027
        %v2029 = vtanh.pop %v2015
        %v2030 = vxor.u32 %v2016, 2147483648
        %v2031 = vmul.f32 %v2030, 1.442695
        %v2032 = vpow.pop %v2031
        %v2033 = vadd.f32 %v2032, 1.0
        %v2034 = vrcp.pop %v2033
        %v2035 = vmul.f32 1.0, %v2034
        %v2036 = vmul.f32 %v2028, %v1792
        %v2037 = vmul.f32 %v2022, %v2029
        %v2038 = vadd.f32 %v2036, %v2037
        %v2039 = vtanh.pop %v2038
        %v2040 = vmul.f32 %v2035, %v2039
        // Predicated region
        $region77: #{tpu_custom_call.1} parent=39 // pred_check
          %p2041 = pneg %p1303
        $region78: #{tpu_custom_call.1} parent=39 // pred_check_branch
          %2043 = sbr.rel (%p2041) target = $region80
        $region79: #{tpu_custom_call.1} parent=39 // pred_region
          %s2044 = sadd.s32 0, 3
          %s2045 = smul.u32 %s2044, 8
          %s2046 = scalar_lea.vmem [#allocation2], %s2045
          %2047 = vst [vmem:[%s2046] sm:$0xff] %v2040
        $region80: #{tpu_custom_call.1} parent=39 // pred_fallthru
          _
        %s2048 = scalar_lea.vmem [#allocation3], 128
        %v2049 = vld [vmem:[%s2048] sm:$0xff]
        %v2050 = vld [vmem:[%s2048 + $0x8] sm:$0xff]
        %v2051 = vld [vmem:[%s2048 + $0x10] sm:$0xff]
        %v2052 = vld [vmem:[%s2048 + $0x18] sm:$0xff]
        %v2053 = vld [vmem:[%s310] sm:$0xff]
        %v2054 = vld [vmem:[%s310 + $0x8] sm:$0xff]
        %v2055 = vld [vmem:[%s310 + $0x10] sm:$0xff]
        %v2056 = vld [vmem:[%s310 + $0x18] sm:$0xff]
        %v2057 = vld [vmem:[%s310 + $0x20] sm:$0xff]
        %v2058 = vld [vmem:[%s310 + $0x28] sm:$0xff]
        %v2059 = vld [vmem:[%s310 + $0x30] sm:$0xff]
        %v2060 = vld [vmem:[%s310 + $0x38] sm:$0xff]
        %v2061 = vld [vmem:[%s310 + $0x40] sm:$0xff]
        %v2062 = vld [vmem:[%s310 + $0x48] sm:$0xff]
        %v2063 = vld [vmem:[%s310 + $0x50] sm:$0xff]
        %v2064 = vld [vmem:[%s310 + $0x58] sm:$0xff]
        %v2065 = vld [vmem:[%s310 + $0x60] sm:$0xff]
        %v2066 = vld [vmem:[%s310 + $0x68] sm:$0xff]
        %v2067 = vld [vmem:[%s310 + $0x70] sm:$0xff]
        %v2068 = vld [vmem:[%s310 + $0x78] sm:$0xff]
        %v2069 = vld [vmem:[%s310 + $0x80] sm:$0xff]
        %v2070 = vld [vmem:[%s310 + $0x88] sm:$0xff]
        %v2071 = vld [vmem:[%s310 + $0x90] sm:$0xff]
        %v2072 = vld [vmem:[%s310 + $0x98] sm:$0xff]
        %v2073 = vld [vmem:[%s310 + $0xa0] sm:$0xff]
        %v2074 = vld [vmem:[%s310 + $0xa8] sm:$0xff]
        %v2075 = vld [vmem:[%s310 + $0xb0] sm:$0xff]
        %v2076 = vld [vmem:[%s310 + $0xb8] sm:$0xff]
        %v2077 = vld [vmem:[%s310 + $0xc0] sm:$0xff]
        %v2078 = vld [vmem:[%s310 + $0xc8] sm:$0xff]
        %v2079 = vld [vmem:[%s310 + $0xd0] sm:$0xff]
        %v2080 = vld [vmem:[%s310 + $0xd8] sm:$0xff]
        %v2081 = vld [vmem:[%s310 + $0xe0] sm:$0xff]
        %v2082 = vld [vmem:[%s310 + $0xe8] sm:$0xff]
        %v2083 = vld [vmem:[%s310 + $0xf0] sm:$0xff]
        %v2084 = vld [vmem:[%s310 + $0xf8] sm:$0xff]
        %v2085 = vld [vmem:[%s310 + $0x100] sm:$0xff]
        %v2086 = vld [vmem:[%s310 + $0x108] sm:$0xff]
        %v2087 = vld [vmem:[%s310 + $0x110] sm:$0xff]
        %v2088 = vld [vmem:[%s310 + $0x118] sm:$0xff]
        %v2089 = vld [vmem:[%s310 + $0x120] sm:$0xff]
        %v2090 = vld [vmem:[%s310 + $0x128] sm:$0xff]
        %v2091 = vld [vmem:[%s310 + $0x130] sm:$0xff]
        %v2092 = vld [vmem:[%s310 + $0x138] sm:$0xff]
        %v2093 = vld [vmem:[%s310 + $0x140] sm:$0xff]
        %v2094 = vld [vmem:[%s310 + $0x148] sm:$0xff]
        %v2095 = vld [vmem:[%s310 + $0x150] sm:$0xff]
        %v2096 = vld [vmem:[%s310 + $0x158] sm:$0xff]
        %v2097 = vld [vmem:[%s310 + $0x160] sm:$0xff]
        %v2098 = vld [vmem:[%s310 + $0x168] sm:$0xff]
        %v2099 = vld [vmem:[%s310 + $0x170] sm:$0xff]
        %v2100 = vld [vmem:[%s310 + $0x178] sm:$0xff]
        %v2101 = vld [vmem:[%s310 + $0x180] sm:$0xff]
        %v2102 = vld [vmem:[%s310 + $0x188] sm:$0xff]
        %v2103 = vld [vmem:[%s310 + $0x190] sm:$0xff]
        %v2104 = vld [vmem:[%s310 + $0x198] sm:$0xff]
        %v2105 = vld [vmem:[%s310 + $0x1a0] sm:$0xff]
        %v2106 = vld [vmem:[%s310 + $0x1a8] sm:$0xff]
        %v2107 = vld [vmem:[%s310 + $0x1b0] sm:$0xff]
        %v2108 = vld [vmem:[%s310 + $0x1b8] sm:$0xff]
        %v2109 = vld [vmem:[%s310 + $0x1c0] sm:$0xff]
        %v2110 = vld [vmem:[%s310 + $0x1c8] sm:$0xff]
        %v2111 = vld [vmem:[%s310 + $0x1d0] sm:$0xff]
        %v2112 = vld [vmem:[%s310 + $0x1d8] sm:$0xff]
        %v2113 = vld [vmem:[%s310 + $0x1e0] sm:$0xff]
        %v2114 = vld [vmem:[%s310 + $0x1e8] sm:$0xff]
        %v2115 = vld [vmem:[%s310 + $0x1f0] sm:$0xff]
        %v2116 = vld [vmem:[%s310 + $0x1f8] sm:$0xff]
        %2117 = vmatprep.subr.mxu0 %v2054
        %2118 = vmatpush1.msra.mxu0 %v2053
        %2119 = vmatprep.subr.mxu0 %v2058
        %2120 = vmatpush1.msra.mxu0 %v2057
        %2121 = vmatprep.subr.mxu0 %v2062
        %2122 = vmatpush1.msra.mxu0 %v2061
        %2123 = vmatprep.subr.mxu0 %v2066
        %2124 = vmatpush1.msra.mxu0 %v2065
        %2125 = vmatprep.subr.mxu0 %v2070
        %2126 = vmatpush1.msra.mxu0 %v2069
        %2127 = vmatprep.subr.mxu0 %v2074
        %2128 = vmatpush1.msra.mxu0 %v2073
        %2129 = vmatprep.subr.mxu0 %v2078
        %2130 = vmatpush1.msra.mxu0 %v2077
        %2131 = vmatprep.subr.mxu0 %v2082
        %2132 = vmatpush1.msra.mxu0 %v2081
        %2133 = vmatprep.subr.mxu0 %v2086
        %2134 = vmatpush1.msra.mxu0 %v2085
        %2135 = vmatprep.subr.mxu0 %v2090
        %2136 = vmatpush1.msra.mxu0 %v2089
        %2137 = vmatprep.subr.mxu0 %v2094
        %2138 = vmatpush1.msra.mxu0 %v2093
        %2139 = vmatprep.subr.mxu0 %v2098
        %2140 = vmatpush1.msra.mxu0 %v2097
        %2141 = vmatprep.subr.mxu0 %v2102
        %2142 = vmatpush1.msra.mxu0 %v2101
        %2143 = vmatprep.subr.mxu0 %v2106
        %2144 = vmatpush1.msra.mxu0 %v2105
        %2145 = vmatprep.subr.mxu0 %v2110
        %2146 = vmatpush1.msra.mxu0 %v2109
        %2147 = vmatprep.subr.mxu0 %v2114
        %2148 = vmatpush1.msra.mxu0 %v2113
        %2149 = vmatprep.subr.mxu0 0.0
        %2150 = vmatpush1.msra.mxu0 0.0
        %2151 = vmatprep.subr.mxu0 0.0
        %2152 = vmatpush1.msra.mxu0 0.0
        %2153 = vmatprep.subr.mxu0 0.0
        %2154 = vmatpush1.msra.mxu0 0.0
        %2155 = vmatprep.subr.mxu0 0.0
        %2156 = vmatpush1.msra.mxu0 0.0
        %2157 = vmatprep.subr.mxu0 0.0
        %2158 = vmatpush1.msra.mxu0 0.0
        %2159 = vmatprep.subr.mxu0 0.0
        %2160 = vmatpush1.msra.mxu0 0.0
        %2161 = vmatprep.subr.mxu0 0.0
        %2162 = vmatpush1.msra.mxu0 0.0
        %2163 = vmatprep.subr.mxu0 0.0
        %2164 = vmatpush1.msra.mxu0 0.0
        %2165 = vmatprep.subr.mxu0 0.0
        %2166 = vmatpush1.msra.mxu0 0.0
        %2167 = vmatprep.subr.mxu0 0.0
        %2168 = vmatpush1.msra.mxu0 0.0
        %2169 = vmatprep.subr.mxu0 0.0
        %2170 = vmatpush1.msra.mxu0 0.0
        %2171 = vmatprep.subr.mxu0 0.0
        %2172 = vmatpush1.msra.mxu0 0.0
        %2173 = vmatprep.subr.mxu0 0.0
        %2174 = vmatpush1.msra.mxu0 0.0
        %2175 = vmatprep.subr.mxu0 0.0
        %2176 = vmatpush1.msra.mxu0 0.0
        %2177 = vmatprep.subr.mxu0 0.0
        %2178 = vmatpush1.msra.mxu0 0.0
        %2179 = vmatprep.subr.mxu0 0.0
        %2180 = vmatpush1.msra.mxu0 0.0
        %2181 = vmatprep.mubr.f32.mxu0 0.0
        %2182 = vmatmul.mubr.f32.gmra.mrb[0].mxu0 %v2040
        %v2183 = vpop.f32.mrb[0].mxu0
        %v2184 = vadd.f32 0.0, %v2183
        %v2185 = vpop.f32.mrb[0].mxu0
        %v2186 = vadd.f32 0.0, %v2185
        %2187 = vdwg.mxu0
        %2188 = vmatprep.subr.mxu0 %v2056
        %2189 = vmatpush1.msra.mxu0 %v2055
        %2190 = vmatprep.subr.mxu0 %v2060
        %2191 = vmatpush1.msra.mxu0 %v2059
        %2192 = vmatprep.subr.mxu0 %v2064
        %2193 = vmatpush1.msra.mxu0 %v2063
        %2194 = vmatprep.subr.mxu0 %v2068
        %2195 = vmatpush1.msra.mxu0 %v2067
        %2196 = vmatprep.subr.mxu0 %v2072
        %2197 = vmatpush1.msra.mxu0 %v2071
        %2198 = vmatprep.subr.mxu0 %v2076
        %2199 = vmatpush1.msra.mxu0 %v2075
        %2200 = vmatprep.subr.mxu0 %v2080
        %2201 = vmatpush1.msra.mxu0 %v2079
        %2202 = vmatprep.subr.mxu0 %v2084
        %2203 = vmatpush1.msra.mxu0 %v2083
        %2204 = vmatprep.subr.mxu0 %v2088
        %2205 = vmatpush1.msra.mxu0 %v2087
        %2206 = vmatprep.subr.mxu0 %v2092
        %2207 = vmatpush1.msra.mxu0 %v2091
        %2208 = vmatprep.subr.mxu0 %v2096
        %2209 = vmatpush1.msra.mxu0 %v2095
        %2210 = vmatprep.subr.mxu0 %v2100
        %2211 = vmatpush1.msra.mxu0 %v2099
        %2212 = vmatprep.subr.mxu0 %v2104
        %2213 = vmatpush1.msra.mxu0 %v2103
        %2214 = vmatprep.subr.mxu0 %v2108
        %2215 = vmatpush1.msra.mxu0 %v2107
        %2216 = vmatprep.subr.mxu0 %v2112
        %2217 = vmatpush1.msra.mxu0 %v2111
        %2218 = vmatprep.subr.mxu0 %v2116
        %2219 = vmatpush1.msra.mxu0 %v2115
        %2220 = vmatprep.subr.mxu0 0.0
        %2221 = vmatpush1.msra.mxu0 0.0
        %2222 = vmatprep.subr.mxu0 0.0
        %2223 = vmatpush1.msra.mxu0 0.0
        %2224 = vmatprep.subr.mxu0 0.0
        %2225 = vmatpush1.msra.mxu0 0.0
        %2226 = vmatprep.subr.mxu0 0.0
        %2227 = vmatpush1.msra.mxu0 0.0
        %2228 = vmatprep.subr.mxu0 0.0
        %2229 = vmatpush1.msra.mxu0 0.0
        %2230 = vmatprep.subr.mxu0 0.0
        %2231 = vmatpush1.msra.mxu0 0.0
        %2232 = vmatprep.subr.mxu0 0.0
        %2233 = vmatpush1.msra.mxu0 0.0
        %2234 = vmatprep.subr.mxu0 0.0
        %2235 = vmatpush1.msra.mxu0 0.0
        %2236 = vmatprep.subr.mxu0 0.0
        %2237 = vmatpush1.msra.mxu0 0.0
        %2238 = vmatprep.subr.mxu0 0.0
        %2239 = vmatpush1.msra.mxu0 0.0
        %2240 = vmatprep.subr.mxu0 0.0
        %2241 = vmatpush1.msra.mxu0 0.0
        %2242 = vmatprep.subr.mxu0 0.0
        %2243 = vmatpush1.msra.mxu0 0.0
        %2244 = vmatprep.subr.mxu0 0.0
        %2245 = vmatpush1.msra.mxu0 0.0
        %2246 = vmatprep.subr.mxu0 0.0
        %2247 = vmatpush1.msra.mxu0 0.0
        %2248 = vmatprep.subr.mxu0 0.0
        %2249 = vmatpush1.msra.mxu0 0.0
        %2250 = vmatprep.subr.mxu0 0.0
        %2251 = vmatpush1.msra.mxu0 0.0
        %2252 = vmatprep.mubr.f32.mxu0 0.0
        %2253 = vmatmul.mubr.f32.gmra.mrb[0].mxu0 %v2040
        %v2254 = vpop.f32.mrb[0].mxu0
        %v2255 = vadd.f32 0.0, %v2254
        %v2256 = vpop.f32.mrb[0].mxu0
        %v2257 = vadd.f32 0.0, %v2256
        %2258 = vdwg.mxu0
        %v2259 = vadd.f32 %v2049, %v2184
        %v2260 = vadd.f32 %v2050, %v2186
        %v2261 = vadd.f32 %v2051, %v2255
        %v2262 = vadd.f32 %v2052, %v2257
        %v2263 = vxor.u32 %v2259, 2147483648
        %v2264 = vmul.f32 %v2263, 1.442695
        %v2265 = vpow.pop %v2264
        %v2266 = vadd.f32 %v2265, 1.0
        %v2267 = vrcp.pop %v2266
        %v2268 = vmul.f32 1.0, %v2267
        %v2269 = vxor.u32 %v2260, 2147483648
        %v2270 = vmul.f32 %v2269, 1.442695
        %v2271 = vpow.pop %v2270
        %v2272 = vadd.f32 %v2271, 1.0
        %v2273 = vrcp.pop %v2272
        %v2274 = vmul.f32 1.0, %v2273
        %v2275 = vtanh.pop %v2261
        %v2276 = vxor.u32 %v2262, 2147483648
        %v2277 = vmul.f32 %v2276, 1.442695
        %v2278 = vpow.pop %v2277
        %v2279 = vadd.f32 %v2278, 1.0
        %v2280 = vrcp.pop %v2279
        %v2281 = vmul.f32 1.0, %v2280
        %v2282 = vmul.f32 %v2274, %v2038
        %v2283 = vmul.f32 %v2268, %v2275
        %v2284 = vadd.f32 %v2282, %v2283
        %v2285 = vtanh.pop %v2284
        %v2286 = vmul.f32 %v2281, %v2285
        // Predicated region
        $region81: #{tpu_custom_call.1} parent=39 // pred_check
          %p2287 = pneg %p1303
        $region82: #{tpu_custom_call.1} parent=39 // pred_check_branch
          %2289 = sbr.rel (%p2287) target = $region84
        $region83: #{tpu_custom_call.1} parent=39 // pred_region
          %s2290 = sadd.s32 0, 4
          %s2291 = smul.u32 %s2290, 8
          %s2292 = scalar_lea.vmem [#allocation2], %s2291
          %2293 = vst [vmem:[%s2292] sm:$0xff] %v2286
        $region84: #{tpu_custom_call.1} parent=39 // pred_fallthru
          _
        %s2294 = scalar_lea.vmem [#allocation3], 160
        %v2295 = vld [vmem:[%s2294] sm:$0xff]
        %v2296 = vld [vmem:[%s2294 + $0x8] sm:$0xff]
        %v2297 = vld [vmem:[%s2294 + $0x10] sm:$0xff]
        %v2298 = vld [vmem:[%s2294 + $0x18] sm:$0xff]
        %v2299 = vld [vmem:[%s310] sm:$0xff]
        %v2300 = vld [vmem:[%s310 + $0x8] sm:$0xff]
        %v2301 = vld [vmem:[%s310 + $0x10] sm:$0xff]
        %v2302 = vld [vmem:[%s310 + $0x18] sm:$0xff]
        %v2303 = vld [vmem:[%s310 + $0x20] sm:$0xff]
        %v2304 = vld [vmem:[%s310 + $0x28] sm:$0xff]
        %v2305 = vld [vmem:[%s310 + $0x30] sm:$0xff]
        %v2306 = vld [vmem:[%s310 + $0x38] sm:$0xff]
        %v2307 = vld [vmem:[%s310 + $0x40] sm:$0xff]
        %v2308 = vld [vmem:[%s310 + $0x48] sm:$0xff]
        %v2309 = vld [vmem:[%s310 + $0x50] sm:$0xff]
        %v2310 = vld [vmem:[%s310 + $0x58] sm:$0xff]
        %v2311 = vld [vmem:[%s310 + $0x60] sm:$0xff]
        %v2312 = vld [vmem:[%s310 + $0x68] sm:$0xff]
        %v2313 = vld [vmem:[%s310 + $0x70] sm:$0xff]
        %v2314 = vld [vmem:[%s310 + $0x78] sm:$0xff]
        %v2315 = vld [vmem:[%s310 + $0x80] sm:$0xff]
        %v2316 = vld [vmem:[%s310 + $0x88] sm:$0xff]
        %v2317 = vld [vmem:[%s310 + $0x90] sm:$0xff]
        %v2318 = vld [vmem:[%s310 + $0x98] sm:$0xff]
        %v2319 = vld [vmem:[%s310 + $0xa0] sm:$0xff]
        %v2320 = vld [vmem:[%s310 + $0xa8] sm:$0xff]
        %v2321 = vld [vmem:[%s310 + $0xb0] sm:$0xff]
        %v2322 = vld [vmem:[%s310 + $0xb8] sm:$0xff]
        %v2323 = vld [vmem:[%s310 + $0xc0] sm:$0xff]
        %v2324 = vld [vmem:[%s310 + $0xc8] sm:$0xff]
        %v2325 = vld [vmem:[%s310 + $0xd0] sm:$0xff]
        %v2326 = vld [vmem:[%s310 + $0xd8] sm:$0xff]
        %v2327 = vld [vmem:[%s310 + $0xe0] sm:$0xff]
        %v2328 = vld [vmem:[%s310 + $0xe8] sm:$0xff]
        %v2329 = vld [vmem:[%s310 + $0xf0] sm:$0xff]
        %v2330 = vld [vmem:[%s310 + $0xf8] sm:$0xff]
        %v2331 = vld [vmem:[%s310 + $0x100] sm:$0xff]
        %v2332 = vld [vmem:[%s310 + $0x108] sm:$0xff]
        %v2333 = vld [vmem:[%s310 + $0x110] sm:$0xff]
        %v2334 = vld [vmem:[%s310 + $0x118] sm:$0xff]
        %v2335 = vld [vmem:[%s310 + $0x120] sm:$0xff]
        %v2336 = vld [vmem:[%s310 + $0x128] sm:$0xff]
        %v2337 = vld [vmem:[%s310 + $0x130] sm:$0xff]
        %v2338 = vld [vmem:[%s310 + $0x138] sm:$0xff]
        %v2339 = vld [vmem:[%s310 + $0x140] sm:$0xff]
        %v2340 = vld [vmem:[%s310 + $0x148] sm:$0xff]
        %v2341 = vld [vmem:[%s310 + $0x150] sm:$0xff]
        %v2342 = vld [vmem:[%s310 + $0x158] sm:$0xff]
        %v2343 = vld [vmem:[%s310 + $0x160] sm:$0xff]
        %v2344 = vld [vmem:[%s310 + $0x168] sm:$0xff]
        %v2345 = vld [vmem:[%s310 + $0x170] sm:$0xff]
        %v2346 = vld [vmem:[%s310 + $0x178] sm:$0xff]
        %v2347 = vld [vmem:[%s310 + $0x180] sm:$0xff]
        %v2348 = vld [vmem:[%s310 + $0x188] sm:$0xff]
        %v2349 = vld [vmem:[%s310 + $0x190] sm:$0xff]
        %v2350 = vld [vmem:[%s310 + $0x198] sm:$0xff]
        %v2351 = vld [vmem:[%s310 + $0x1a0] sm:$0xff]
        %v2352 = vld [vmem:[%s310 + $0x1a8] sm:$0xff]
        %v2353 = vld [vmem:[%s310 + $0x1b0] sm:$0xff]
        %v2354 = vld [vmem:[%s310 + $0x1b8] sm:$0xff]
        %v2355 = vld [vmem:[%s310 + $0x1c0] sm:$0xff]
        %v2356 = vld [vmem:[%s310 + $0x1c8] sm:$0xff]
        %v2357 = vld [vmem:[%s310 + $0x1d0] sm:$0xff]
        %v2358 = vld [vmem:[%s310 + $0x1d8] sm:$0xff]
        %v2359 = vld [vmem:[%s310 + $0x1e0] sm:$0xff]
        %v2360 = vld [vmem:[%s310 + $0x1e8] sm:$0xff]
        %v2361 = vld [vmem:[%s310 + $0x1f0] sm:$0xff]
        %v2362 = vld [vmem:[%s310 + $0x1f8] sm:$0xff]
        %2363 = vmatprep.subr.mxu0 %v2300
        %2364 = vmatpush1.msra.mxu0 %v2299
        %2365 = vmatprep.subr.mxu0 %v2304
        %2366 = vmatpush1.msra.mxu0 %v2303
        %2367 = vmatprep.subr.mxu0 %v2308
        %2368 = vmatpush1.msra.mxu0 %v2307
        %2369 = vmatprep.subr.mxu0 %v2312
        %2370 = vmatpush1.msra.mxu0 %v2311
        %2371 = vmatprep.subr.mxu0 %v2316
        %2372 = vmatpush1.msra.mxu0 %v2315
        %2373 = vmatprep.subr.mxu0 %v2320
        %2374 = vmatpush1.msra.mxu0 %v2319
        %2375 = vmatprep.subr.mxu0 %v2324
        %2376 = vmatpush1.msra.mxu0 %v2323
        %2377 = vmatprep.subr.mxu0 %v2328
        %2378 = vmatpush1.msra.mxu0 %v2327
        %2379 = vmatprep.subr.mxu0 %v2332
        %2380 = vmatpush1.msra.mxu0 %v2331
        %2381 = vmatprep.subr.mxu0 %v2336
        %2382 = vmatpush1.msra.mxu0 %v2335
        %2383 = vmatprep.subr.mxu0 %v2340
        %2384 = vmatpush1.msra.mxu0 %v2339
        %2385 = vmatprep.subr.mxu0 %v2344
        %2386 = vmatpush1.msra.mxu0 %v2343
        %2387 = vmatprep.subr.mxu0 %v2348
        %2388 = vmatpush1.msra.mxu0 %v2347
        %2389 = vmatprep.subr.mxu0 %v2352
        %2390 = vmatpush1.msra.mxu0 %v2351
        %2391 = vmatprep.subr.mxu0 %v2356
        %2392 = vmatpush1.msra.mxu0 %v2355
        %2393 = vmatprep.subr.mxu0 %v2360
        %2394 = vmatpush1.msra.mxu0 %v2359
        %2395 = vmatprep.subr.mxu0 0.0
        %2396 = vmatpush1.msra.mxu0 0.0
        %2397 = vmatprep.subr.mxu0 0.0
        %2398 = vmatpush1.msra.mxu0 0.0
        %2399 = vmatprep.subr.mxu0 0.0
        %2400 = vmatpush1.msra.mxu0 0.0
        %2401 = vmatprep.subr.mxu0 0.0
        %2402 = vmatpush1.msra.mxu0 0.0
        %2403 = vmatprep.subr.mxu0 0.0
        %2404 = vmatpush1.msra.mxu0 0.0
        %2405 = vmatprep.subr.mxu0 0.0
        %2406 = vmatpush1.msra.mxu0 0.0
        %2407 = vmatprep.subr.mxu0 0.0
        %2408 = vmatpush1.msra.mxu0 0.0
        %2409 = vmatprep.subr.mxu0 0.0
        %2410 = vmatpush1.msra.mxu0 0.0
        %2411 = vmatprep.subr.mxu0 0.0
        %2412 = vmatpush1.msra.mxu0 0.0
        %2413 = vmatprep.subr.mxu0 0.0
        %2414 = vmatpush1.msra.mxu0 0.0
        %2415 = vmatprep.subr.mxu0 0.0
        %2416 = vmatpush1.msra.mxu0 0.0
        %2417 = vmatprep.subr.mxu0 0.0
        %2418 = vmatpush1.msra.mxu0 0.0
        %2419 = vmatprep.subr.mxu0 0.0
        %2420 = vmatpush1.msra.mxu0 0.0
        %2421 = vmatprep.subr.mxu0 0.0
        %2422 = vmatpush1.msra.mxu0 0.0
        %2423 = vmatprep.subr.mxu0 0.0
        %2424 = vmatpush1.msra.mxu0 0.0
        %2425 = vmatprep.subr.mxu0 0.0
        %2426 = vmatpush1.msra.mxu0 0.0
        %2427 = vmatprep.mubr.f32.mxu0 0.0
        %2428 = vmatmul.mubr.f32.gmra.mrb[0].mxu0 %v2286
        %v2429 = vpop.f32.mrb[0].mxu0
        %v2430 = vadd.f32 0.0, %v2429
        %v2431 = vpop.f32.mrb[0].mxu0
        %v2432 = vadd.f32 0.0, %v2431
        %2433 = vdwg.mxu0
        %2434 = vmatprep.subr.mxu0 %v2302
        %2435 = vmatpush1.msra.mxu0 %v2301
        %2436 = vmatprep.subr.mxu0 %v2306
        %2437 = vmatpush1.msra.mxu0 %v2305
        %2438 = vmatprep.subr.mxu0 %v2310
        %2439 = vmatpush1.msra.mxu0 %v2309
        %2440 = vmatprep.subr.mxu0 %v2314
        %2441 = vmatpush1.msra.mxu0 %v2313
        %2442 = vmatprep.subr.mxu0 %v2318
        %2443 = vmatpush1.msra.mxu0 %v2317
        %2444 = vmatprep.subr.mxu0 %v2322
        %2445 = vmatpush1.msra.mxu0 %v2321
        %2446 = vmatprep.subr.mxu0 %v2326
        %2447 = vmatpush1.msra.mxu0 %v2325
        %2448 = vmatprep.subr.mxu0 %v2330
        %2449 = vmatpush1.msra.mxu0 %v2329
        %2450 = vmatprep.subr.mxu0 %v2334
        %2451 = vmatpush1.msra.mxu0 %v2333
        %2452 = vmatprep.subr.mxu0 %v2338
        %2453 = vmatpush1.msra.mxu0 %v2337
        %2454 = vmatprep.subr.mxu0 %v2342
        %2455 = vmatpush1.msra.mxu0 %v2341
        %2456 = vmatprep.subr.mxu0 %v2346
        %2457 = vmatpush1.msra.mxu0 %v2345
        %2458 = vmatprep.subr.mxu0 %v2350
        %2459 = vmatpush1.msra.mxu0 %v2349
        %2460 = vmatprep.subr.mxu0 %v2354
        %2461 = vmatpush1.msra.mxu0 %v2353
        %2462 = vmatprep.subr.mxu0 %v2358
        %2463 = vmatpush1.msra.mxu0 %v2357
        %2464 = vmatprep.subr.mxu0 %v2362
        %2465 = vmatpush1.msra.mxu0 %v2361
        %2466 = vmatprep.subr.mxu0 0.0
        %2467 = vmatpush1.msra.mxu0 0.0
        %2468 = vmatprep.subr.mxu0 0.0
        %2469 = vmatpush1.msra.mxu0 0.0
        %2470 = vmatprep.subr.mxu0 0.0
        %2471 = vmatpush1.msra.mxu0 0.0
        %2472 = vmatprep.subr.mxu0 0.0
        %2473 = vmatpush1.msra.mxu0 0.0
        %2474 = vmatprep.subr.mxu0 0.0
        %2475 = vmatpush1.msra.mxu0 0.0
        %2476 = vmatprep.subr.mxu0 0.0
        %2477 = vmatpush1.msra.mxu0 0.0
        %2478 = vmatprep.subr.mxu0 0.0
        %2479 = vmatpush1.msra.mxu0 0.0
        %2480 = vmatprep.subr.mxu0 0.0
        %2481 = vmatpush1.msra.mxu0 0.0
        %2482 = vmatprep.subr.mxu0 0.0
        %2483 = vmatpush1.msra.mxu0 0.0
        %2484 = vmatprep.subr.mxu0 0.0
        %2485 = vmatpush1.msra.mxu0 0.0
        %2486 = vmatprep.subr.mxu0 0.0
        %2487 = vmatpush1.msra.mxu0 0.0
        %2488 = vmatprep.subr.mxu0 0.0
        %2489 = vmatpush1.msra.mxu0 0.0
        %2490 = vmatprep.subr.mxu0 0.0
        %2491 = vmatpush1.msra.mxu0 0.0
        %2492 = vmatprep.subr.mxu0 0.0
        %2493 = vmatpush1.msra.mxu0 0.0
        %2494 = vmatprep.subr.mxu0 0.0
        %2495 = vmatpush1.msra.mxu0 0.0
        %2496 = vmatprep.subr.mxu0 0.0
        %2497 = vmatpush1.msra.mxu0 0.0
        %2498 = vmatprep.mubr.f32.mxu0 0.0
        %2499 = vmatmul.mubr.f32.gmra.mrb[0].mxu0 %v2286
        %v2500 = vpop.f32.mrb[0].mxu0
        %v2501 = vadd.f32 0.0, %v2500
        %v2502 = vpop.f32.mrb[0].mxu0
        %v2503 = vadd.f32 0.0, %v2502
        %2504 = vdwg.mxu0
        %v2505 = vadd.f32 %v2295, %v2430
        %v2506 = vadd.f32 %v2296, %v2432
        %v2507 = vadd.f32 %v2297, %v2501
        %v2508 = vadd.f32 %v2298, %v2503
        %v2509 = vxor.u32 %v2505, 2147483648
        %v2510 = vmul.f32 %v2509, 1.442695
        %v2511 = vpow.pop %v2510
        %v2512 = vadd.f32 %v2511, 1.0
        %v2513 = vrcp.pop %v2512
        %v2514 = vmul.f32 1.0, %v2513
        %v2515 = vxor.u32 %v2506, 2147483648
        %v2516 = vmul.f32 %v2515, 1.442695
        %v2517 = vpow.pop %v2516
        %v2518 = vadd.f32 %v2517, 1.0
        %v2519 = vrcp.pop %v2518
        %v2520 = vmul.f32 1.0, %v2519
        %v2521 = vtanh.pop %v2507
        %v2522 = vxor.u32 %v2508, 2147483648
        %v2523 = vmul.f32 %v2522, 1.442695
        %v2524 = vpow.pop %v2523
        %v2525 = vadd.f32 %v2524, 1.0
        %v2526 = vrcp.pop %v2525
        %v2527 = vmul.f32 1.0, %v2526
        %v2528 = vmul.f32 %v2520, %v2284
        %v2529 = vmul.f32 %v2514, %v2521
        %v2530 = vadd.f32 %v2528, %v2529
        %v2531 = vtanh.pop %v2530
        %v2532 = vmul.f32 %v2527, %v2531
        // Predicated region
        $region85: #{tpu_custom_call.1} parent=39 // pred_check
          %p2533 = pneg %p1303
        $region86: #{tpu_custom_call.1} parent=39 // pred_check_branch
          %2535 = sbr.rel (%p2533) target = $region88
        $region87: #{tpu_custom_call.1} parent=39 // pred_region
          %s2536 = sadd.s32 0, 5
          %s2537 = smul.u32 %s2536, 8
          %s2538 = scalar_lea.vmem [#allocation2], %s2537
          %2539 = vst [vmem:[%s2538] sm:$0xff] %v2532
        $region88: #{tpu_custom_call.1} parent=39 // pred_fallthru
          _
        %s2540 = scalar_lea.vmem [#allocation3], 192
        %v2541 = vld [vmem:[%s2540] sm:$0xff]
        %v2542 = vld [vmem:[%s2540 + $0x8] sm:$0xff]
        %v2543 = vld [vmem:[%s2540 + $0x10] sm:$0xff]
        %v2544 = vld [vmem:[%s2540 + $0x18] sm:$0xff]
        %v2545 = vld [vmem:[%s310] sm:$0xff]
        %v2546 = vld [vmem:[%s310 + $0x8] sm:$0xff]
        %v2547 = vld [vmem:[%s310 + $0x10] sm:$0xff]
        %v2548 = vld [vmem:[%s310 + $0x18] sm:$0xff]
        %v2549 = vld [vmem:[%s310 + $0x20] sm:$0xff]
        %v2550 = vld [vmem:[%s310 + $0x28] sm:$0xff]
        %v2551 = vld [vmem:[%s310 + $0x30] sm:$0xff]
        %v2552 = vld [vmem:[%s310 + $0x38] sm:$0xff]
        %v2553 = vld [vmem:[%s310 + $0x40] sm:$0xff]
        %v2554 = vld [vmem:[%s310 + $0x48] sm:$0xff]
        %v2555 = vld [vmem:[%s310 + $0x50] sm:$0xff]
        %v2556 = vld [vmem:[%s310 + $0x58] sm:$0xff]
        %v2557 = vld [vmem:[%s310 + $0x60] sm:$0xff]
        %v2558 = vld [vmem:[%s310 + $0x68] sm:$0xff]
        %v2559 = vld [vmem:[%s310 + $0x70] sm:$0xff]
        %v2560 = vld [vmem:[%s310 + $0x78] sm:$0xff]
        %v2561 = vld [vmem:[%s310 + $0x80] sm:$0xff]
        %v2562 = vld [vmem:[%s310 + $0x88] sm:$0xff]
        %v2563 = vld [vmem:[%s310 + $0x90] sm:$0xff]
        %v2564 = vld [vmem:[%s310 + $0x98] sm:$0xff]
        %v2565 = vld [vmem:[%s310 + $0xa0] sm:$0xff]
        %v2566 = vld [vmem:[%s310 + $0xa8] sm:$0xff]
        %v2567 = vld [vmem:[%s310 + $0xb0] sm:$0xff]
        %v2568 = vld [vmem:[%s310 + $0xb8] sm:$0xff]
        %v2569 = vld [vmem:[%s310 + $0xc0] sm:$0xff]
        %v2570 = vld [vmem:[%s310 + $0xc8] sm:$0xff]
        %v2571 = vld [vmem:[%s310 + $0xd0] sm:$0xff]
        %v2572 = vld [vmem:[%s310 + $0xd8] sm:$0xff]
        %v2573 = vld [vmem:[%s310 + $0xe0] sm:$0xff]
        %v2574 = vld [vmem:[%s310 + $0xe8] sm:$0xff]
        %v2575 = vld [vmem:[%s310 + $0xf0] sm:$0xff]
        %v2576 = vld [vmem:[%s310 + $0xf8] sm:$0xff]
        %v2577 = vld [vmem:[%s310 + $0x100] sm:$0xff]
        %v2578 = vld [vmem:[%s310 + $0x108] sm:$0xff]
        %v2579 = vld [vmem:[%s310 + $0x110] sm:$0xff]
        %v2580 = vld [vmem:[%s310 + $0x118] sm:$0xff]
        %v2581 = vld [vmem:[%s310 + $0x120] sm:$0xff]
        %v2582 = vld [vmem:[%s310 + $0x128] sm:$0xff]
        %v2583 = vld [vmem:[%s310 + $0x130] sm:$0xff]
        %v2584 = vld [vmem:[%s310 + $0x138] sm:$0xff]
        %v2585 = vld [vmem:[%s310 + $0x140] sm:$0xff]
        %v2586 = vld [vmem:[%s310 + $0x148] sm:$0xff]
        %v2587 = vld [vmem:[%s310 + $0x150] sm:$0xff]
        %v2588 = vld [vmem:[%s310 + $0x158] sm:$0xff]
        %v2589 = vld [vmem:[%s310 + $0x160] sm:$0xff]
        %v2590 = vld [vmem:[%s310 + $0x168] sm:$0xff]
        %v2591 = vld [vmem:[%s310 + $0x170] sm:$0xff]
        %v2592 = vld [vmem:[%s310 + $0x178] sm:$0xff]
        %v2593 = vld [vmem:[%s310 + $0x180] sm:$0xff]
        %v2594 = vld [vmem:[%s310 + $0x188] sm:$0xff]
        %v2595 = vld [vmem:[%s310 + $0x190] sm:$0xff]
        %v2596 = vld [vmem:[%s310 + $0x198] sm:$0xff]
        %v2597 = vld [vmem:[%s310 + $0x1a0] sm:$0xff]
        %v2598 = vld [vmem:[%s310 + $0x1a8] sm:$0xff]
        %v2599 = vld [vmem:[%s310 + $0x1b0] sm:$0xff]
        %v2600 = vld [vmem:[%s310 + $0x1b8] sm:$0xff]
        %v2601 = vld [vmem:[%s310 + $0x1c0] sm:$0xff]
        %v2602 = vld [vmem:[%s310 + $0x1c8] sm:$0xff]
        %v2603 = vld [vmem:[%s310 + $0x1d0] sm:$0xff]
        %v2604 = vld [vmem:[%s310 + $0x1d8] sm:$0xff]
        %v2605 = vld [vmem:[%s310 + $0x1e0] sm:$0xff]
        %v2606 = vld [vmem:[%s310 + $0x1e8] sm:$0xff]
        %v2607 = vld [vmem:[%s310 + $0x1f0] sm:$0xff]
        %v2608 = vld [vmem:[%s310 + $0x1f8] sm:$0xff]
        %2609 = vmatprep.subr.mxu0 %v2546
        %2610 = vmatpush1.msra.mxu0 %v2545
        %2611 = vmatprep.subr.mxu0 %v2550
        %2612 = vmatpush1.msra.mxu0 %v2549
        %2613 = vmatprep.subr.mxu0 %v2554
        %2614 = vmatpush1.msra.mxu0 %v2553
        %2615 = vmatprep.subr.mxu0 %v2558
        %2616 = vmatpush1.msra.mxu0 %v2557
        %2617 = vmatprep.subr.mxu0 %v2562
        %2618 = vmatpush1.msra.mxu0 %v2561
        %2619 = vmatprep.subr.mxu0 %v2566
        %2620 = vmatpush1.msra.mxu0 %v2565
        %2621 = vmatprep.subr.mxu0 %v2570
        %2622 = vmatpush1.msra.mxu0 %v2569
        %2623 = vmatprep.subr.mxu0 %v2574
        %2624 = vmatpush1.msra.mxu0 %v2573
        %2625 = vmatprep.subr.mxu0 %v2578
        %2626 = vmatpush1.msra.mxu0 %v2577
        %2627 = vmatprep.subr.mxu0 %v2582
        %2628 = vmatpush1.msra.mxu0 %v2581
        %2629 = vmatprep.subr.mxu0 %v2586
        %2630 = vmatpush1.msra.mxu0 %v2585
        %2631 = vmatprep.subr.mxu0 %v2590
        %2632 = vmatpush1.msra.mxu0 %v2589
        %2633 = vmatprep.subr.mxu0 %v2594
        %2634 = vmatpush1.msra.mxu0 %v2593
        %2635 = vmatprep.subr.mxu0 %v2598
        %2636 = vmatpush1.msra.mxu0 %v2597
        %2637 = vmatprep.subr.mxu0 %v2602
        %2638 = vmatpush1.msra.mxu0 %v2601
        %2639 = vmatprep.subr.mxu0 %v2606
        %2640 = vmatpush1.msra.mxu0 %v2605
        %2641 = vmatprep.subr.mxu0 0.0
        %2642 = vmatpush1.msra.mxu0 0.0
        %2643 = vmatprep.subr.mxu0 0.0
        %2644 = vmatpush1.msra.mxu0 0.0
        %2645 = vmatprep.subr.mxu0 0.0
        %2646 = vmatpush1.msra.mxu0 0.0
        %2647 = vmatprep.subr.mxu0 0.0
        %2648 = vmatpush1.msra.mxu0 0.0
        %2649 = vmatprep.subr.mxu0 0.0
        %2650 = vmatpush1.msra.mxu0 0.0
        %2651 = vmatprep.subr.mxu0 0.0
        %2652 = vmatpush1.msra.mxu0 0.0
        %2653 = vmatprep.subr.mxu0 0.0
        %2654 = vmatpush1.msra.mxu0 0.0
        %2655 = vmatprep.subr.mxu0 0.0
        %2656 = vmatpush1.msra.mxu0 0.0
        %2657 = vmatprep.subr.mxu0 0.0
        %2658 = vmatpush1.msra.mxu0 0.0
        %2659 = vmatprep.subr.mxu0 0.0
        %2660 = vmatpush1.msra.mxu0 0.0
        %2661 = vmatprep.subr.mxu0 0.0
        %2662 = vmatpush1.msra.mxu0 0.0
        %2663 = vmatprep.subr.mxu0 0.0
        %2664 = vmatpush1.msra.mxu0 0.0
        %2665 = vmatprep.subr.mxu0 0.0
        %2666 = vmatpush1.msra.mxu0 0.0
        %2667 = vmatprep.subr.mxu0 0.0
        %2668 = vmatpush1.msra.mxu0 0.0
        %2669 = vmatprep.subr.mxu0 0.0
        %2670 = vmatpush1.msra.mxu0 0.0
        %2671 = vmatprep.subr.mxu0 0.0
        %2672 = vmatpush1.msra.mxu0 0.0
        %2673 = vmatprep.mubr.f32.mxu0 0.0
        %2674 = vmatmul.mubr.f32.gmra.mrb[0].mxu0 %v2532
        %v2675 = vpop.f32.mrb[0].mxu0
        %v2676 = vadd.f32 0.0, %v2675
        %v2677 = vpop.f32.mrb[0].mxu0
        %v2678 = vadd.f32 0.0, %v2677
        %2679 = vdwg.mxu0
        %2680 = vmatprep.subr.mxu0 %v2548
        %2681 = vmatpush1.msra.mxu0 %v2547
        %2682 = vmatprep.subr.mxu0 %v2552
        %2683 = vmatpush1.msra.mxu0 %v2551
        %2684 = vmatprep.subr.mxu0 %v2556
        %2685 = vmatpush1.msra.mxu0 %v2555
        %2686 = vmatprep.subr.mxu0 %v2560
        %2687 = vmatpush1.msra.mxu0 %v2559
        %2688 = vmatprep.subr.mxu0 %v2564
        %2689 = vmatpush1.msra.mxu0 %v2563
        %2690 = vmatprep.subr.mxu0 %v2568
        %2691 = vmatpush1.msra.mxu0 %v2567
        %2692 = vmatprep.subr.mxu0 %v2572
        %2693 = vmatpush1.msra.mxu0 %v2571
        %2694 = vmatprep.subr.mxu0 %v2576
        %2695 = vmatpush1.msra.mxu0 %v2575
        %2696 = vmatprep.subr.mxu0 %v2580
        %2697 = vmatpush1.msra.mxu0 %v2579
        %2698 = vmatprep.subr.mxu0 %v2584
        %2699 = vmatpush1.msra.mxu0 %v2583
        %2700 = vmatprep.subr.mxu0 %v2588
        %2701 = vmatpush1.msra.mxu0 %v2587
        %2702 = vmatprep.subr.mxu0 %v2592
        %2703 = vmatpush1.msra.mxu0 %v2591
        %2704 = vmatprep.subr.mxu0 %v2596
        %2705 = vmatpush1.msra.mxu0 %v2595
        %2706 = vmatprep.subr.mxu0 %v2600
        %2707 = vmatpush1.msra.mxu0 %v2599
        %2708 = vmatprep.subr.mxu0 %v2604
        %2709 = vmatpush1.msra.mxu0 %v2603
        %2710 = vmatprep.subr.mxu0 %v2608
        %2711 = vmatpush1.msra.mxu0 %v2607
        %2712 = vmatprep.subr.mxu0 0.0
        %2713 = vmatpush1.msra.mxu0 0.0
        %2714 = vmatprep.subr.mxu0 0.0
        %2715 = vmatpush1.msra.mxu0 0.0
        %2716 = vmatprep.subr.mxu0 0.0
        %2717 = vmatpush1.msra.mxu0 0.0
        %2718 = vmatprep.subr.mxu0 0.0
        %2719 = vmatpush1.msra.mxu0 0.0
        %2720 = vmatprep.subr.mxu0 0.0
        %2721 = vmatpush1.msra.mxu0 0.0
        %2722 = vmatprep.subr.mxu0 0.0
        %2723 = vmatpush1.msra.mxu0 0.0
        %2724 = vmatprep.subr.mxu0 0.0
        %2725 = vmatpush1.msra.mxu0 0.0
        %2726 = vmatprep.subr.mxu0 0.0
        %2727 = vmatpush1.msra.mxu0 0.0
        %2728 = vmatprep.subr.mxu0 0.0
        %2729 = vmatpush1.msra.mxu0 0.0
        %2730 = vmatprep.subr.mxu0 0.0
        %2731 = vmatpush1.msra.mxu0 0.0
        %2732 = vmatprep.subr.mxu0 0.0
        %2733 = vmatpush1.msra.mxu0 0.0
        %2734 = vmatprep.subr.mxu0 0.0
        %2735 = vmatpush1.msra.mxu0 0.0
        %2736 = vmatprep.subr.mxu0 0.0
        %2737 = vmatpush1.msra.mxu0 0.0
        %2738 = vmatprep.subr.mxu0 0.0
        %2739 = vmatpush1.msra.mxu0 0.0
        %2740 = vmatprep.subr.mxu0 0.0
        %2741 = vmatpush1.msra.mxu0 0.0
        %2742 = vmatprep.subr.mxu0 0.0
        %2743 = vmatpush1.msra.mxu0 0.0
        %2744 = vmatprep.mubr.f32.mxu0 0.0
        %2745 = vmatmul.mubr.f32.gmra.mrb[0].mxu0 %v2532
        %v2746 = vpop.f32.mrb[0].mxu0
        %v2747 = vadd.f32 0.0, %v2746
        %v2748 = vpop.f32.mrb[0].mxu0
        %v2749 = vadd.f32 0.0, %v2748
        %2750 = vdwg.mxu0
        %v2751 = vadd.f32 %v2541, %v2676
        %v2752 = vadd.f32 %v2542, %v2678
        %v2753 = vadd.f32 %v2543, %v2747
        %v2754 = vadd.f32 %v2544, %v2749
        %v2755 = vxor.u32 %v2751, 2147483648
        %v2756 = vmul.f32 %v2755, 1.442695
        %v2757 = vpow.pop %v2756
        %v2758 = vadd.f32 %v2757, 1.0
        %v2759 = vrcp.pop %v2758
        %v2760 = vmul.f32 1.0, %v2759
        %v2761 = vxor.u32 %v2752, 2147483648
        %v2762 = vmul.f32 %v2761, 1.442695
        %v2763 = vpow.pop %v2762
        %v2764 = vadd.f32 %v2763, 1.0
        %v2765 = vrcp.pop %v2764
        %v2766 = vmul.f32 1.0, %v2765
        %v2767 = vtanh.pop %v2753
        %v2768 = vxor.u32 %v2754, 2147483648
        %v2769 = vmul.f32 %v2768, 1.442695
        %v2770 = vpow.pop %v2769
        %v2771 = vadd.f32 %v2770, 1.0
        %v2772 = vrcp.pop %v2771
        %v2773 = vmul.f32 1.0, %v2772
        %v2774 = vmul.f32 %v2766, %v2530
        %v2775 = vmul.f32 %v2760, %v2767
        %v2776 = vadd.f32 %v2774, %v2775
        %v2777 = vtanh.pop %v2776
        %v2778 = vmul.f32 %v2773, %v2777
        // Predicated region
        $region89: #{tpu_custom_call.1} parent=39 // pred_check
          %p2779 = pneg %p1303
        $region90: #{tpu_custom_call.1} parent=39 // pred_check_branch
          %2781 = sbr.rel (%p2779) target = $region92
        $region91: #{tpu_custom_call.1} parent=39 // pred_region
          %s2782 = sadd.s32 0, 6
          %s2783 = smul.u32 %s2782, 8
          %s2784 = scalar_lea.vmem [#allocation2], %s2783
          %2785 = vst [vmem:[%s2784] sm:$0xff] %v2778
        $region92: #{tpu_custom_call.1} parent=39 // pred_fallthru
          _
        %s2786 = scalar_lea.vmem [#allocation3], 224
        %v2787 = vld [vmem:[%s2786] sm:$0xff]
        %v2788 = vld [vmem:[%s2786 + $0x8] sm:$0xff]
        %v2789 = vld [vmem:[%s2786 + $0x10] sm:$0xff]
        %v2790 = vld [vmem:[%s2786 + $0x18] sm:$0xff]
        %v2791 = vld [vmem:[%s310] sm:$0xff]
        %v2792 = vld [vmem:[%s310 + $0x8] sm:$0xff]
        %v2793 = vld [vmem:[%s310 + $0x10] sm:$0xff]
        %v2794 = vld [vmem:[%s310 + $0x18] sm:$0xff]
        %v2795 = vld [vmem:[%s310 + $0x20] sm:$0xff]
        %v2796 = vld [vmem:[%s310 + $0x28] sm:$0xff]
        %v2797 = vld [vmem:[%s310 + $0x30] sm:$0xff]
        %v2798 = vld [vmem:[%s310 + $0x38] sm:$0xff]
        %v2799 = vld [vmem:[%s310 + $0x40] sm:$0xff]
        %v2800 = vld [vmem:[%s310 + $0x48] sm:$0xff]
        %v2801 = vld [vmem:[%s310 + $0x50] sm:$0xff]
        %v2802 = vld [vmem:[%s310 + $0x58] sm:$0xff]
        %v2803 = vld [vmem:[%s310 + $0x60] sm:$0xff]
        %v2804 = vld [vmem:[%s310 + $0x68] sm:$0xff]
        %v2805 = vld [vmem:[%s310 + $0x70] sm:$0xff]
        %v2806 = vld [vmem:[%s310 + $0x78] sm:$0xff]
        %v2807 = vld [vmem:[%s310 + $0x80] sm:$0xff]
        %v2808 = vld [vmem:[%s310 + $0x88] sm:$0xff]
        %v2809 = vld [vmem:[%s310 + $0x90] sm:$0xff]
        %v2810 = vld [vmem:[%s310 + $0x98] sm:$0xff]
        %v2811 = vld [vmem:[%s310 + $0xa0] sm:$0xff]
        %v2812 = vld [vmem:[%s310 + $0xa8] sm:$0xff]
        %v2813 = vld [vmem:[%s310 + $0xb0] sm:$0xff]
        %v2814 = vld [vmem:[%s310 + $0xb8] sm:$0xff]
        %v2815 = vld [vmem:[%s310 + $0xc0] sm:$0xff]
        %v2816 = vld [vmem:[%s310 + $0xc8] sm:$0xff]
        %v2817 = vld [vmem:[%s310 + $0xd0] sm:$0xff]
        %v2818 = vld [vmem:[%s310 + $0xd8] sm:$0xff]
        %v2819 = vld [vmem:[%s310 + $0xe0] sm:$0xff]
        %v2820 = vld [vmem:[%s310 + $0xe8] sm:$0xff]
        %v2821 = vld [vmem:[%s310 + $0xf0] sm:$0xff]
        %v2822 = vld [vmem:[%s310 + $0xf8] sm:$0xff]
        %v2823 = vld [vmem:[%s310 + $0x100] sm:$0xff]
        %v2824 = vld [vmem:[%s310 + $0x108] sm:$0xff]
        %v2825 = vld [vmem:[%s310 + $0x110] sm:$0xff]
        %v2826 = vld [vmem:[%s310 + $0x118] sm:$0xff]
        %v2827 = vld [vmem:[%s310 + $0x120] sm:$0xff]
        %v2828 = vld [vmem:[%s310 + $0x128] sm:$0xff]
        %v2829 = vld [vmem:[%s310 + $0x130] sm:$0xff]
        %v2830 = vld [vmem:[%s310 + $0x138] sm:$0xff]
        %v2831 = vld [vmem:[%s310 + $0x140] sm:$0xff]
        %v2832 = vld [vmem:[%s310 + $0x148] sm:$0xff]
        %v2833 = vld [vmem:[%s310 + $0x150] sm:$0xff]
        %v2834 = vld [vmem:[%s310 + $0x158] sm:$0xff]
        %v2835 = vld [vmem:[%s310 + $0x160] sm:$0xff]
        %v2836 = vld [vmem:[%s310 + $0x168] sm:$0xff]
        %v2837 = vld [vmem:[%s310 + $0x170] sm:$0xff]
        %v2838 = vld [vmem:[%s310 + $0x178] sm:$0xff]
        %v2839 = vld [vmem:[%s310 + $0x180] sm:$0xff]
        %v2840 = vld [vmem:[%s310 + $0x188] sm:$0xff]
        %v2841 = vld [vmem:[%s310 + $0x190] sm:$0xff]
        %v2842 = vld [vmem:[%s310 + $0x198] sm:$0xff]
        %v2843 = vld [vmem:[%s310 + $0x1a0] sm:$0xff]
        %v2844 = vld [vmem:[%s310 + $0x1a8] sm:$0xff]
        %v2845 = vld [vmem:[%s310 + $0x1b0] sm:$0xff]
        %v2846 = vld [vmem:[%s310 + $0x1b8] sm:$0xff]
        %v2847 = vld [vmem:[%s310 + $0x1c0] sm:$0xff]
        %v2848 = vld [vmem:[%s310 + $0x1c8] sm:$0xff]
        %v2849 = vld [vmem:[%s310 + $0x1d0] sm:$0xff]
        %v2850 = vld [vmem:[%s310 + $0x1d8] sm:$0xff]
        %v2851 = vld [vmem:[%s310 + $0x1e0] sm:$0xff]
        %v2852 = vld [vmem:[%s310 + $0x1e8] sm:$0xff]
        %v2853 = vld [vmem:[%s310 + $0x1f0] sm:$0xff]
        %v2854 = vld [vmem:[%s310 + $0x1f8] sm:$0xff]
        %2855 = vmatprep.subr.mxu0 %v2792
        %2856 = vmatpush1.msra.mxu0 %v2791
        %2857 = vmatprep.subr.mxu0 %v2796
        %2858 = vmatpush1.msra.mxu0 %v2795
        %2859 = vmatprep.subr.mxu0 %v2800
        %2860 = vmatpush1.msra.mxu0 %v2799
        %2861 = vmatprep.subr.mxu0 %v2804
        %2862 = vmatpush1.msra.mxu0 %v2803
        %2863 = vmatprep.subr.mxu0 %v2808
        %2864 = vmatpush1.msra.mxu0 %v2807
        %2865 = vmatprep.subr.mxu0 %v2812
        %2866 = vmatpush1.msra.mxu0 %v2811
        %2867 = vmatprep.subr.mxu0 %v2816
        %2868 = vmatpush1.msra.mxu0 %v2815
        %2869 = vmatprep.subr.mxu0 %v2820
        %2870 = vmatpush1.msra.mxu0 %v2819
        %2871 = vmatprep.subr.mxu0 %v2824
        %2872 = vmatpush1.msra.mxu0 %v2823
        %2873 = vmatprep.subr.mxu0 %v2828
        %2874 = vmatpush1.msra.mxu0 %v2827
        %2875 = vmatprep.subr.mxu0 %v2832
        %2876 = vmatpush1.msra.mxu0 %v2831
        %2877 = vmatprep.subr.mxu0 %v2836
        %2878 = vmatpush1.msra.mxu0 %v2835
        %2879 = vmatprep.subr.mxu0 %v2840
        %2880 = vmatpush1.msra.mxu0 %v2839
        %2881 = vmatprep.subr.mxu0 %v2844
        %2882 = vmatpush1.msra.mxu0 %v2843
        %2883 = vmatprep.subr.mxu0 %v2848
        %2884 = vmatpush1.msra.mxu0 %v2847
        %2885 = vmatprep.subr.mxu0 %v2852
        %2886 = vmatpush1.msra.mxu0 %v2851
        %2887 = vmatprep.subr.mxu0 0.0
        %2888 = vmatpush1.msra.mxu0 0.0
        %2889 = vmatprep.subr.mxu0 0.0
        %2890 = vmatpush1.msra.mxu0 0.0
        %2891 = vmatprep.subr.mxu0 0.0
        %2892 = vmatpush1.msra.mxu0 0.0
        %2893 = vmatprep.subr.mxu0 0.0
        %2894 = vmatpush1.msra.mxu0 0.0
        %2895 = vmatprep.subr.mxu0 0.0
        %2896 = vmatpush1.msra.mxu0 0.0
        %2897 = vmatprep.subr.mxu0 0.0
        %2898 = vmatpush1.msra.mxu0 0.0
        %2899 = vmatprep.subr.mxu0 0.0
        %2900 = vmatpush1.msra.mxu0 0.0
        %2901 = vmatprep.subr.mxu0 0.0
        %2902 = vmatpush1.msra.mxu0 0.0
        %2903 = vmatprep.subr.mxu0 0.0
        %2904 = vmatpush1.msra.mxu0 0.0
        %2905 = vmatprep.subr.mxu0 0.0
        %2906 = vmatpush1.msra.mxu0 0.0
        %2907 = vmatprep.subr.mxu0 0.0
        %2908 = vmatpush1.msra.mxu0 0.0
        %2909 = vmatprep.subr.mxu0 0.0
        %2910 = vmatpush1.msra.mxu0 0.0
        %2911 = vmatprep.subr.mxu0 0.0
        %2912 = vmatpush1.msra.mxu0 0.0
        %2913 = vmatprep.subr.mxu0 0.0
        %2914 = vmatpush1.msra.mxu0 0.0
        %2915 = vmatprep.subr.mxu0 0.0
        %2916 = vmatpush1.msra.mxu0 0.0
        %2917 = vmatprep.subr.mxu0 0.0
        %2918 = vmatpush1.msra.mxu0 0.0
        %2919 = vmatprep.mubr.f32.mxu0 0.0
        %2920 = vmatmul.mubr.f32.gmra.mrb[0].mxu0 %v2778
        %v2921 = vpop.f32.mrb[0].mxu0
        %v2922 = vadd.f32 0.0, %v2921
        %v2923 = vpop.f32.mrb[0].mxu0
        %v2924 = vadd.f32 0.0, %v2923
        %2925 = vdwg.mxu0
        %2926 = vmatprep.subr.mxu0 %v2794
        %2927 = vmatpush1.msra.mxu0 %v2793
        %2928 = vmatprep.subr.mxu0 %v2798
        %2929 = vmatpush1.msra.mxu0 %v2797
        %2930 = vmatprep.subr.mxu0 %v2802
        %2931 = vmatpush1.msra.mxu0 %v2801
        %2932 = vmatprep.subr.mxu0 %v2806
        %2933 = vmatpush1.msra.mxu0 %v2805
        %2934 = vmatprep.subr.mxu0 %v2810
        %2935 = vmatpush1.msra.mxu0 %v2809
        %2936 = vmatprep.subr.mxu0 %v2814
        %2937 = vmatpush1.msra.mxu0 %v2813
        %2938 = vmatprep.subr.mxu0 %v2818
        %2939 = vmatpush1.msra.mxu0 %v2817
        %2940 = vmatprep.subr.mxu0 %v2822
        %2941 = vmatpush1.msra.mxu0 %v2821
        %2942 = vmatprep.subr.mxu0 %v2826
        %2943 = vmatpush1.msra.mxu0 %v2825
        %2944 = vmatprep.subr.mxu0 %v2830
        %2945 = vmatpush1.msra.mxu0 %v2829
        %2946 = vmatprep.subr.mxu0 %v2834
        %2947 = vmatpush1.msra.mxu0 %v2833
        %2948 = vmatprep.subr.mxu0 %v2838
        %2949 = vmatpush1.msra.mxu0 %v2837
        %2950 = vmatprep.subr.mxu0 %v2842
        %2951 = vmatpush1.msra.mxu0 %v2841
        %2952 = vmatprep.subr.mxu0 %v2846
        %2953 = vmatpush1.msra.mxu0 %v2845
        %2954 = vmatprep.subr.mxu0 %v2850
        %2955 = vmatpush1.msra.mxu0 %v2849
        %2956 = vmatprep.subr.mxu0 %v2854
        %2957 = vmatpush1.msra.mxu0 %v2853
        %2958 = vmatprep.subr.mxu0 0.0
        %2959 = vmatpush1.msra.mxu0 0.0
        %2960 = vmatprep.subr.mxu0 0.0
        %2961 = vmatpush1.msra.mxu0 0.0
        %2962 = vmatprep.subr.mxu0 0.0
        %2963 = vmatpush1.msra.mxu0 0.0
        %2964 = vmatprep.subr.mxu0 0.0
        %2965 = vmatpush1.msra.mxu0 0.0
        %2966 = vmatprep.subr.mxu0 0.0
        %2967 = vmatpush1.msra.mxu0 0.0
        %2968 = vmatprep.subr.mxu0 0.0
        %2969 = vmatpush1.msra.mxu0 0.0
        %2970 = vmatprep.subr.mxu0 0.0
        %2971 = vmatpush1.msra.mxu0 0.0
        %2972 = vmatprep.subr.mxu0 0.0
        %2973 = vmatpush1.msra.mxu0 0.0
        %2974 = vmatprep.subr.mxu0 0.0
        %2975 = vmatpush1.msra.mxu0 0.0
        %2976 = vmatprep.subr.mxu0 0.0
        %2977 = vmatpush1.msra.mxu0 0.0
        %2978 = vmatprep.subr.mxu0 0.0
        %2979 = vmatpush1.msra.mxu0 0.0
        %2980 = vmatprep.subr.mxu0 0.0
        %2981 = vmatpush1.msra.mxu0 0.0
        %2982 = vmatprep.subr.mxu0 0.0
        %2983 = vmatpush1.msra.mxu0 0.0
        %2984 = vmatprep.subr.mxu0 0.0
        %2985 = vmatpush1.msra.mxu0 0.0
        %2986 = vmatprep.subr.mxu0 0.0
        %2987 = vmatpush1.msra.mxu0 0.0
        %2988 = vmatprep.subr.mxu0 0.0
        %2989 = vmatpush1.msra.mxu0 0.0
        %2990 = vmatprep.mubr.f32.mxu0 0.0
        %2991 = vmatmul.mubr.f32.gmra.mrb[0].mxu0 %v2778
        %v2992 = vpop.f32.mrb[0].mxu0
        %v2993 = vadd.f32 0.0, %v2992
        %v2994 = vpop.f32.mrb[0].mxu0
        %v2995 = vadd.f32 0.0, %v2994
        %2996 = vdwg.mxu0
        %v2997 = vadd.f32 %v2787, %v2922
        %v2998 = vadd.f32 %v2788, %v2924
        %v2999 = vadd.f32 %v2789, %v2993
        %v3000 = vadd.f32 %v2790, %v2995
        %v3001 = vxor.u32 %v2997, 2147483648
        %v3002 = vmul.f32 %v3001, 1.442695
        %v3003 = vpow.pop %v3002
        %v3004 = vadd.f32 %v3003, 1.0
        %v3005 = vrcp.pop %v3004
        %v3006 = vmul.f32 1.0, %v3005
        %v3007 = vxor.u32 %v2998, 2147483648
        %v3008 = vmul.f32 %v3007, 1.442695
        %v3009 = vpow.pop %v3008
        %v3010 = vadd.f32 %v3009, 1.0
        %v3011 = vrcp.pop %v3010
        %v3012 = vmul.f32 1.0, %v3011
        %v3013 = vtanh.pop %v2999
        %v3014 = vxor.u32 %v3000, 2147483648
        %v3015 = vmul.f32 %v3014, 1.442695
        %v3016 = vpow.pop %v3015
        %v3017 = vadd.f32 %v3016, 1.0
        %v3018 = vrcp.pop %v3017
        %v3019 = vmul.f32 1.0, %v3018
        %v3020 = vmul.f32 %v3012, %v2776
        %v3021 = vmul.f32 %v3006, %v3013
        %v3022 = vadd.f32 %v3020, %v3021
        %v3023 = vtanh.pop %v3022
        %v3024 = vmul.f32 %v3019, %v3023
        // Predicated region
        $region93: #{tpu_custom_call.1} parent=39 // pred_check
          %p3025 = pneg %p1303
        $region94: #{tpu_custom_call.1} parent=39 // pred_check_branch
          %3027 = sbr.rel (%p3025) target = $region96
        $region95: #{tpu_custom_call.1} parent=39 // pred_region
          %s3028 = sadd.s32 0, 7
          %s3029 = smul.u32 %s3028, 8
          %s3030 = scalar_lea.vmem [#allocation2], %s3029
          %3031 = vst [vmem:[%s3030] sm:$0xff] %v3024
        $region96: #{tpu_custom_call.1} parent=39 // pred_fallthru
          _
        // Predicated region
        $region97: #{tpu_custom_call.1} parent=39 // pred_check
          %p3032 = pneg %p348
        $region98: #{tpu_custom_call.1} parent=39 // pred_check_branch
          %3034 = sbr.rel (%p3032) target = $region100
        $region99: #{tpu_custom_call.1} parent=39 // pred_region
          %3035 = vst [vmem:[#allocation11] sm:$0xff] %v3024
        $region100: #{tpu_custom_call.1} parent=39 // pred_fallthru
          _
        // Predicated region
        $region101: #{tpu_custom_call.1} parent=39 // pred_check
          %p3036 = pneg %p180
        $region102: #{tpu_custom_call.1} parent=39 // pred_check_branch
          %3038 = sbr.rel (%p3036) target = $region104
        $region103: #{tpu_custom_call.1} parent=39 // pred_region
          %s3040 = ssub.s32 128, 128
          %3041 = vsyncadd [#allocation6], %s3040
          %s3042 = smul.addr %s23, 128
          %s3043 = scalar_lea.hbm %s5, %s3042
          %s3045 = sshll.u32 [#allocation11], 4
          %s3046 = int_to_ptr.vmem [resolvable:$true] %s3045
          %3048 = dma.vmem_to_hbm [thread:$0]  %s3046, 128, %s3043, [#allocation6]
        $region104: #{tpu_custom_call.1} parent=39 // pred_fallthru
          _
        // Predicated region
        $region105: #{tpu_custom_call.1} parent=39 // pred_check
          %p3049 = pneg %p180
        $region106: #{tpu_custom_call.1} parent=39 // pred_check_branch
          %3051 = sbr.rel (%p3049) target = $region108
        $region107: #{tpu_custom_call.1} parent=39 // pred_region
          %3052 = dma.done [#allocation6], 128
        $region108: #{tpu_custom_call.1} parent=39 // pred_fallthru
          _
      $region40: #{tpu_custom_call.1} parent=5 // pred_fallthru
        _
      %p3053 = scmp.le.s32.totalorder 2, %s14
      // Predicated region
      $region109: #{tpu_custom_call.1} parent=5 // pred_check
        %p3054 = pneg %p3053
      $region110: #{tpu_custom_call.1} parent=5 // pred_check_branch
        %3056 = sbr.rel (%p3054) target = $region112
      $region111: #{tpu_custom_call.1} parent=5 // pred_region
        %s3057 = ssub.s32 %s14, 2
      $region112: #{tpu_custom_call.1} parent=5 // pred_fallthru
        _
    $region6: #{tpu_custom_call.1} parent=1 // loop_footer
      %s18 = sadd.s32 1, %s14
    $region7: #{tpu_custom_call.1} parent=1 // loop_footer_branch
      %13 = sbr.rel target = $region3
    $region8: #{tpu_custom_call.1} parent=1 // loop_exit
      _
    %3058 = vsyncpa [#allocation5], 1
    %s3059 = scalar_lea.sflag [#allocation5], 1
    %3060 = vsyncpa %s3059, 1
    %3061 = vsyncpa [#allocation8], 1
    %3062 = vsyncpa [#allocation6], 1
    %s3063 = scalar_lea.sflag [#allocation6], 1
    %3064 = vsyncpa %s3063, 1

</llo_original>
